<compile_context>
chip_gen: v7x
topology: tpu7x:2x2x1
jax: 0.10.0
libtpu: 0.0.40
codegen_flags: <defaults>
</compile_context>

<pallas_src>
import functools

import jax
import jax.numpy as jnp
from jax.experimental import pallas as pl
from jax.experimental.pallas import tpu as pltpu

_LANE = 128
_MIN_PALLAS_ELEMS = 1 << 18  # below ~256K elements, plain XLA fusion wins


def _h_swish_kernel(x_ref, o_ref):
    # h_sigmoid(x) = relu6(x + 3) / 6 ; relu6(y) = clamp(y, 0, 6)
    x = x_ref[...].astype(jnp.float32)
    hsig = jnp.clip(x + 3.0, 0.0, 6.0) * (1.0 / 6.0)
    o_ref[...] = (x * hsig).astype(o_ref.dtype)


def _h_swish_math(x):
    """Plain-jnp h_swish (small-input bypass and unaligned tail)."""
    xf = x.astype(jnp.float32)
    return (xf * (jnp.clip(xf + 3.0, 0.0, 6.0) * (1.0 / 6.0))).astype(x.dtype)


@functools.lru_cache(maxsize=1)
def _tpu_generation() -> str:
    try:
        kind = jax.devices()[0].device_kind.lower()
    except Exception:
        return "unknown"
    if "v7" in kind or "7x" in kind:
        return "v7x"
    if "v6" in kind:
        return "v6e"
    if "v5" in kind:
        return "v5"
    return "unknown"


def _target_block_rows(itemsize: int, gen: str) -> int:
    # ~4 MiB blocks on v6e/v7x (16 MiB total double-buffered in+out, under the
    # 32 MiB scoped-VMEM default); ~2 MiB on v5e/unknown (8 MiB total, under
    # its 16 MiB default). Row counts are powers of two -> sublane-aligned.
    target_bytes = (4 << 20) if gen in ("v6e", "v7x") else (2 << 20)
    return target_bytes // (_LANE * itemsize)


def h_swish(x: jax.Array, *, min_pallas_elems: int = _MIN_PALLAS_ELEMS) -> jax.Array:
    """Elementwise h_swish on an arbitrary-shape (e.g. NCHW) tensor."""
    orig_shape = x.shape
    orig_dtype = x.dtype
    n = x.size

    # Small-input bypass: pallas_call launch + pipeline prologue dominates.
    if n == 0 or n < min_pallas_elems:
        return _h_swish_math(x)

    itemsize = jnp.dtype(orig_dtype).itemsize
    sub = max(8, 32 // itemsize)      # 8 for f32, 16 for bf16, 32 for 8-bit
    align = sub * _LANE
    gen = _tpu_generation()

    # Note: reshape(-1) on a non-row-major/transposed input triggers a silent
    # XLA copy before the kernel (extra HBM traffic, not a correctness issue).
    x_flat = x.reshape(-1)

    # Aligned prefix goes through Pallas (zero-copy reshape); the < `align`
    # element tail is computed with plain jnp and stitched back.
    n_aligned = (n // align) * align
    tail_n = n - n_aligned
    if n_aligned == 0:
        return _h_swish_math(x)

    rows = n_aligned // _LANE          # multiple of `sub` by construction
    x2d = x_flat[:n_aligned].reshape(rows, _LANE)

    target_rows = _target_block_rows(itemsize, gen)
    block_rows = min(target_rows, rows)
    if gen == "v7x" and rows <= target_rows and rows >= 2 * sub:
        # Whole slab fits in one block: split into two equal blocks so both
        # TensorCores participate (even split, sublane-aligned).
        half = (rows // 2 + sub - 1) // sub * sub
        block_rows = max(sub, half)
    grid = (pl.cdiv(rows, block_rows),)  # partial last block handled by masking

    cost = pl.CostEstimate(
        flops=7 * n_aligned,
        transcendentals=0,
        bytes_accessed=2 * n_aligned * itemsize,
    )

    out2d = pl.pallas_call(
        _h_swish_kernel,
        out_shape=jax.ShapeDtypeStruct((rows, _LANE), orig_dtype),
        grid_spec=pltpu.PrefetchScalarGridSpec(
            num_scalar_prefetch=0,
            grid=grid,
            in_specs=[pl.BlockSpec((block_rows, _LANE), lambda i: (i, 0))],
            out_specs=pl.BlockSpec((block_rows, _LANE), lambda i: (i, 0)),
        ),
        compiler_params=pltpu.CompilerParams(
            dimension_semantics=("parallel",),
        ),
        cost_estimate=cost,
    )(x2d)

    out_flat = out2d.reshape(-1)
    if tail_n:
        out_flat = jnp.concatenate(
            [out_flat, _h_swish_math(x_flat[n_aligned:])])
    return out_flat.reshape(orig_shape)


def _ref_h_swish(x):
    return x * (jnp.clip(x + 3.0, 0.0, 6.0) / 6.0)


if __name__ == "__main__":
    key = jax.random.PRNGKey(0)
    k1, k2, k3, k4 = jax.random.split(key, 4)

    # 1) Module-scale NCHW input (batch=2, channels=4, 16x16): exercises the
    #    small-input bypass (plain fused XLA wins at 8 KiB).
    x_small = jax.random.normal(k1, (2, 4, 16, 16), dtype=jnp.float32) * 4.0
    y_small = jax.block_until_ready(h_swish(x_small))
    assert y_small.shape == x_small.shape and y_small.dtype == x_small.dtype
    assert jnp.allclose(y_small, _ref_h_swish(x_small), atol=1e-6, rtol=1e-6)

    # 2) Larger 1024-aligned activation: zero-copy Pallas fast path.
    x_big = jax.random.normal(k2, (4, 8, 128, 128), dtype=jnp.float32) * 4.0
    y_big = jax.block_until_ready(h_swish(x_big))
    assert y_big.shape == x_big.shape and y_big.dtype == x_big.dtype
    assert jnp.allclose(y_big, _ref_h_swish(x_big), atol=1e-6, rtol=1e-6)

    # 3) Non-aligned element count: Pallas on the aligned prefix + jnp tail.
    x_odd = jax.random.normal(k3, (7, 9, 77, 65), dtype=jnp.float32) * 4.0
    y_odd = jax.block_until_ready(h_swish(x_odd))
    assert y_odd.shape == x_odd.shape and y_odd.dtype == x_odd.dtype
    assert jnp.allclose(y_odd, _ref_h_swish(x_odd), atol=1e-6, rtol=1e-6)

    # 4) bf16: dtype-aware (16-row) sublane rounding, f32 math + cast at store.
    x_bf = (jax.random.normal(k4, (4, 8, 128, 128), dtype=jnp.float32)
            * 4.0).astype(jnp.bfloat16)
    y_bf = jax.block_until_ready(h_swish(x_bf))
    ref_bf = _ref_h_swish(x_bf.astype(jnp.float32)).astype(jnp.bfloat16)
    assert y_bf.shape == x_bf.shape and y_bf.dtype == x_bf.dtype
    assert jnp.allclose(y_bf.astype(jnp.float32), ref_bf.astype(jnp.float32),
                        atol=5e-2, rtol=2e-2)

    print("KERNEL_OK")
</pallas_src>

<mosaic_0001>
module attributes {stable_mosaic.version = 11 : i64} {
  func.func @_h_swish_kernel(%arg0: i32, %arg1: memref<4096x128xf32, #tpu.memory_space<vmem>>, %arg2: memref<4096x128xf32, #tpu.memory_space<vmem>>) attributes {dimension_semantics = [#tpu.dimension_semantics<parallel>], iteration_bounds = array<i64: 1>, scalar_prefetch = 0 : i64, scratch_operands = 0 : i64, tpu.core_type = #tpu.core_type<tc>, window_params = [{transform_indices = @transform_0, window_bounds = array<i64: 4096, 128>}, {transform_indices = @transform_1, window_bounds = array<i64: 4096, 128>}]} {
    %c0 = arith.constant 0 : index
    %c0_0 = arith.constant 0 : index
    %0 = vector.load %arg1[%c0, %c0_0] : memref<4096x128xf32, #tpu.memory_space<vmem>>, vector<4096x128xf32>
    %cst = arith.constant 3.000000e+00 : f32
    %1 = vector.broadcast %cst : f32 to vector<4096x128xf32>
    %2 = arith.addf %0, %1 : vector<4096x128xf32>
    %cst_1 = arith.constant 0.000000e+00 : f32
    %cst_2 = arith.constant 6.000000e+00 : f32
    %3 = vector.broadcast %cst_1 : f32 to vector<4096x128xf32>
    %4 = arith.maximumf %3, %2 : vector<4096x128xf32>
    %5 = vector.broadcast %cst_2 : f32 to vector<4096x128xf32>
    %6 = arith.minimumf %5, %4 : vector<4096x128xf32>
    %cst_3 = arith.constant 0.166666672 : f32
    %7 = vector.broadcast %cst_3 : f32 to vector<4096x128xf32>
    %8 = arith.mulf %6, %7 : vector<4096x128xf32>
    %9 = arith.mulf %0, %8 : vector<4096x128xf32>
    %c0_4 = arith.constant 0 : index
    %c0_5 = arith.constant 0 : index
    %10 = vector.load %arg2[%c0_4, %c0_5] : memref<4096x128xf32, #tpu.memory_space<vmem>>, vector<4096x128xf32>
    tpu.vector_store %arg2[%c0_4, %c0_5], %9 {strides = array<i32>} : memref<4096x128xf32, #tpu.memory_space<vmem>>, vector<4096x128xf32>,
    return
  }
  func.func @transform_0(%arg0: i32) -> (i32, i32) {
    %c0_i32 = arith.constant 0 : i32
    %c0_i32_0 = arith.constant 0 : i32
    return %arg0, %c0_i32 : i32, i32
  }
  func.func @transform_1(%arg0: i32) -> (i32, i32) {
    %c0_i32 = arith.constant 0 : i32
    %c0_i32_0 = arith.constant 0 : i32
    return %arg0, %c0_i32 : i32, i32
  }
}

</mosaic_0001>

<llo_original>
// kernel: tpu_custom_call.1
$region0: #{tpu_custom_call.1}
  #allocation0 [shape = 'u32[]', space=smem, size = 0x4, offset = 0x4, fixed_abs, tag = 'smem constant byte address 0x4 - core index']
  #allocation1 [shape = 'u32[144,128]{1,0:T(1,128)}', space=vmem, size = 0x12000, scoped, tag = 'internal scratch']
  %s0 = inlined_call_operand.hbm [shape: f32[4096,128], index: 0, kind: input, shape index: {}]
  %s1 = inlined_call_operand.hbm [shape: f32[4096,128], index: 1, kind: output, shape index: {}]
  %s2 = sld [smem:[#allocation0]]
  $region18: #{tpu_custom_call.1} parent=0
    _
  %s4 = ssub.s32 1, %s2
  %s5 = scalar_select 0, %s4, %s2
  $region1: #{tpu_custom_call.1} parent=0
    #allocation2 [shape = 'u8[2097152]{0}', space=vmem, size = 0x200000, scoped, tag = 'input window, operand 0, single buffered']
    #allocation3 [shape = 's32[1]{0}', space=sflag, size = 0x4, scoped, tag = 'scoped memory for tpu_custom_call.1']
    #allocation4 [shape = 's32[1]{0}', space=sflag, size = 0x4, scoped, tag = 'scoped memory for tpu_custom_call.1']
    #allocation5 [shape = 'u8[2097152]{0}', space=vmem, size = 0x200000, scoped, tag = 'output window, operand 0, single buffered']
    %6 = vsyncpa [#allocation3], 0
    %7 = vsyncpa [#allocation4], 0
    // Predicated region
    $region2: #{tpu_custom_call.1} parent=1 // pred_check
      _
    $region3: #{tpu_custom_call.1} parent=1 // pred_check_branch
      %9 = sbr.rel (0) target = $region5
    $region4: #{tpu_custom_call.1} parent=1 // pred_region
      %s11 = ssub.s32 65536, 65536
      %12 = vsyncadd [#allocation3], %s11
      %s13 = sshll.u32 [#allocation2], 4
      %s14 = int_to_ptr.vmem [resolvable:$true] %s13
      %19 = dma.hbm_to_vmem [thread:$0]  %s0, 65536, %s14, [#allocation3], 128, 128, 8
    $region5: #{tpu_custom_call.1} parent=1 // pred_fallthru
      _
    // Predicated region
    $region6: #{tpu_custom_call.1} parent=1 // pred_check
      _
    $region7: #{tpu_custom_call.1} parent=1 // pred_check_branch
      %21 = sbr.rel (0) target = $region9
    $region8: #{tpu_custom_call.1} parent=1 // pred_region
      %22 = dma.done [#allocation3], 65536
    $region9: #{tpu_custom_call.1} parent=1 // pred_fallthru
      _
    %v23 = vld [vmem:[#allocation2] sm:$0xff]
    %v24 = vld [vmem:[#allocation2 + $0x8] sm:$0xff]
    %v25 = vld [vmem:[#allocation2 + $0x10] sm:$0xff]
    %v26 = vld [vmem:[#allocation2 + $0x18] sm:$0xff]
    %v27 = vld [vmem:[#allocation2 + $0x20] sm:$0xff]
    %v28 = vld [vmem:[#allocation2 + $0x28] sm:$0xff]
    %v29 = vld [vmem:[#allocation2 + $0x30] sm:$0xff]
    %v30 = vld [vmem:[#allocation2 + $0x38] sm:$0xff]
    %v31 = vld [vmem:[#allocation2 + $0x40] sm:$0xff]
    %v32 = vld [vmem:[#allocation2 + $0x48] sm:$0xff]
    %v33 = vld [vmem:[#allocation2 + $0x50] sm:$0xff]
    %v34 = vld [vmem:[#allocation2 + $0x58] sm:$0xff]
    %v35 = vld [vmem:[#allocation2 + $0x60] sm:$0xff]
    %v36 = vld [vmem:[#allocation2 + $0x68] sm:$0xff]
    %v37 = vld [vmem:[#allocation2 + $0x70] sm:$0xff]
    %v38 = vld [vmem:[#allocation2 + $0x78] sm:$0xff]
    %v39 = vld [vmem:[#allocation2 + $0x80] sm:$0xff]
    %v40 = vld [vmem:[#allocation2 + $0x88] sm:$0xff]
    %v41 = vld [vmem:[#allocation2 + $0x90] sm:$0xff]
    %v42 = vld [vmem:[#allocation2 + $0x98] sm:$0xff]
    %v43 = vld [vmem:[#allocation2 + $0xa0] sm:$0xff]
    %v44 = vld [vmem:[#allocation2 + $0xa8] sm:$0xff]
    %v45 = vld [vmem:[#allocation2 + $0xb0] sm:$0xff]
    %v46 = vld [vmem:[#allocation2 + $0xb8] sm:$0xff]
    %v47 = vld [vmem:[#allocation2 + $0xc0] sm:$0xff]
    %v48 = vld [vmem:[#allocation2 + $0xc8] sm:$0xff]
    %v49 = vld [vmem:[#allocation2 + $0xd0] sm:$0xff]
    %v50 = vld [vmem:[#allocation2 + $0xd8] sm:$0xff]
    %v51 = vld [vmem:[#allocation2 + $0xe0] sm:$0xff]
    %v52 = vld [vmem:[#allocation2 + $0xe8] sm:$0xff]
    %v53 = vld [vmem:[#allocation2 + $0xf0] sm:$0xff]
    %v54 = vld [vmem:[#allocation2 + $0xf8] sm:$0xff]
    %v55 = vld [vmem:[#allocation2 + $0x100] sm:$0xff]
    %v56 = vld [vmem:[#allocation2 + $0x108] sm:$0xff]
    %v57 = vld [vmem:[#allocation2 + $0x110] sm:$0xff]
    %v58 = vld [vmem:[#allocation2 + $0x118] sm:$0xff]
    %v59 = vld [vmem:[#allocation2 + $0x120] sm:$0xff]
    %v60 = vld [vmem:[#allocation2 + $0x128] sm:$0xff]
    %v61 = vld [vmem:[#allocation2 + $0x130] sm:$0xff]
    %v62 = vld [vmem:[#allocation2 + $0x138] sm:$0xff]
    %v63 = vld [vmem:[#allocation2 + $0x140] sm:$0xff]
    %v64 = vld [vmem:[#allocation2 + $0x148] sm:$0xff]
    %v65 = vld [vmem:[#allocation2 + $0x150] sm:$0xff]
    %v66 = vld [vmem:[#allocation2 + $0x158] sm:$0xff]
    %v67 = vld [vmem:[#allocation2 + $0x160] sm:$0xff]
    %v68 = vld [vmem:[#allocation2 + $0x168] sm:$0xff]
    %v69 = vld [vmem:[#allocation2 + $0x170] sm:$0xff]
    %v70 = vld [vmem:[#allocation2 + $0x178] sm:$0xff]
    %v71 = vld [vmem:[#allocation2 + $0x180] sm:$0xff]
    %v72 = vld [vmem:[#allocation2 + $0x188] sm:$0xff]
    %v73 = vld [vmem:[#allocation2 + $0x190] sm:$0xff]
    %v74 = vld [vmem:[#allocation2 + $0x198] sm:$0xff]
    %v75 = vld [vmem:[#allocation2 + $0x1a0] sm:$0xff]
    %v76 = vld [vmem:[#allocation2 + $0x1a8] sm:$0xff]
    %v77 = vld [vmem:[#allocation2 + $0x1b0] sm:$0xff]
    %v78 = vld [vmem:[#allocation2 + $0x1b8] sm:$0xff]
    %v79 = vld [vmem:[#allocation2 + $0x1c0] sm:$0xff]
    %v80 = vld [vmem:[#allocation2 + $0x1c8] sm:$0xff]
    %v81 = vld [vmem:[#allocation2 + $0x1d0] sm:$0xff]
    %v82 = vld [vmem:[#allocation2 + $0x1d8] sm:$0xff]
    %v83 = vld [vmem:[#allocation2 + $0x1e0] sm:$0xff]
    %v84 = vld [vmem:[#allocation2 + $0x1e8] sm:$0xff]
    %v85 = vld [vmem:[#allocation2 + $0x1f0] sm:$0xff]
    %v86 = vld [vmem:[#allocation2 + $0x1f8] sm:$0xff]
    %v87 = vld [vmem:[#allocation2 + $0x200] sm:$0xff]
    %v88 = vld [vmem:[#allocation2 + $0x208] sm:$0xff]
    %v89 = vld [vmem:[#allocation2 + $0x210] sm:$0xff]
    %v90 = vld [vmem:[#allocation2 + $0x218] sm:$0xff]
    %v91 = vld [vmem:[#allocation2 + $0x220] sm:$0xff]
    %v92 = vld [vmem:[#allocation2 + $0x228] sm:$0xff]
    %v93 = vld [vmem:[#allocation2 + $0x230] sm:$0xff]
    %v94 = vld [vmem:[#allocation2 + $0x238] sm:$0xff]
    %v95 = vld [vmem:[#allocation2 + $0x240] sm:$0xff]
    %v96 = vld [vmem:[#allocation2 + $0x248] sm:$0xff]
    %v97 = vld [vmem:[#allocation2 + $0x250] sm:$0xff]
    %v98 = vld [vmem:[#allocation2 + $0x258] sm:$0xff]
    %v99 = vld [vmem:[#allocation2 + $0x260] sm:$0xff]
    %v100 = vld [vmem:[#allocation2 + $0x268] sm:$0xff]
    %v101 = vld [vmem:[#allocation2 + $0x270] sm:$0xff]
    %v102 = vld [vmem:[#allocation2 + $0x278] sm:$0xff]
    %v103 = vld [vmem:[#allocation2 + $0x280] sm:$0xff]
    %v104 = vld [vmem:[#allocation2 + $0x288] sm:$0xff]
    %v105 = vld [vmem:[#allocation2 + $0x290] sm:$0xff]
    %v106 = vld [vmem:[#allocation2 + $0x298] sm:$0xff]
    %v107 = vld [vmem:[#allocation2 + $0x2a0] sm:$0xff]
    %v108 = vld [vmem:[#allocation2 + $0x2a8] sm:$0xff]
    %v109 = vld [vmem:[#allocation2 + $0x2b0] sm:$0xff]
    %v110 = vld [vmem:[#allocation2 + $0x2b8] sm:$0xff]
    %v111 = vld [vmem:[#allocation2 + $0x2c0] sm:$0xff]
    %v112 = vld [vmem:[#allocation2 + $0x2c8] sm:$0xff]
    %v113 = vld [vmem:[#allocation2 + $0x2d0] sm:$0xff]
    %v114 = vld [vmem:[#allocation2 + $0x2d8] sm:$0xff]
    %v115 = vld [vmem:[#allocation2 + $0x2e0] sm:$0xff]
    %v116 = vld [vmem:[#allocation2 + $0x2e8] sm:$0xff]
    %v117 = vld [vmem:[#allocation2 + $0x2f0] sm:$0xff]
    %v118 = vld [vmem:[#allocation2 + $0x2f8] sm:$0xff]
    %v119 = vld [vmem:[#allocation2 + $0x300] sm:$0xff]
    %v120 = vld [vmem:[#allocation2 + $0x308] sm:$0xff]
    %v121 = vld [vmem:[#allocation2 + $0x310] sm:$0xff]
    %v122 = vld [vmem:[#allocation2 + $0x318] sm:$0xff]
    %v123 = vld [vmem:[#allocation2 + $0x320] sm:$0xff]
    %v124 = vld [vmem:[#allocation2 + $0x328] sm:$0xff]
    %v125 = vld [vmem:[#allocation2 + $0x330] sm:$0xff]
    %v126 = vld [vmem:[#allocation2 + $0x338] sm:$0xff]
    %v127 = vld [vmem:[#allocation2 + $0x340] sm:$0xff]
    %v128 = vld [vmem:[#allocation2 + $0x348] sm:$0xff]
    %v129 = vld [vmem:[#allocation2 + $0x350] sm:$0xff]
    %v130 = vld [vmem:[#allocation2 + $0x358] sm:$0xff]
    %v131 = vld [vmem:[#allocation2 + $0x360] sm:$0xff]
    %v132 = vld [vmem:[#allocation2 + $0x368] sm:$0xff]
    %v133 = vld [vmem:[#allocation2 + $0x370] sm:$0xff]
    %v134 = vld [vmem:[#allocation2 + $0x378] sm:$0xff]
    %v135 = vld [vmem:[#allocation2 + $0x380] sm:$0xff]
    %v136 = vld [vmem:[#allocation2 + $0x388] sm:$0xff]
    %v137 = vld [vmem:[#allocation2 + $0x390] sm:$0xff]
    %v138 = vld [vmem:[#allocation2 + $0x398] sm:$0xff]
    %v139 = vld [vmem:[#allocation2 + $0x3a0] sm:$0xff]
    %v140 = vld [vmem:[#allocation2 + $0x3a8] sm:$0xff]
    %v141 = vld [vmem:[#allocation2 + $0x3b0] sm:$0xff]
    %v142 = vld [vmem:[#allocation2 + $0x3b8] sm:$0xff]
    %v143 = vld [vmem:[#allocation2 + $0x3c0] sm:$0xff]
    %v144 = vld [vmem:[#allocation2 + $0x3c8] sm:$0xff]
    %v145 = vld [vmem:[#allocation2 + $0x3d0] sm:$0xff]
    %v146 = vld [vmem:[#allocation2 + $0x3d8] sm:$0xff]
    %v147 = vld [vmem:[#allocation2 + $0x3e0] sm:$0xff]
    %v148 = vld [vmem:[#allocation2 + $0x3e8] sm:$0xff]
    %v149 = vld [vmem:[#allocation2 + $0x3f0] sm:$0xff]
    %v150 = vld [vmem:[#allocation2 + $0x3f8] sm:$0xff]
    %v151 = vld [vmem:[#allocation2 + $0x400] sm:$0xff]
    %v152 = vld [vmem:[#allocation2 + $0x408] sm:$0xff]
    %v153 = vld [vmem:[#allocation2 + $0x410] sm:$0xff]
    %v154 = vld [vmem:[#allocation2 + $0x418] sm:$0xff]
    %v155 = vld [vmem:[#allocation2 + $0x420] sm:$0xff]
    %v156 = vld [vmem:[#allocation2 + $0x428] sm:$0xff]
    %v157 = vld [vmem:[#allocation2 + $0x430] sm:$0xff]
    %v158 = vld [vmem:[#allocation2 + $0x438] sm:$0xff]
    %v159 = vld [vmem:[#allocation2 + $0x440] sm:$0xff]
    %v160 = vld [vmem:[#allocation2 + $0x448] sm:$0xff]
    %v161 = vld [vmem:[#allocation2 + $0x450] sm:$0xff]
    %v162 = vld [vmem:[#allocation2 + $0x458] sm:$0xff]
    %v163 = vld [vmem:[#allocation2 + $0x460] sm:$0xff]
    %v164 = vld [vmem:[#allocation2 + $0x468] sm:$0xff]
    %v165 = vld [vmem:[#allocation2 + $0x470] sm:$0xff]
    %v166 = vld [vmem:[#allocation2 + $0x478] sm:$0xff]
    %v167 = vld [vmem:[#allocation2 + $0x480] sm:$0xff]
    %v168 = vld [vmem:[#allocation2 + $0x488] sm:$0xff]
    %v169 = vld [vmem:[#allocation2 + $0x490] sm:$0xff]
    %v170 = vld [vmem:[#allocation2 + $0x498] sm:$0xff]
    %v171 = vld [vmem:[#allocation2 + $0x4a0] sm:$0xff]
    %v172 = vld [vmem:[#allocation2 + $0x4a8] sm:$0xff]
    %v173 = vld [vmem:[#allocation2 + $0x4b0] sm:$0xff]
    %v174 = vld [vmem:[#allocation2 + $0x4b8] sm:$0xff]
    %v175 = vld [vmem:[#allocation2 + $0x4c0] sm:$0xff]
    %v176 = vld [vmem:[#allocation2 + $0x4c8] sm:$0xff]
    %v177 = vld [vmem:[#allocation2 + $0x4d0] sm:$0xff]
    %v178 = vld [vmem:[#allocation2 + $0x4d8] sm:$0xff]
    %v179 = vld [vmem:[#allocation2 + $0x4e0] sm:$0xff]
    %v180 = vld [vmem:[#allocation2 + $0x4e8] sm:$0xff]
    %v181 = vld [vmem:[#allocation2 + $0x4f0] sm:$0xff]
    %v182 = vld [vmem:[#allocation2 + $0x4f8] sm:$0xff]
    %v183 = vld [vmem:[#allocation2 + $0x500] sm:$0xff]
    %v184 = vld [vmem:[#allocation2 + $0x508] sm:$0xff]
    %v185 = vld [vmem:[#allocation2 + $0x510] sm:$0xff]
    %v186 = vld [vmem:[#allocation2 + $0x518] sm:$0xff]
    %v187 = vld [vmem:[#allocation2 + $0x520] sm:$0xff]
    %v188 = vld [vmem:[#allocation2 + $0x528] sm:$0xff]
    %v189 = vld [vmem:[#allocation2 + $0x530] sm:$0xff]
    %v190 = vld [vmem:[#allocation2 + $0x538] sm:$0xff]
    %v191 = vld [vmem:[#allocation2 + $0x540] sm:$0xff]
    %v192 = vld [vmem:[#allocation2 + $0x548] sm:$0xff]
    %v193 = vld [vmem:[#allocation2 + $0x550] sm:$0xff]
    %v194 = vld [vmem:[#allocation2 + $0x558] sm:$0xff]
    %v195 = vld [vmem:[#allocation2 + $0x560] sm:$0xff]
    %v196 = vld [vmem:[#allocation2 + $0x568] sm:$0xff]
    %v197 = vld [vmem:[#allocation2 + $0x570] sm:$0xff]
    %v198 = vld [vmem:[#allocation2 + $0x578] sm:$0xff]
    %v199 = vld [vmem:[#allocation2 + $0x580] sm:$0xff]
    %v200 = vld [vmem:[#allocation2 + $0x588] sm:$0xff]
    %v201 = vld [vmem:[#allocation2 + $0x590] sm:$0xff]
    %v202 = vld [vmem:[#allocation2 + $0x598] sm:$0xff]
    %v203 = vld [vmem:[#allocation2 + $0x5a0] sm:$0xff]
    %v204 = vld [vmem:[#allocation2 + $0x5a8] sm:$0xff]
    %v205 = vld [vmem:[#allocation2 + $0x5b0] sm:$0xff]
    %v206 = vld [vmem:[#allocation2 + $0x5b8] sm:$0xff]
    %v207 = vld [vmem:[#allocation2 + $0x5c0] sm:$0xff]
    %v208 = vld [vmem:[#allocation2 + $0x5c8] sm:$0xff]
    %v209 = vld [vmem:[#allocation2 + $0x5d0] sm:$0xff]
    %v210 = vld [vmem:[#allocation2 + $0x5d8] sm:$0xff]
    %v211 = vld [vmem:[#allocation2 + $0x5e0] sm:$0xff]
    %v212 = vld [vmem:[#allocation2 + $0x5e8] sm:$0xff]
    %v213 = vld [vmem:[#allocation2 + $0x5f0] sm:$0xff]
    %v214 = vld [vmem:[#allocation2 + $0x5f8] sm:$0xff]
    %v215 = vld [vmem:[#allocation2 + $0x600] sm:$0xff]
    %v216 = vld [vmem:[#allocation2 + $0x608] sm:$0xff]
    %v217 = vld [vmem:[#allocation2 + $0x610] sm:$0xff]
    %v218 = vld [vmem:[#allocation2 + $0x618] sm:$0xff]
    %v219 = vld [vmem:[#allocation2 + $0x620] sm:$0xff]
    %v220 = vld [vmem:[#allocation2 + $0x628] sm:$0xff]
    %v221 = vld [vmem:[#allocation2 + $0x630] sm:$0xff]
    %v222 = vld [vmem:[#allocation2 + $0x638] sm:$0xff]
    %v223 = vld [vmem:[#allocation2 + $0x640] sm:$0xff]
    %v224 = vld [vmem:[#allocation2 + $0x648] sm:$0xff]
    %v225 = vld [vmem:[#allocation2 + $0x650] sm:$0xff]
    %v226 = vld [vmem:[#allocation2 + $0x658] sm:$0xff]
    %v227 = vld [vmem:[#allocation2 + $0x660] sm:$0xff]
    %v228 = vld [vmem:[#allocation2 + $0x668] sm:$0xff]
    %v229 = vld [vmem:[#allocation2 + $0x670] sm:$0xff]
    %v230 = vld [vmem:[#allocation2 + $0x678] sm:$0xff]
    %v231 = vld [vmem:[#allocation2 + $0x680] sm:$0xff]
    %v232 = vld [vmem:[#allocation2 + $0x688] sm:$0xff]
    %v233 = vld [vmem:[#allocation2 + $0x690] sm:$0xff]
    %v234 = vld [vmem:[#allocation2 + $0x698] sm:$0xff]
    %v235 = vld [vmem:[#allocation2 + $0x6a0] sm:$0xff]
    %v236 = vld [vmem:[#allocation2 + $0x6a8] sm:$0xff]
    %v237 = vld [vmem:[#allocation2 + $0x6b0] sm:$0xff]
    %v238 = vld [vmem:[#allocation2 + $0x6b8] sm:$0xff]
    %v239 = vld [vmem:[#allocation2 + $0x6c0] sm:$0xff]
    %v240 = vld [vmem:[#allocation2 + $0x6c8] sm:$0xff]
    %v241 = vld [vmem:[#allocation2 + $0x6d0] sm:$0xff]
    %v242 = vld [vmem:[#allocation2 + $0x6d8] sm:$0xff]
    %v243 = vld [vmem:[#allocation2 + $0x6e0] sm:$0xff]
    %v244 = vld [vmem:[#allocation2 + $0x6e8] sm:$0xff]
    %v245 = vld [vmem:[#allocation2 + $0x6f0] sm:$0xff]
    %v246 = vld [vmem:[#allocation2 + $0x6f8] sm:$0xff]
    %v247 = vld [vmem:[#allocation2 + $0x700] sm:$0xff]
    %v248 = vld [vmem:[#allocation2 + $0x708] sm:$0xff]
    %v249 = vld [vmem:[#allocation2 + $0x710] sm:$0xff]
    %v250 = vld [vmem:[#allocation2 + $0x718] sm:$0xff]
    %v251 = vld [vmem:[#allocation2 + $0x720] sm:$0xff]
    %v252 = vld [vmem:[#allocation2 + $0x728] sm:$0xff]
    %v253 = vld [vmem:[#allocation2 + $0x730] sm:$0xff]
    %v254 = vld [vmem:[#allocation2 + $0x738] sm:$0xff]
    %v255 = vld [vmem:[#allocation2 + $0x740] sm:$0xff]
    %v256 = vld [vmem:[#allocation2 + $0x748] sm:$0xff]
    %v257 = vld [vmem:[#allocation2 + $0x750] sm:$0xff]
    %v258 = vld [vmem:[#allocation2 + $0x758] sm:$0xff]
    %v259 = vld [vmem:[#allocation2 + $0x760] sm:$0xff]
    %v260 = vld [vmem:[#allocation2 + $0x768] sm:$0xff]
    %v261 = vld [vmem:[#allocation2 + $0x770] sm:$0xff]
    %v262 = vld [vmem:[#allocation2 + $0x778] sm:$0xff]
    %v263 = vld [vmem:[#allocation2 + $0x780] sm:$0xff]
    %v264 = vld [vmem:[#allocation2 + $0x788] sm:$0xff]
    %v265 = vld [vmem:[#allocation2 + $0x790] sm:$0xff]
    %v266 = vld [vmem:[#allocation2 + $0x798] sm:$0xff]
    %v267 = vld [vmem:[#allocation2 + $0x7a0] sm:$0xff]
    %v268 = vld [vmem:[#allocation2 + $0x7a8] sm:$0xff]
    %v269 = vld [vmem:[#allocation2 + $0x7b0] sm:$0xff]
    %v270 = vld [vmem:[#allocation2 + $0x7b8] sm:$0xff]
    %v271 = vld [vmem:[#allocation2 + $0x7c0] sm:$0xff]
    %v272 = vld [vmem:[#allocation2 + $0x7c8] sm:$0xff]
    %v273 = vld [vmem:[#allocation2 + $0x7d0] sm:$0xff]
    %v274 = vld [vmem:[#allocation2 + $0x7d8] sm:$0xff]
    %v275 = vld [vmem:[#allocation2 + $0x7e0] sm:$0xff]
    %v276 = vld [vmem:[#allocation2 + $0x7e8] sm:$0xff]
    %v277 = vld [vmem:[#allocation2 + $0x7f0] sm:$0xff]
    %v278 = vld [vmem:[#allocation2 + $0x7f8] sm:$0xff]
    %v279 = vld [vmem:[#allocation2 + $0x800] sm:$0xff]
    %v280 = vld [vmem:[#allocation2 + $0x808] sm:$0xff]
    %v281 = vld [vmem:[#allocation2 + $0x810] sm:$0xff]
    %v282 = vld [vmem:[#allocation2 + $0x818] sm:$0xff]
    %v283 = vld [vmem:[#allocation2 + $0x820] sm:$0xff]
    %v284 = vld [vmem:[#allocation2 + $0x828] sm:$0xff]
    %v285 = vld [vmem:[#allocation2 + $0x830] sm:$0xff]
    %v286 = vld [vmem:[#allocation2 + $0x838] sm:$0xff]
    %v287 = vld [vmem:[#allocation2 + $0x840] sm:$0xff]
    %v288 = vld [vmem:[#allocation2 + $0x848] sm:$0xff]
    %v289 = vld [vmem:[#allocation2 + $0x850] sm:$0xff]
    %v290 = vld [vmem:[#allocation2 + $0x858] sm:$0xff]
    %v291 = vld [vmem:[#allocation2 + $0x860] sm:$0xff]
    %v292 = vld [vmem:[#allocation2 + $0x868] sm:$0xff]
    %v293 = vld [vmem:[#allocation2 + $0x870] sm:$0xff]
    %v294 = vld [vmem:[#allocation2 + $0x878] sm:$0xff]
    %v295 = vld [vmem:[#allocation2 + $0x880] sm:$0xff]
    %v296 = vld [vmem:[#allocation2 + $0x888] sm:$0xff]
    %v297 = vld [vmem:[#allocation2 + $0x890] sm:$0xff]
    %v298 = vld [vmem:[#allocation2 + $0x898] sm:$0xff]
    %v299 = vld [vmem:[#allocation2 + $0x8a0] sm:$0xff]
    %v300 = vld [vmem:[#allocation2 + $0x8a8] sm:$0xff]
    %v301 = vld [vmem:[#allocation2 + $0x8b0] sm:$0xff]
    %v302 = vld [vmem:[#allocation2 + $0x8b8] sm:$0xff]
    %v303 = vld [vmem:[#allocation2 + $0x8c0] sm:$0xff]
    %v304 = vld [vmem:[#allocation2 + $0x8c8] sm:$0xff]
    %v305 = vld [vmem:[#allocation2 + $0x8d0] sm:$0xff]
    %v306 = vld [vmem:[#allocation2 + $0x8d8] sm:$0xff]
    %v307 = vld [vmem:[#allocation2 + $0x8e0] sm:$0xff]
    %v308 = vld [vmem:[#allocation2 + $0x8e8] sm:$0xff]
    %v309 = vld [vmem:[#allocation2 + $0x8f0] sm:$0xff]
    %v310 = vld [vmem:[#allocation2 + $0x8f8] sm:$0xff]
    %v311 = vld [vmem:[#allocation2 + $0x900] sm:$0xff]
    %v312 = vld [vmem:[#allocation2 + $0x908] sm:$0xff]
    %v313 = vld [vmem:[#allocation2 + $0x910] sm:$0xff]
    %v314 = vld [vmem:[#allocation2 + $0x918] sm:$0xff]
    %v315 = vld [vmem:[#allocation2 + $0x920] sm:$0xff]
    %v316 = vld [vmem:[#allocation2 + $0x928] sm:$0xff]
    %v317 = vld [vmem:[#allocation2 + $0x930] sm:$0xff]
    %v318 = vld [vmem:[#allocation2 + $0x938] sm:$0xff]
    %v319 = vld [vmem:[#allocation2 + $0x940] sm:$0xff]
    %v320 = vld [vmem:[#allocation2 + $0x948] sm:$0xff]
    %v321 = vld [vmem:[#allocation2 + $0x950] sm:$0xff]
    %v322 = vld [vmem:[#allocation2 + $0x958] sm:$0xff]
    %v323 = vld [vmem:[#allocation2 + $0x960] sm:$0xff]
    %v324 = vld [vmem:[#allocation2 + $0x968] sm:$0xff]
    %v325 = vld [vmem:[#allocation2 + $0x970] sm:$0xff]
    %v326 = vld [vmem:[#allocation2 + $0x978] sm:$0xff]
    %v327 = vld [vmem:[#allocation2 + $0x980] sm:$0xff]
    %v328 = vld [vmem:[#allocation2 + $0x988] sm:$0xff]
    %v329 = vld [vmem:[#allocation2 + $0x990] sm:$0xff]
    %v330 = vld [vmem:[#allocation2 + $0x998] sm:$0xff]
    %v331 = vld [vmem:[#allocation2 + $0x9a0] sm:$0xff]
    %v332 = vld [vmem:[#allocation2 + $0x9a8] sm:$0xff]
    %v333 = vld [vmem:[#allocation2 + $0x9b0] sm:$0xff]
    %v334 = vld [vmem:[#allocation2 + $0x9b8] sm:$0xff]
    %v335 = vld [vmem:[#allocation2 + $0x9c0] sm:$0xff]
    %v336 = vld [vmem:[#allocation2 + $0x9c8] sm:$0xff]
    %v337 = vld [vmem:[#allocation2 + $0x9d0] sm:$0xff]
    %v338 = vld [vmem:[#allocation2 + $0x9d8] sm:$0xff]
    %v339 = vld [vmem:[#allocation2 + $0x9e0] sm:$0xff]
    %v340 = vld [vmem:[#allocation2 + $0x9e8] sm:$0xff]
    %v341 = vld [vmem:[#allocation2 + $0x9f0] sm:$0xff]
    %v342 = vld [vmem:[#allocation2 + $0x9f8] sm:$0xff]
    %v343 = vld [vmem:[#allocation2 + $0xa00] sm:$0xff]
    %v344 = vld [vmem:[#allocation2 + $0xa08] sm:$0xff]
    %v345 = vld [vmem:[#allocation2 + $0xa10] sm:$0xff]
    %v346 = vld [vmem:[#allocation2 + $0xa18] sm:$0xff]
    %v347 = vld [vmem:[#allocation2 + $0xa20] sm:$0xff]
    %v348 = vld [vmem:[#allocation2 + $0xa28] sm:$0xff]
    %v349 = vld [vmem:[#allocation2 + $0xa30] sm:$0xff]
    %v350 = vld [vmem:[#allocation2 + $0xa38] sm:$0xff]
    %v351 = vld [vmem:[#allocation2 + $0xa40] sm:$0xff]
    %v352 = vld [vmem:[#allocation2 + $0xa48] sm:$0xff]
    %v353 = vld [vmem:[#allocation2 + $0xa50] sm:$0xff]
    %v354 = vld [vmem:[#allocation2 + $0xa58] sm:$0xff]
    %v355 = vld [vmem:[#allocation2 + $0xa60] sm:$0xff]
    %v356 = vld [vmem:[#allocation2 + $0xa68] sm:$0xff]
    %v357 = vld [vmem:[#allocation2 + $0xa70] sm:$0xff]
    %v358 = vld [vmem:[#allocation2 + $0xa78] sm:$0xff]
    %v359 = vld [vmem:[#allocation2 + $0xa80] sm:$0xff]
    %v360 = vld [vmem:[#allocation2 + $0xa88] sm:$0xff]
    %v361 = vld [vmem:[#allocation2 + $0xa90] sm:$0xff]
    %v362 = vld [vmem:[#allocation2 + $0xa98] sm:$0xff]
    %v363 = vld [vmem:[#allocation2 + $0xaa0] sm:$0xff]
    %v364 = vld [vmem:[#allocation2 + $0xaa8] sm:$0xff]
    %v365 = vld [vmem:[#allocation2 + $0xab0] sm:$0xff]
    %v366 = vld [vmem:[#allocation2 + $0xab8] sm:$0xff]
    %v367 = vld [vmem:[#allocation2 + $0xac0] sm:$0xff]
    %v368 = vld [vmem:[#allocation2 + $0xac8] sm:$0xff]
    %v369 = vld [vmem:[#allocation2 + $0xad0] sm:$0xff]
    %v370 = vld [vmem:[#allocation2 + $0xad8] sm:$0xff]
    %v371 = vld [vmem:[#allocation2 + $0xae0] sm:$0xff]
    %v372 = vld [vmem:[#allocation2 + $0xae8] sm:$0xff]
    %v373 = vld [vmem:[#allocation2 + $0xaf0] sm:$0xff]
    %v374 = vld [vmem:[#allocation2 + $0xaf8] sm:$0xff]
    %v375 = vld [vmem:[#allocation2 + $0xb00] sm:$0xff]
    %v376 = vld [vmem:[#allocation2 + $0xb08] sm:$0xff]
    %v377 = vld [vmem:[#allocation2 + $0xb10] sm:$0xff]
    %v378 = vld [vmem:[#allocation2 + $0xb18] sm:$0xff]
    %v379 = vld [vmem:[#allocation2 + $0xb20] sm:$0xff]
    %v380 = vld [vmem:[#allocation2 + $0xb28] sm:$0xff]
    %v381 = vld [vmem:[#allocation2 + $0xb30] sm:$0xff]
    %v382 = vld [vmem:[#allocation2 + $0xb38] sm:$0xff]
    %v383 = vld [vmem:[#allocation2 + $0xb40] sm:$0xff]
    %v384 = vld [vmem:[#allocation2 + $0xb48] sm:$0xff]
    %v385 = vld [vmem:[#allocation2 + $0xb50] sm:$0xff]
    %v386 = vld [vmem:[#allocation2 + $0xb58] sm:$0xff]
    %v387 = vld [vmem:[#allocation2 + $0xb60] sm:$0xff]
    %v388 = vld [vmem:[#allocation2 + $0xb68] sm:$0xff]
    %v389 = vld [vmem:[#allocation2 + $0xb70] sm:$0xff]
    %v390 = vld [vmem:[#allocation2 + $0xb78] sm:$0xff]
    %v391 = vld [vmem:[#allocation2 + $0xb80] sm:$0xff]
    %v392 = vld [vmem:[#allocation2 + $0xb88] sm:$0xff]
    %v393 = vld [vmem:[#allocation2 + $0xb90] sm:$0xff]
    %v394 = vld [vmem:[#allocation2 + $0xb98] sm:$0xff]
    %v395 = vld [vmem:[#allocation2 + $0xba0] sm:$0xff]
    %v396 = vld [vmem:[#allocation2 + $0xba8] sm:$0xff]
    %v397 = vld [vmem:[#allocation2 + $0xbb0] sm:$0xff]
    %v398 = vld [vmem:[#allocation2 + $0xbb8] sm:$0xff]
    %v399 = vld [vmem:[#allocation2 + $0xbc0] sm:$0xff]
    %v400 = vld [vmem:[#allocation2 + $0xbc8] sm:$0xff]
    %v401 = vld [vmem:[#allocation2 + $0xbd0] sm:$0xff]
    %v402 = vld [vmem:[#allocation2 + $0xbd8] sm:$0xff]
    %v403 = vld [vmem:[#allocation2 + $0xbe0] sm:$0xff]
    %v404 = vld [vmem:[#allocation2 + $0xbe8] sm:$0xff]
    %v405 = vld [vmem:[#allocation2 + $0xbf0] sm:$0xff]
    %v406 = vld [vmem:[#allocation2 + $0xbf8] sm:$0xff]
    %v407 = vld [vmem:[#allocation2 + $0xc00] sm:$0xff]
    %v408 = vld [vmem:[#allocation2 + $0xc08] sm:$0xff]
    %v409 = vld [vmem:[#allocation2 + $0xc10] sm:$0xff]
    %v410 = vld [vmem:[#allocation2 + $0xc18] sm:$0xff]
    %v411 = vld [vmem:[#allocation2 + $0xc20] sm:$0xff]
    %v412 = vld [vmem:[#allocation2 + $0xc28] sm:$0xff]
    %v413 = vld [vmem:[#allocation2 + $0xc30] sm:$0xff]
    %v414 = vld [vmem:[#allocation2 + $0xc38] sm:$0xff]
    %v415 = vld [vmem:[#allocation2 + $0xc40] sm:$0xff]
    %v416 = vld [vmem:[#allocation2 + $0xc48] sm:$0xff]
    %v417 = vld [vmem:[#allocation2 + $0xc50] sm:$0xff]
    %v418 = vld [vmem:[#allocation2 + $0xc58] sm:$0xff]
    %v419 = vld [vmem:[#allocation2 + $0xc60] sm:$0xff]
    %v420 = vld [vmem:[#allocation2 + $0xc68] sm:$0xff]
    %v421 = vld [vmem:[#allocation2 + $0xc70] sm:$0xff]
    %v422 = vld [vmem:[#allocation2 + $0xc78] sm:$0xff]
    %v423 = vld [vmem:[#allocation2 + $0xc80] sm:$0xff]
    %v424 = vld [vmem:[#allocation2 + $0xc88] sm:$0xff]
    %v425 = vld [vmem:[#allocation2 + $0xc90] sm:$0xff]
    %v426 = vld [vmem:[#allocation2 + $0xc98] sm:$0xff]
    %v427 = vld [vmem:[#allocation2 + $0xca0] sm:$0xff]
    %v428 = vld [vmem:[#allocation2 + $0xca8] sm:$0xff]
    %v429 = vld [vmem:[#allocation2 + $0xcb0] sm:$0xff]
    %v430 = vld [vmem:[#allocation2 + $0xcb8] sm:$0xff]
    %v431 = vld [vmem:[#allocation2 + $0xcc0] sm:$0xff]
    %v432 = vld [vmem:[#allocation2 + $0xcc8] sm:$0xff]
    %v433 = vld [vmem:[#allocation2 + $0xcd0] sm:$0xff]
    %v434 = vld [vmem:[#allocation2 + $0xcd8] sm:$0xff]
    %v435 = vld [vmem:[#allocation2 + $0xce0] sm:$0xff]
    %v436 = vld [vmem:[#allocation2 + $0xce8] sm:$0xff]
    %v437 = vld [vmem:[#allocation2 + $0xcf0] sm:$0xff]
    %v438 = vld [vmem:[#allocation2 + $0xcf8] sm:$0xff]
    %v439 = vld [vmem:[#allocation2 + $0xd00] sm:$0xff]
    %v440 = vld [vmem:[#allocation2 + $0xd08] sm:$0xff]
    %v441 = vld [vmem:[#allocation2 + $0xd10] sm:$0xff]
    %v442 = vld [vmem:[#allocation2 + $0xd18] sm:$0xff]
    %v443 = vld [vmem:[#allocation2 + $0xd20] sm:$0xff]
    %v444 = vld [vmem:[#allocation2 + $0xd28] sm:$0xff]
    %v445 = vld [vmem:[#allocation2 + $0xd30] sm:$0xff]
    %v446 = vld [vmem:[#allocation2 + $0xd38] sm:$0xff]
    %v447 = vld [vmem:[#allocation2 + $0xd40] sm:$0xff]
    %v448 = vld [vmem:[#allocation2 + $0xd48] sm:$0xff]
    %v449 = vld [vmem:[#allocation2 + $0xd50] sm:$0xff]
    %v450 = vld [vmem:[#allocation2 + $0xd58] sm:$0xff]
    %v451 = vld [vmem:[#allocation2 + $0xd60] sm:$0xff]
    %v452 = vld [vmem:[#allocation2 + $0xd68] sm:$0xff]
    %v453 = vld [vmem:[#allocation2 + $0xd70] sm:$0xff]
    %v454 = vld [vmem:[#allocation2 + $0xd78] sm:$0xff]
    %v455 = vld [vmem:[#allocation2 + $0xd80] sm:$0xff]
    %v456 = vld [vmem:[#allocation2 + $0xd88] sm:$0xff]
    %v457 = vld [vmem:[#allocation2 + $0xd90] sm:$0xff]
    %v458 = vld [vmem:[#allocation2 + $0xd98] sm:$0xff]
    %v459 = vld [vmem:[#allocation2 + $0xda0] sm:$0xff]
    %v460 = vld [vmem:[#allocation2 + $0xda8] sm:$0xff]
    %v461 = vld [vmem:[#allocation2 + $0xdb0] sm:$0xff]
    %v462 = vld [vmem:[#allocation2 + $0xdb8] sm:$0xff]
    %v463 = vld [vmem:[#allocation2 + $0xdc0] sm:$0xff]
    %v464 = vld [vmem:[#allocation2 + $0xdc8] sm:$0xff]
    %v465 = vld [vmem:[#allocation2 + $0xdd0] sm:$0xff]
    %v466 = vld [vmem:[#allocation2 + $0xdd8] sm:$0xff]
    %v467 = vld [vmem:[#allocation2 + $0xde0] sm:$0xff]
    %v468 = vld [vmem:[#allocation2 + $0xde8] sm:$0xff]
    %v469 = vld [vmem:[#allocation2 + $0xdf0] sm:$0xff]
    %v470 = vld [vmem:[#allocation2 + $0xdf8] sm:$0xff]
    %v471 = vld [vmem:[#allocation2 + $0xe00] sm:$0xff]
    %v472 = vld [vmem:[#allocation2 + $0xe08] sm:$0xff]
    %v473 = vld [vmem:[#allocation2 + $0xe10] sm:$0xff]
    %v474 = vld [vmem:[#allocation2 + $0xe18] sm:$0xff]
    %v475 = vld [vmem:[#allocation2 + $0xe20] sm:$0xff]
    %v476 = vld [vmem:[#allocation2 + $0xe28] sm:$0xff]
    %v477 = vld [vmem:[#allocation2 + $0xe30] sm:$0xff]
    %v478 = vld [vmem:[#allocation2 + $0xe38] sm:$0xff]
    %v479 = vld [vmem:[#allocation2 + $0xe40] sm:$0xff]
    %v480 = vld [vmem:[#allocation2 + $0xe48] sm:$0xff]
    %v481 = vld [vmem:[#allocation2 + $0xe50] sm:$0xff]
    %v482 = vld [vmem:[#allocation2 + $0xe58] sm:$0xff]
    %v483 = vld [vmem:[#allocation2 + $0xe60] sm:$0xff]
    %v484 = vld [vmem:[#allocation2 + $0xe68] sm:$0xff]
    %v485 = vld [vmem:[#allocation2 + $0xe70] sm:$0xff]
    %v486 = vld [vmem:[#allocation2 + $0xe78] sm:$0xff]
    %v487 = vld [vmem:[#allocation2 + $0xe80] sm:$0xff]
    %v488 = vld [vmem:[#allocation2 + $0xe88] sm:$0xff]
    %v489 = vld [vmem:[#allocation2 + $0xe90] sm:$0xff]
    %v490 = vld [vmem:[#allocation2 + $0xe98] sm:$0xff]
    %v491 = vld [vmem:[#allocation2 + $0xea0] sm:$0xff]
    %v492 = vld [vmem:[#allocation2 + $0xea8] sm:$0xff]
    %v493 = vld [vmem:[#allocation2 + $0xeb0] sm:$0xff]
    %v494 = vld [vmem:[#allocation2 + $0xeb8] sm:$0xff]
    %v495 = vld [vmem:[#allocation2 + $0xec0] sm:$0xff]
    %v496 = vld [vmem:[#allocation2 + $0xec8] sm:$0xff]
    %v497 = vld [vmem:[#allocation2 + $0xed0] sm:$0xff]
    %v498 = vld [vmem:[#allocation2 + $0xed8] sm:$0xff]
    %v499 = vld [vmem:[#allocation2 + $0xee0] sm:$0xff]
    %v500 = vld [vmem:[#allocation2 + $0xee8] sm:$0xff]
    %v501 = vld [vmem:[#allocation2 + $0xef0] sm:$0xff]
    %v502 = vld [vmem:[#allocation2 + $0xef8] sm:$0xff]
    %v503 = vld [vmem:[#allocation2 + $0xf00] sm:$0xff]
    %v504 = vld [vmem:[#allocation2 + $0xf08] sm:$0xff]
    %v505 = vld [vmem:[#allocation2 + $0xf10] sm:$0xff]
    %v506 = vld [vmem:[#allocation2 + $0xf18] sm:$0xff]
    %v507 = vld [vmem:[#allocation2 + $0xf20] sm:$0xff]
    %v508 = vld [vmem:[#allocation2 + $0xf28] sm:$0xff]
    %v509 = vld [vmem:[#allocation2 + $0xf30] sm:$0xff]
    %v510 = vld [vmem:[#allocation2 + $0xf38] sm:$0xff]
    %v511 = vld [vmem:[#allocation2 + $0xf40] sm:$0xff]
    %v512 = vld [vmem:[#allocation2 + $0xf48] sm:$0xff]
    %v513 = vld [vmem:[#allocation2 + $0xf50] sm:$0xff]
    %v514 = vld [vmem:[#allocation2 + $0xf58] sm:$0xff]
    %v515 = vld [vmem:[#allocation2 + $0xf60] sm:$0xff]
    %v516 = vld [vmem:[#allocation2 + $0xf68] sm:$0xff]
    %v517 = vld [vmem:[#allocation2 + $0xf70] sm:$0xff]
    %v518 = vld [vmem:[#allocation2 + $0xf78] sm:$0xff]
    %v519 = vld [vmem:[#allocation2 + $0xf80] sm:$0xff]
    %v520 = vld [vmem:[#allocation2 + $0xf88] sm:$0xff]
    %v521 = vld [vmem:[#allocation2 + $0xf90] sm:$0xff]
    %v522 = vld [vmem:[#allocation2 + $0xf98] sm:$0xff]
    %v523 = vld [vmem:[#allocation2 + $0xfa0] sm:$0xff]
    %v524 = vld [vmem:[#allocation2 + $0xfa8] sm:$0xff]
    %v525 = vld [vmem:[#allocation2 + $0xfb0] sm:$0xff]
    %v526 = vld [vmem:[#allocation2 + $0xfb8] sm:$0xff]
    %v527 = vld [vmem:[#allocation2 + $0xfc0] sm:$0xff]
    %v528 = vld [vmem:[#allocation2 + $0xfc8] sm:$0xff]
    %v529 = vld [vmem:[#allocation2 + $0xfd0] sm:$0xff]
    %v530 = vld [vmem:[#allocation2 + $0xfd8] sm:$0xff]
    %v531 = vld [vmem:[#allocation2 + $0xfe0] sm:$0xff]
    %v532 = vld [vmem:[#allocation2 + $0xfe8] sm:$0xff]
    %v533 = vld [vmem:[#allocation2 + $0xff0] sm:$0xff]
    %v534 = vld [vmem:[#allocation2 + $0xff8] sm:$0xff]
    %v535 = vadd.f32 %v23, 3.0
    %v536 = vadd.f32 %v24, 3.0
    %v537 = vadd.f32 %v25, 3.0
    %v538 = vadd.f32 %v26, 3.0
    %v539 = vadd.f32 %v27, 3.0
    %v540 = vadd.f32 %v28, 3.0
    %v541 = vadd.f32 %v29, 3.0
    %v542 = vadd.f32 %v30, 3.0
    %v543 = vadd.f32 %v31, 3.0
    %v544 = vadd.f32 %v32, 3.0
    %v545 = vadd.f32 %v33, 3.0
    %v546 = vadd.f32 %v34, 3.0
    %v547 = vadd.f32 %v35, 3.0
    %v548 = vadd.f32 %v36, 3.0
    %v549 = vadd.f32 %v37, 3.0
    %v550 = vadd.f32 %v38, 3.0
    %v551 = vadd.f32 %v39, 3.0
    %v552 = vadd.f32 %v40, 3.0
    %v553 = vadd.f32 %v41, 3.0
    %v554 = vadd.f32 %v42, 3.0
    %v555 = vadd.f32 %v43, 3.0
    %v556 = vadd.f32 %v44, 3.0
    %v557 = vadd.f32 %v45, 3.0
    %v558 = vadd.f32 %v46, 3.0
    %v559 = vadd.f32 %v47, 3.0
    %v560 = vadd.f32 %v48, 3.0
    %v561 = vadd.f32 %v49, 3.0
    %v562 = vadd.f32 %v50, 3.0
    %v563 = vadd.f32 %v51, 3.0
    %v564 = vadd.f32 %v52, 3.0
    %v565 = vadd.f32 %v53, 3.0
    %v566 = vadd.f32 %v54, 3.0
    %v567 = vadd.f32 %v55, 3.0
    %v568 = vadd.f32 %v56, 3.0
    %v569 = vadd.f32 %v57, 3.0
    %v570 = vadd.f32 %v58, 3.0
    %v571 = vadd.f32 %v59, 3.0
    %v572 = vadd.f32 %v60, 3.0
    %v573 = vadd.f32 %v61, 3.0
    %v574 = vadd.f32 %v62, 3.0
    %v575 = vadd.f32 %v63, 3.0
    %v576 = vadd.f32 %v64, 3.0
    %v577 = vadd.f32 %v65, 3.0
    %v578 = vadd.f32 %v66, 3.0
    %v579 = vadd.f32 %v67, 3.0
    %v580 = vadd.f32 %v68, 3.0
    %v581 = vadd.f32 %v69, 3.0
    %v582 = vadd.f32 %v70, 3.0
    %v583 = vadd.f32 %v71, 3.0
    %v584 = vadd.f32 %v72, 3.0
    %v585 = vadd.f32 %v73, 3.0
    %v586 = vadd.f32 %v74, 3.0
    %v587 = vadd.f32 %v75, 3.0
    %v588 = vadd.f32 %v76, 3.0
    %v589 = vadd.f32 %v77, 3.0
    %v590 = vadd.f32 %v78, 3.0
    %v591 = vadd.f32 %v79, 3.0
    %v592 = vadd.f32 %v80, 3.0
    %v593 = vadd.f32 %v81, 3.0
    %v594 = vadd.f32 %v82, 3.0
    %v595 = vadd.f32 %v83, 3.0
    %v596 = vadd.f32 %v84, 3.0
    %v597 = vadd.f32 %v85, 3.0
    %v598 = vadd.f32 %v86, 3.0
    %v599 = vadd.f32 %v87, 3.0
    %v600 = vadd.f32 %v88, 3.0
    %v601 = vadd.f32 %v89, 3.0
    %v602 = vadd.f32 %v90, 3.0
    %v603 = vadd.f32 %v91, 3.0
    %v604 = vadd.f32 %v92, 3.0
    %v605 = vadd.f32 %v93, 3.0
    %v606 = vadd.f32 %v94, 3.0
    %v607 = vadd.f32 %v95, 3.0
    %v608 = vadd.f32 %v96, 3.0
    %v609 = vadd.f32 %v97, 3.0
    %v610 = vadd.f32 %v98, 3.0
    %v611 = vadd.f32 %v99, 3.0
    %v612 = vadd.f32 %v100, 3.0
    %v613 = vadd.f32 %v101, 3.0
    %v614 = vadd.f32 %v102, 3.0
    %v615 = vadd.f32 %v103, 3.0
    %v616 = vadd.f32 %v104, 3.0
    %v617 = vadd.f32 %v105, 3.0
    %v618 = vadd.f32 %v106, 3.0
    %v619 = vadd.f32 %v107, 3.0
    %v620 = vadd.f32 %v108, 3.0
    %v621 = vadd.f32 %v109, 3.0
    %v622 = vadd.f32 %v110, 3.0
    %v623 = vadd.f32 %v111, 3.0
    %v624 = vadd.f32 %v112, 3.0
    %v625 = vadd.f32 %v113, 3.0
    %v626 = vadd.f32 %v114, 3.0
    %v627 = vadd.f32 %v115, 3.0
    %v628 = vadd.f32 %v116, 3.0
    %v629 = vadd.f32 %v117, 3.0
    %v630 = vadd.f32 %v118, 3.0
    %v631 = vadd.f32 %v119, 3.0
    %v632 = vadd.f32 %v120, 3.0
    %v633 = vadd.f32 %v121, 3.0
    %v634 = vadd.f32 %v122, 3.0
    %v635 = vadd.f32 %v123, 3.0
    %v636 = vadd.f32 %v124, 3.0
    %v637 = vadd.f32 %v125, 3.0
    %v638 = vadd.f32 %v126, 3.0
    %v639 = vadd.f32 %v127, 3.0
    %v640 = vadd.f32 %v128, 3.0
    %v641 = vadd.f32 %v129, 3.0
    %v642 = vadd.f32 %v130, 3.0
    %v643 = vadd.f32 %v131, 3.0
    %v644 = vadd.f32 %v132, 3.0
    %v645 = vadd.f32 %v133, 3.0
    %v646 = vadd.f32 %v134, 3.0
    %v647 = vadd.f32 %v135, 3.0
    %v648 = vadd.f32 %v136, 3.0
    %v649 = vadd.f32 %v137, 3.0
    %v650 = vadd.f32 %v138, 3.0
    %v651 = vadd.f32 %v139, 3.0
    %v652 = vadd.f32 %v140, 3.0
    %v653 = vadd.f32 %v141, 3.0
    %v654 = vadd.f32 %v142, 3.0
    %v655 = vadd.f32 %v143, 3.0
    %v656 = vadd.f32 %v144, 3.0
    %v657 = vadd.f32 %v145, 3.0
    %v658 = vadd.f32 %v146, 3.0
    %v659 = vadd.f32 %v147, 3.0
    %v660 = vadd.f32 %v148, 3.0
    %v661 = vadd.f32 %v149, 3.0
    %v662 = vadd.f32 %v150, 3.0
    %v663 = vadd.f32 %v151, 3.0
    %v664 = vadd.f32 %v152, 3.0
    %v665 = vadd.f32 %v153, 3.0
    %v666 = vadd.f32 %v154, 3.0
    %v667 = vadd.f32 %v155, 3.0
    %v668 = vadd.f32 %v156, 3.0
    %v669 = vadd.f32 %v157, 3.0
    %v670 = vadd.f32 %v158, 3.0
    %v671 = vadd.f32 %v159, 3.0
    %v672 = vadd.f32 %v160, 3.0
    %v673 = vadd.f32 %v161, 3.0
    %v674 = vadd.f32 %v162, 3.0
    %v675 = vadd.f32 %v163, 3.0
    %v676 = vadd.f32 %v164, 3.0
    %v677 = vadd.f32 %v165, 3.0
    %v678 = vadd.f32 %v166, 3.0
    %v679 = vadd.f32 %v167, 3.0
    %v680 = vadd.f32 %v168, 3.0
    %v681 = vadd.f32 %v169, 3.0
    %v682 = vadd.f32 %v170, 3.0
    %v683 = vadd.f32 %v171, 3.0
    %v684 = vadd.f32 %v172, 3.0
    %v685 = vadd.f32 %v173, 3.0
    %v686 = vadd.f32 %v174, 3.0
    %v687 = vadd.f32 %v175, 3.0
    %v688 = vadd.f32 %v176, 3.0
    %v689 = vadd.f32 %v177, 3.0
    %v690 = vadd.f32 %v178, 3.0
    %v691 = vadd.f32 %v179, 3.0
    %v692 = vadd.f32 %v180, 3.0
    %v693 = vadd.f32 %v181, 3.0
    %v694 = vadd.f32 %v182, 3.0
    %v695 = vadd.f32 %v183, 3.0
    %v696 = vadd.f32 %v184, 3.0
    %v697 = vadd.f32 %v185, 3.0
    %v698 = vadd.f32 %v186, 3.0
    %v699 = vadd.f32 %v187, 3.0
    %v700 = vadd.f32 %v188, 3.0
    %v701 = vadd.f32 %v189, 3.0
    %v702 = vadd.f32 %v190, 3.0
    %v703 = vadd.f32 %v191, 3.0
    %v704 = vadd.f32 %v192, 3.0
    %v705 = vadd.f32 %v193, 3.0
    %v706 = vadd.f32 %v194, 3.0
    %v707 = vadd.f32 %v195, 3.0
    %v708 = vadd.f32 %v196, 3.0
    %v709 = vadd.f32 %v197, 3.0
    %v710 = vadd.f32 %v198, 3.0
    %v711 = vadd.f32 %v199, 3.0
    %v712 = vadd.f32 %v200, 3.0
    %v713 = vadd.f32 %v201, 3.0
    %v714 = vadd.f32 %v202, 3.0
    %v715 = vadd.f32 %v203, 3.0
    %v716 = vadd.f32 %v204, 3.0
    %v717 = vadd.f32 %v205, 3.0
    %v718 = vadd.f32 %v206, 3.0
    %v719 = vadd.f32 %v207, 3.0
    %v720 = vadd.f32 %v208, 3.0
    %v721 = vadd.f32 %v209, 3.0
    %v722 = vadd.f32 %v210, 3.0
    %v723 = vadd.f32 %v211, 3.0
    %v724 = vadd.f32 %v212, 3.0
    %v725 = vadd.f32 %v213, 3.0
    %v726 = vadd.f32 %v214, 3.0
    %v727 = vadd.f32 %v215, 3.0
    %v728 = vadd.f32 %v216, 3.0
    %v729 = vadd.f32 %v217, 3.0
    %v730 = vadd.f32 %v218, 3.0
    %v731 = vadd.f32 %v219, 3.0
    %v732 = vadd.f32 %v220, 3.0
    %v733 = vadd.f32 %v221, 3.0
    %v734 = vadd.f32 %v222, 3.0
    %v735 = vadd.f32 %v223, 3.0
    %v736 = vadd.f32 %v224, 3.0
    %v737 = vadd.f32 %v225, 3.0
    %v738 = vadd.f32 %v226, 3.0
    %v739 = vadd.f32 %v227, 3.0
    %v740 = vadd.f32 %v228, 3.0
    %v741 = vadd.f32 %v229, 3.0
    %v742 = vadd.f32 %v230, 3.0
    %v743 = vadd.f32 %v231, 3.0
    %v744 = vadd.f32 %v232, 3.0
    %v745 = vadd.f32 %v233, 3.0
    %v746 = vadd.f32 %v234, 3.0
    %v747 = vadd.f32 %v235, 3.0
    %v748 = vadd.f32 %v236, 3.0
    %v749 = vadd.f32 %v237, 3.0
    %v750 = vadd.f32 %v238, 3.0
    %v751 = vadd.f32 %v239, 3.0
    %v752 = vadd.f32 %v240, 3.0
    %v753 = vadd.f32 %v241, 3.0
    %v754 = vadd.f32 %v242, 3.0
    %v755 = vadd.f32 %v243, 3.0
    %v756 = vadd.f32 %v244, 3.0
    %v757 = vadd.f32 %v245, 3.0
    %v758 = vadd.f32 %v246, 3.0
    %v759 = vadd.f32 %v247, 3.0
    %v760 = vadd.f32 %v248, 3.0
    %v761 = vadd.f32 %v249, 3.0
    %v762 = vadd.f32 %v250, 3.0
    %v763 = vadd.f32 %v251, 3.0
    %v764 = vadd.f32 %v252, 3.0
    %v765 = vadd.f32 %v253, 3.0
    %v766 = vadd.f32 %v254, 3.0
    %v767 = vadd.f32 %v255, 3.0
    %v768 = vadd.f32 %v256, 3.0
    %v769 = vadd.f32 %v257, 3.0
    %v770 = vadd.f32 %v258, 3.0
    %v771 = vadd.f32 %v259, 3.0
    %v772 = vadd.f32 %v260, 3.0
    %v773 = vadd.f32 %v261, 3.0
    %v774 = vadd.f32 %v262, 3.0
    %v775 = vadd.f32 %v263, 3.0
    %v776 = vadd.f32 %v264, 3.0
    %v777 = vadd.f32 %v265, 3.0
    %v778 = vadd.f32 %v266, 3.0
    %v779 = vadd.f32 %v267, 3.0
    %v780 = vadd.f32 %v268, 3.0
    %v781 = vadd.f32 %v269, 3.0
    %v782 = vadd.f32 %v270, 3.0
    %v783 = vadd.f32 %v271, 3.0
    %v784 = vadd.f32 %v272, 3.0
    %v785 = vadd.f32 %v273, 3.0
    %v786 = vadd.f32 %v274, 3.0
    %v787 = vadd.f32 %v275, 3.0
    %v788 = vadd.f32 %v276, 3.0
    %v789 = vadd.f32 %v277, 3.0
    %v790 = vadd.f32 %v278, 3.0
    %v791 = vadd.f32 %v279, 3.0
    %v792 = vadd.f32 %v280, 3.0
    %v793 = vadd.f32 %v281, 3.0
    %v794 = vadd.f32 %v282, 3.0
    %v795 = vadd.f32 %v283, 3.0
    %v796 = vadd.f32 %v284, 3.0
    %v797 = vadd.f32 %v285, 3.0
    %v798 = vadd.f32 %v286, 3.0
    %v799 = vadd.f32 %v287, 3.0
    %v800 = vadd.f32 %v288, 3.0
    %v801 = vadd.f32 %v289, 3.0
    %v802 = vadd.f32 %v290, 3.0
    %v803 = vadd.f32 %v291, 3.0
    %v804 = vadd.f32 %v292, 3.0
    %v805 = vadd.f32 %v293, 3.0
    %v806 = vadd.f32 %v294, 3.0
    %v807 = vadd.f32 %v295, 3.0
    %v808 = vadd.f32 %v296, 3.0
    %v809 = vadd.f32 %v297, 3.0
    %v810 = vadd.f32 %v298, 3.0
    %v811 = vadd.f32 %v299, 3.0
    %v812 = vadd.f32 %v300, 3.0
    %v813 = vadd.f32 %v301, 3.0
    %v814 = vadd.f32 %v302, 3.0
    %v815 = vadd.f32 %v303, 3.0
    %v816 = vadd.f32 %v304, 3.0
    %v817 = vadd.f32 %v305, 3.0
    %v818 = vadd.f32 %v306, 3.0
    %v819 = vadd.f32 %v307, 3.0
    %v820 = vadd.f32 %v308, 3.0
    %v821 = vadd.f32 %v309, 3.0
    %v822 = vadd.f32 %v310, 3.0
    %v823 = vadd.f32 %v311, 3.0
    %v824 = vadd.f32 %v312, 3.0
    %v825 = vadd.f32 %v313, 3.0
    %v826 = vadd.f32 %v314, 3.0
    %v827 = vadd.f32 %v315, 3.0
    %v828 = vadd.f32 %v316, 3.0
    %v829 = vadd.f32 %v317, 3.0
    %v830 = vadd.f32 %v318, 3.0
    %v831 = vadd.f32 %v319, 3.0
    %v832 = vadd.f32 %v320, 3.0
    %v833 = vadd.f32 %v321, 3.0
    %v834 = vadd.f32 %v322, 3.0
    %v835 = vadd.f32 %v323, 3.0
    %v836 = vadd.f32 %v324, 3.0
    %v837 = vadd.f32 %v325, 3.0
    %v838 = vadd.f32 %v326, 3.0
    %v839 = vadd.f32 %v327, 3.0
    %v840 = vadd.f32 %v328, 3.0
    %v841 = vadd.f32 %v329, 3.0
    %v842 = vadd.f32 %v330, 3.0
    %v843 = vadd.f32 %v331, 3.0
    %v844 = vadd.f32 %v332, 3.0
    %v845 = vadd.f32 %v333, 3.0
    %v846 = vadd.f32 %v334, 3.0
    %v847 = vadd.f32 %v335, 3.0
    %v848 = vadd.f32 %v336, 3.0
    %v849 = vadd.f32 %v337, 3.0
    %v850 = vadd.f32 %v338, 3.0
    %v851 = vadd.f32 %v339, 3.0
    %v852 = vadd.f32 %v340, 3.0
    %v853 = vadd.f32 %v341, 3.0
    %v854 = vadd.f32 %v342, 3.0
    %v855 = vadd.f32 %v343, 3.0
    %v856 = vadd.f32 %v344, 3.0
    %v857 = vadd.f32 %v345, 3.0
    %v858 = vadd.f32 %v346, 3.0
    %v859 = vadd.f32 %v347, 3.0
    %v860 = vadd.f32 %v348, 3.0
    %v861 = vadd.f32 %v349, 3.0
    %v862 = vadd.f32 %v350, 3.0
    %v863 = vadd.f32 %v351, 3.0
    %v864 = vadd.f32 %v352, 3.0
    %v865 = vadd.f32 %v353, 3.0
    %v866 = vadd.f32 %v354, 3.0
    %v867 = vadd.f32 %v355, 3.0
    %v868 = vadd.f32 %v356, 3.0
    %v869 = vadd.f32 %v357, 3.0
    %v870 = vadd.f32 %v358, 3.0
    %v871 = vadd.f32 %v359, 3.0
    %v872 = vadd.f32 %v360, 3.0
    %v873 = vadd.f32 %v361, 3.0
    %v874 = vadd.f32 %v362, 3.0
    %v875 = vadd.f32 %v363, 3.0
    %v876 = vadd.f32 %v364, 3.0
    %v877 = vadd.f32 %v365, 3.0
    %v878 = vadd.f32 %v366, 3.0
    %v879 = vadd.f32 %v367, 3.0
    %v880 = vadd.f32 %v368, 3.0
    %v881 = vadd.f32 %v369, 3.0
    %v882 = vadd.f32 %v370, 3.0
    %v883 = vadd.f32 %v371, 3.0
    %v884 = vadd.f32 %v372, 3.0
    %v885 = vadd.f32 %v373, 3.0
    %v886 = vadd.f32 %v374, 3.0
    %v887 = vadd.f32 %v375, 3.0
    %v888 = vadd.f32 %v376, 3.0
    %v889 = vadd.f32 %v377, 3.0
    %v890 = vadd.f32 %v378, 3.0
    %v891 = vadd.f32 %v379, 3.0
    %v892 = vadd.f32 %v380, 3.0
    %v893 = vadd.f32 %v381, 3.0
    %v894 = vadd.f32 %v382, 3.0
    %v895 = vadd.f32 %v383, 3.0
    %v896 = vadd.f32 %v384, 3.0
    %v897 = vadd.f32 %v385, 3.0
    %v898 = vadd.f32 %v386, 3.0
    %v899 = vadd.f32 %v387, 3.0
    %v900 = vadd.f32 %v388, 3.0
    %v901 = vadd.f32 %v389, 3.0
    %v902 = vadd.f32 %v390, 3.0
    %v903 = vadd.f32 %v391, 3.0
    %v904 = vadd.f32 %v392, 3.0
    %v905 = vadd.f32 %v393, 3.0
    %v906 = vadd.f32 %v394, 3.0
    %v907 = vadd.f32 %v395, 3.0
    %v908 = vadd.f32 %v396, 3.0
    %v909 = vadd.f32 %v397, 3.0
    %v910 = vadd.f32 %v398, 3.0
    %v911 = vadd.f32 %v399, 3.0
    %v912 = vadd.f32 %v400, 3.0
    %v913 = vadd.f32 %v401, 3.0
    %v914 = vadd.f32 %v402, 3.0
    %v915 = vadd.f32 %v403, 3.0
    %v916 = vadd.f32 %v404, 3.0
    %v917 = vadd.f32 %v405, 3.0
    %v918 = vadd.f32 %v406, 3.0
    %v919 = vadd.f32 %v407, 3.0
    %v920 = vadd.f32 %v408, 3.0
    %v921 = vadd.f32 %v409, 3.0
    %v922 = vadd.f32 %v410, 3.0
    %v923 = vadd.f32 %v411, 3.0
    %v924 = vadd.f32 %v412, 3.0
    %v925 = vadd.f32 %v413, 3.0
    %v926 = vadd.f32 %v414, 3.0
    %v927 = vadd.f32 %v415, 3.0
    %v928 = vadd.f32 %v416, 3.0
    %v929 = vadd.f32 %v417, 3.0
    %v930 = vadd.f32 %v418, 3.0
    %v931 = vadd.f32 %v419, 3.0
    %v932 = vadd.f32 %v420, 3.0
    %v933 = vadd.f32 %v421, 3.0
    %v934 = vadd.f32 %v422, 3.0
    %v935 = vadd.f32 %v423, 3.0
    %v936 = vadd.f32 %v424, 3.0
    %v937 = vadd.f32 %v425, 3.0
    %v938 = vadd.f32 %v426, 3.0
    %v939 = vadd.f32 %v427, 3.0
    %v940 = vadd.f32 %v428, 3.0
    %v941 = vadd.f32 %v429, 3.0
    %v942 = vadd.f32 %v430, 3.0
    %v943 = vadd.f32 %v431, 3.0
    %v944 = vadd.f32 %v432, 3.0
    %v945 = vadd.f32 %v433, 3.0
    %v946 = vadd.f32 %v434, 3.0
    %v947 = vadd.f32 %v435, 3.0
    %v948 = vadd.f32 %v436, 3.0
    %v949 = vadd.f32 %v437, 3.0
    %v950 = vadd.f32 %v438, 3.0
    %v951 = vadd.f32 %v439, 3.0
    %v952 = vadd.f32 %v440, 3.0
    %v953 = vadd.f32 %v441, 3.0
    %v954 = vadd.f32 %v442, 3.0
    %v955 = vadd.f32 %v443, 3.0
    %v956 = vadd.f32 %v444, 3.0
    %v957 = vadd.f32 %v445, 3.0
    %v958 = vadd.f32 %v446, 3.0
    %v959 = vadd.f32 %v447, 3.0
    %v960 = vadd.f32 %v448, 3.0
    %v961 = vadd.f32 %v449, 3.0
    %v962 = vadd.f32 %v450, 3.0
    %v963 = vadd.f32 %v451, 3.0
    %v964 = vadd.f32 %v452, 3.0
    %v965 = vadd.f32 %v453, 3.0
    %v966 = vadd.f32 %v454, 3.0
    %v967 = vadd.f32 %v455, 3.0
    %v968 = vadd.f32 %v456, 3.0
    %v969 = vadd.f32 %v457, 3.0
    %v970 = vadd.f32 %v458, 3.0
    %v971 = vadd.f32 %v459, 3.0
    %v972 = vadd.f32 %v460, 3.0
    %v973 = vadd.f32 %v461, 3.0
    %v974 = vadd.f32 %v462, 3.0
    %v975 = vadd.f32 %v463, 3.0
    %v976 = vadd.f32 %v464, 3.0
    %v977 = vadd.f32 %v465, 3.0
    %v978 = vadd.f32 %v466, 3.0
    %v979 = vadd.f32 %v467, 3.0
    %v980 = vadd.f32 %v468, 3.0
    %v981 = vadd.f32 %v469, 3.0
    %v982 = vadd.f32 %v470, 3.0
    %v983 = vadd.f32 %v471, 3.0
    %v984 = vadd.f32 %v472, 3.0
    %v985 = vadd.f32 %v473, 3.0
    %v986 = vadd.f32 %v474, 3.0
    %v987 = vadd.f32 %v475, 3.0
    %v988 = vadd.f32 %v476, 3.0
    %v989 = vadd.f32 %v477, 3.0
    %v990 = vadd.f32 %v478, 3.0
    %v991 = vadd.f32 %v479, 3.0
    %v992 = vadd.f32 %v480, 3.0
    %v993 = vadd.f32 %v481, 3.0
    %v994 = vadd.f32 %v482, 3.0
    %v995 = vadd.f32 %v483, 3.0
    %v996 = vadd.f32 %v484, 3.0
    %v997 = vadd.f32 %v485, 3.0
    %v998 = vadd.f32 %v486, 3.0
    %v999 = vadd.f32 %v487, 3.0
    %v1000 = vadd.f32 %v488, 3.0
    %v1001 = vadd.f32 %v489, 3.0
    %v1002 = vadd.f32 %v490, 3.0
    %v1003 = vadd.f32 %v491, 3.0
    %v1004 = vadd.f32 %v492, 3.0
    %v1005 = vadd.f32 %v493, 3.0
    %v1006 = vadd.f32 %v494, 3.0
    %v1007 = vadd.f32 %v495, 3.0
    %v1008 = vadd.f32 %v496, 3.0
    %v1009 = vadd.f32 %v497, 3.0
    %v1010 = vadd.f32 %v498, 3.0
    %v1011 = vadd.f32 %v499, 3.0
    %v1012 = vadd.f32 %v500, 3.0
    %v1013 = vadd.f32 %v501, 3.0
    %v1014 = vadd.f32 %v502, 3.0
    %v1015 = vadd.f32 %v503, 3.0
    %v1016 = vadd.f32 %v504, 3.0
    %v1017 = vadd.f32 %v505, 3.0
    %v1018 = vadd.f32 %v506, 3.0
    %v1019 = vadd.f32 %v507, 3.0
    %v1020 = vadd.f32 %v508, 3.0
    %v1021 = vadd.f32 %v509, 3.0
    %v1022 = vadd.f32 %v510, 3.0
    %v1023 = vadd.f32 %v511, 3.0
    %v1024 = vadd.f32 %v512, 3.0
    %v1025 = vadd.f32 %v513, 3.0
    %v1026 = vadd.f32 %v514, 3.0
    %v1027 = vadd.f32 %v515, 3.0
    %v1028 = vadd.f32 %v516, 3.0
    %v1029 = vadd.f32 %v517, 3.0
    %v1030 = vadd.f32 %v518, 3.0
    %v1031 = vadd.f32 %v519, 3.0
    %v1032 = vadd.f32 %v520, 3.0
    %v1033 = vadd.f32 %v521, 3.0
    %v1034 = vadd.f32 %v522, 3.0
    %v1035 = vadd.f32 %v523, 3.0
    %v1036 = vadd.f32 %v524, 3.0
    %v1037 = vadd.f32 %v525, 3.0
    %v1038 = vadd.f32 %v526, 3.0
    %v1039 = vadd.f32 %v527, 3.0
    %v1040 = vadd.f32 %v528, 3.0
    %v1041 = vadd.f32 %v529, 3.0
    %v1042 = vadd.f32 %v530, 3.0
    %v1043 = vadd.f32 %v531, 3.0
    %v1044 = vadd.f32 %v532, 3.0
    %v1045 = vadd.f32 %v533, 3.0
    %v1046 = vadd.f32 %v534, 3.0
    %v1047 = vmax.f32 %v535, 0.0
    %v1048 = vmax.f32 %v536, 0.0
    %v1049 = vmax.f32 %v537, 0.0
    %v1050 = vmax.f32 %v538, 0.0
    %v1051 = vmax.f32 %v539, 0.0
    %v1052 = vmax.f32 %v540, 0.0
    %v1053 = vmax.f32 %v541, 0.0
    %v1054 = vmax.f32 %v542, 0.0
    %v1055 = vmax.f32 %v543, 0.0
    %v1056 = vmax.f32 %v544, 0.0
    %v1057 = vmax.f32 %v545, 0.0
    %v1058 = vmax.f32 %v546, 0.0
    %v1059 = vmax.f32 %v547, 0.0
    %v1060 = vmax.f32 %v548, 0.0
    %v1061 = vmax.f32 %v549, 0.0
    %v1062 = vmax.f32 %v550, 0.0
    %v1063 = vmax.f32 %v551, 0.0
    %v1064 = vmax.f32 %v552, 0.0
    %v1065 = vmax.f32 %v553, 0.0
    %v1066 = vmax.f32 %v554, 0.0
    %v1067 = vmax.f32 %v555, 0.0
    %v1068 = vmax.f32 %v556, 0.0
    %v1069 = vmax.f32 %v557, 0.0
    %v1070 = vmax.f32 %v558, 0.0
    %v1071 = vmax.f32 %v559, 0.0
    %v1072 = vmax.f32 %v560, 0.0
    %v1073 = vmax.f32 %v561, 0.0
    %v1074 = vmax.f32 %v562, 0.0
    %v1075 = vmax.f32 %v563, 0.0
    %v1076 = vmax.f32 %v564, 0.0
    %v1077 = vmax.f32 %v565, 0.0
    %v1078 = vmax.f32 %v566, 0.0
    %v1079 = vmax.f32 %v567, 0.0
    %v1080 = vmax.f32 %v568, 0.0
    %v1081 = vmax.f32 %v569, 0.0
    %v1082 = vmax.f32 %v570, 0.0
    %v1083 = vmax.f32 %v571, 0.0
    %v1084 = vmax.f32 %v572, 0.0
    %v1085 = vmax.f32 %v573, 0.0
    %v1086 = vmax.f32 %v574, 0.0
    %v1087 = vmax.f32 %v575, 0.0
    %v1088 = vmax.f32 %v576, 0.0
    %v1089 = vmax.f32 %v577, 0.0
    %v1090 = vmax.f32 %v578, 0.0
    %v1091 = vmax.f32 %v579, 0.0
    %v1092 = vmax.f32 %v580, 0.0
    %v1093 = vmax.f32 %v581, 0.0
    %v1094 = vmax.f32 %v582, 0.0
    %v1095 = vmax.f32 %v583, 0.0
    %v1096 = vmax.f32 %v584, 0.0
    %v1097 = vmax.f32 %v585, 0.0
    %v1098 = vmax.f32 %v586, 0.0
    %v1099 = vmax.f32 %v587, 0.0
    %v1100 = vmax.f32 %v588, 0.0
    %v1101 = vmax.f32 %v589, 0.0
    %v1102 = vmax.f32 %v590, 0.0
    %v1103 = vmax.f32 %v591, 0.0
    %v1104 = vmax.f32 %v592, 0.0
    %v1105 = vmax.f32 %v593, 0.0
    %v1106 = vmax.f32 %v594, 0.0
    %v1107 = vmax.f32 %v595, 0.0
    %v1108 = vmax.f32 %v596, 0.0
    %v1109 = vmax.f32 %v597, 0.0
    %v1110 = vmax.f32 %v598, 0.0
    %v1111 = vmax.f32 %v599, 0.0
    %v1112 = vmax.f32 %v600, 0.0
    %v1113 = vmax.f32 %v601, 0.0
    %v1114 = vmax.f32 %v602, 0.0
    %v1115 = vmax.f32 %v603, 0.0
    %v1116 = vmax.f32 %v604, 0.0
    %v1117 = vmax.f32 %v605, 0.0
    %v1118 = vmax.f32 %v606, 0.0
    %v1119 = vmax.f32 %v607, 0.0
    %v1120 = vmax.f32 %v608, 0.0
    %v1121 = vmax.f32 %v609, 0.0
    %v1122 = vmax.f32 %v610, 0.0
    %v1123 = vmax.f32 %v611, 0.0
    %v1124 = vmax.f32 %v612, 0.0
    %v1125 = vmax.f32 %v613, 0.0
    %v1126 = vmax.f32 %v614, 0.0
    %v1127 = vmax.f32 %v615, 0.0
    %v1128 = vmax.f32 %v616, 0.0
    %v1129 = vmax.f32 %v617, 0.0
    %v1130 = vmax.f32 %v618, 0.0
    %v1131 = vmax.f32 %v619, 0.0
    %v1132 = vmax.f32 %v620, 0.0
    %v1133 = vmax.f32 %v621, 0.0
    %v1134 = vmax.f32 %v622, 0.0
    %v1135 = vmax.f32 %v623, 0.0
    %v1136 = vmax.f32 %v624, 0.0
    %v1137 = vmax.f32 %v625, 0.0
    %v1138 = vmax.f32 %v626, 0.0
    %v1139 = vmax.f32 %v627, 0.0
    %v1140 = vmax.f32 %v628, 0.0
    %v1141 = vmax.f32 %v629, 0.0
    %v1142 = vmax.f32 %v630, 0.0
    %v1143 = vmax.f32 %v631, 0.0
    %v1144 = vmax.f32 %v632, 0.0
    %v1145 = vmax.f32 %v633, 0.0
    %v1146 = vmax.f32 %v634, 0.0
    %v1147 = vmax.f32 %v635, 0.0
    %v1148 = vmax.f32 %v636, 0.0
    %v1149 = vmax.f32 %v637, 0.0
    %v1150 = vmax.f32 %v638, 0.0
    %v1151 = vmax.f32 %v639, 0.0
    %v1152 = vmax.f32 %v640, 0.0
    %v1153 = vmax.f32 %v641, 0.0
    %v1154 = vmax.f32 %v642, 0.0
    %v1155 = vmax.f32 %v643, 0.0
    %v1156 = vmax.f32 %v644, 0.0
    %v1157 = vmax.f32 %v645, 0.0
    %v1158 = vmax.f32 %v646, 0.0
    %v1159 = vmax.f32 %v647, 0.0
    %v1160 = vmax.f32 %v648, 0.0
    %v1161 = vmax.f32 %v649, 0.0
    %v1162 = vmax.f32 %v650, 0.0
    %v1163 = vmax.f32 %v651, 0.0
    %v1164 = vmax.f32 %v652, 0.0
    %v1165 = vmax.f32 %v653, 0.0
    %v1166 = vmax.f32 %v654, 0.0
    %v1167 = vmax.f32 %v655, 0.0
    %v1168 = vmax.f32 %v656, 0.0
    %v1169 = vmax.f32 %v657, 0.0
    %v1170 = vmax.f32 %v658, 0.0
    %v1171 = vmax.f32 %v659, 0.0
    %v1172 = vmax.f32 %v660, 0.0
    %v1173 = vmax.f32 %v661, 0.0
    %v1174 = vmax.f32 %v662, 0.0
    %v1175 = vmax.f32 %v663, 0.0
    %v1176 = vmax.f32 %v664, 0.0
    %v1177 = vmax.f32 %v665, 0.0
    %v1178 = vmax.f32 %v666, 0.0
    %v1179 = vmax.f32 %v667, 0.0
    %v1180 = vmax.f32 %v668, 0.0
    %v1181 = vmax.f32 %v669, 0.0
    %v1182 = vmax.f32 %v670, 0.0
    %v1183 = vmax.f32 %v671, 0.0
    %v1184 = vmax.f32 %v672, 0.0
    %v1185 = vmax.f32 %v673, 0.0
    %v1186 = vmax.f32 %v674, 0.0
    %v1187 = vmax.f32 %v675, 0.0
    %v1188 = vmax.f32 %v676, 0.0
    %v1189 = vmax.f32 %v677, 0.0
    %v1190 = vmax.f32 %v678, 0.0
    %v1191 = vmax.f32 %v679, 0.0
    %v1192 = vmax.f32 %v680, 0.0
    %v1193 = vmax.f32 %v681, 0.0
    %v1194 = vmax.f32 %v682, 0.0
    %v1195 = vmax.f32 %v683, 0.0
    %v1196 = vmax.f32 %v684, 0.0
    %v1197 = vmax.f32 %v685, 0.0
    %v1198 = vmax.f32 %v686, 0.0
    %v1199 = vmax.f32 %v687, 0.0
    %v1200 = vmax.f32 %v688, 0.0
    %v1201 = vmax.f32 %v689, 0.0
    %v1202 = vmax.f32 %v690, 0.0
    %v1203 = vmax.f32 %v691, 0.0
    %v1204 = vmax.f32 %v692, 0.0
    %v1205 = vmax.f32 %v693, 0.0
    %v1206 = vmax.f32 %v694, 0.0
    %v1207 = vmax.f32 %v695, 0.0
    %v1208 = vmax.f32 %v696, 0.0
    %v1209 = vmax.f32 %v697, 0.0
    %v1210 = vmax.f32 %v698, 0.0
    %v1211 = vmax.f32 %v699, 0.0
    %v1212 = vmax.f32 %v700, 0.0
    %v1213 = vmax.f32 %v701, 0.0
    %v1214 = vmax.f32 %v702, 0.0
    %v1215 = vmax.f32 %v703, 0.0
    %v1216 = vmax.f32 %v704, 0.0
    %v1217 = vmax.f32 %v705, 0.0
    %v1218 = vmax.f32 %v706, 0.0
    %v1219 = vmax.f32 %v707, 0.0
    %v1220 = vmax.f32 %v708, 0.0
    %v1221 = vmax.f32 %v709, 0.0
    %v1222 = vmax.f32 %v710, 0.0
    %v1223 = vmax.f32 %v711, 0.0
    %v1224 = vmax.f32 %v712, 0.0
    %v1225 = vmax.f32 %v713, 0.0
    %v1226 = vmax.f32 %v714, 0.0
    %v1227 = vmax.f32 %v715, 0.0
    %v1228 = vmax.f32 %v716, 0.0
    %v1229 = vmax.f32 %v717, 0.0
    %v1230 = vmax.f32 %v718, 0.0
    %v1231 = vmax.f32 %v719, 0.0
    %v1232 = vmax.f32 %v720, 0.0
    %v1233 = vmax.f32 %v721, 0.0
    %v1234 = vmax.f32 %v722, 0.0
    %v1235 = vmax.f32 %v723, 0.0
    %v1236 = vmax.f32 %v724, 0.0
    %v1237 = vmax.f32 %v725, 0.0
    %v1238 = vmax.f32 %v726, 0.0
    %v1239 = vmax.f32 %v727, 0.0
    %v1240 = vmax.f32 %v728, 0.0
    %v1241 = vmax.f32 %v729, 0.0
    %v1242 = vmax.f32 %v730, 0.0
    %v1243 = vmax.f32 %v731, 0.0
    %v1244 = vmax.f32 %v732, 0.0
    %v1245 = vmax.f32 %v733, 0.0
    %v1246 = vmax.f32 %v734, 0.0
    %v1247 = vmax.f32 %v735, 0.0
    %v1248 = vmax.f32 %v736, 0.0
    %v1249 = vmax.f32 %v737, 0.0
    %v1250 = vmax.f32 %v738, 0.0
    %v1251 = vmax.f32 %v739, 0.0
    %v1252 = vmax.f32 %v740, 0.0
    %v1253 = vmax.f32 %v741, 0.0
    %v1254 = vmax.f32 %v742, 0.0
    %v1255 = vmax.f32 %v743, 0.0
    %v1256 = vmax.f32 %v744, 0.0
    %v1257 = vmax.f32 %v745, 0.0
    %v1258 = vmax.f32 %v746, 0.0
    %v1259 = vmax.f32 %v747, 0.0
    %v1260 = vmax.f32 %v748, 0.0
    %v1261 = vmax.f32 %v749, 0.0
    %v1262 = vmax.f32 %v750, 0.0
    %v1263 = vmax.f32 %v751, 0.0
    %v1264 = vmax.f32 %v752, 0.0
    %v1265 = vmax.f32 %v753, 0.0
    %v1266 = vmax.f32 %v754, 0.0
    %v1267 = vmax.f32 %v755, 0.0
    %v1268 = vmax.f32 %v756, 0.0
    %v1269 = vmax.f32 %v757, 0.0
    %v1270 = vmax.f32 %v758, 0.0
    %v1271 = vmax.f32 %v759, 0.0
    %v1272 = vmax.f32 %v760, 0.0
    %v1273 = vmax.f32 %v761, 0.0
    %v1274 = vmax.f32 %v762, 0.0
    %v1275 = vmax.f32 %v763, 0.0
    %v1276 = vmax.f32 %v764, 0.0
    %v1277 = vmax.f32 %v765, 0.0
    %v1278 = vmax.f32 %v766, 0.0
    %v1279 = vmax.f32 %v767, 0.0
    %v1280 = vmax.f32 %v768, 0.0
    %v1281 = vmax.f32 %v769, 0.0
    %v1282 = vmax.f32 %v770, 0.0
    %v1283 = vmax.f32 %v771, 0.0
    %v1284 = vmax.f32 %v772, 0.0
    %v1285 = vmax.f32 %v773, 0.0
    %v1286 = vmax.f32 %v774, 0.0
    %v1287 = vmax.f32 %v775, 0.0
    %v1288 = vmax.f32 %v776, 0.0
    %v1289 = vmax.f32 %v777, 0.0
    %v1290 = vmax.f32 %v778, 0.0
    %v1291 = vmax.f32 %v779, 0.0
    %v1292 = vmax.f32 %v780, 0.0
    %v1293 = vmax.f32 %v781, 0.0
    %v1294 = vmax.f32 %v782, 0.0
    %v1295 = vmax.f32 %v783, 0.0
    %v1296 = vmax.f32 %v784, 0.0
    %v1297 = vmax.f32 %v785, 0.0
    %v1298 = vmax.f32 %v786, 0.0
    %v1299 = vmax.f32 %v787, 0.0
    %v1300 = vmax.f32 %v788, 0.0
    %v1301 = vmax.f32 %v789, 0.0
    %v1302 = vmax.f32 %v790, 0.0
    %v1303 = vmax.f32 %v791, 0.0
    %v1304 = vmax.f32 %v792, 0.0
    %v1305 = vmax.f32 %v793, 0.0
    %v1306 = vmax.f32 %v794, 0.0
    %v1307 = vmax.f32 %v795, 0.0
    %v1308 = vmax.f32 %v796, 0.0
    %v1309 = vmax.f32 %v797, 0.0
    %v1310 = vmax.f32 %v798, 0.0
    %v1311 = vmax.f32 %v799, 0.0
    %v1312 = vmax.f32 %v800, 0.0
    %v1313 = vmax.f32 %v801, 0.0
    %v1314 = vmax.f32 %v802, 0.0
    %v1315 = vmax.f32 %v803, 0.0
    %v1316 = vmax.f32 %v804, 0.0
    %v1317 = vmax.f32 %v805, 0.0
    %v1318 = vmax.f32 %v806, 0.0
    %v1319 = vmax.f32 %v807, 0.0
    %v1320 = vmax.f32 %v808, 0.0
    %v1321 = vmax.f32 %v809, 0.0
    %v1322 = vmax.f32 %v810, 0.0
    %v1323 = vmax.f32 %v811, 0.0
    %v1324 = vmax.f32 %v812, 0.0
    %v1325 = vmax.f32 %v813, 0.0
    %v1326 = vmax.f32 %v814, 0.0
    %v1327 = vmax.f32 %v815, 0.0
    %v1328 = vmax.f32 %v816, 0.0
    %v1329 = vmax.f32 %v817, 0.0
    %v1330 = vmax.f32 %v818, 0.0
    %v1331 = vmax.f32 %v819, 0.0
    %v1332 = vmax.f32 %v820, 0.0
    %v1333 = vmax.f32 %v821, 0.0
    %v1334 = vmax.f32 %v822, 0.0
    %v1335 = vmax.f32 %v823, 0.0
    %v1336 = vmax.f32 %v824, 0.0
    %v1337 = vmax.f32 %v825, 0.0
    %v1338 = vmax.f32 %v826, 0.0
    %v1339 = vmax.f32 %v827, 0.0
    %v1340 = vmax.f32 %v828, 0.0
    %v1341 = vmax.f32 %v829, 0.0
    %v1342 = vmax.f32 %v830, 0.0
    %v1343 = vmax.f32 %v831, 0.0
    %v1344 = vmax.f32 %v832, 0.0
    %v1345 = vmax.f32 %v833, 0.0
    %v1346 = vmax.f32 %v834, 0.0
    %v1347 = vmax.f32 %v835, 0.0
    %v1348 = vmax.f32 %v836, 0.0
    %v1349 = vmax.f32 %v837, 0.0
    %v1350 = vmax.f32 %v838, 0.0
    %v1351 = vmax.f32 %v839, 0.0
    %v1352 = vmax.f32 %v840, 0.0
    %v1353 = vmax.f32 %v841, 0.0
    %v1354 = vmax.f32 %v842, 0.0
    %v1355 = vmax.f32 %v843, 0.0
    %v1356 = vmax.f32 %v844, 0.0
    %v1357 = vmax.f32 %v845, 0.0
    %v1358 = vmax.f32 %v846, 0.0
    %v1359 = vmax.f32 %v847, 0.0
    %v1360 = vmax.f32 %v848, 0.0
    %v1361 = vmax.f32 %v849, 0.0
    %v1362 = vmax.f32 %v850, 0.0
    %v1363 = vmax.f32 %v851, 0.0
    %v1364 = vmax.f32 %v852, 0.0
    %v1365 = vmax.f32 %v853, 0.0
    %v1366 = vmax.f32 %v854, 0.0
    %v1367 = vmax.f32 %v855, 0.0
    %v1368 = vmax.f32 %v856, 0.0
    %v1369 = vmax.f32 %v857, 0.0
    %v1370 = vmax.f32 %v858, 0.0
    %v1371 = vmax.f32 %v859, 0.0
    %v1372 = vmax.f32 %v860, 0.0
    %v1373 = vmax.f32 %v861, 0.0
    %v1374 = vmax.f32 %v862, 0.0
    %v1375 = vmax.f32 %v863, 0.0
    %v1376 = vmax.f32 %v864, 0.0
    %v1377 = vmax.f32 %v865, 0.0
    %v1378 = vmax.f32 %v866, 0.0
    %v1379 = vmax.f32 %v867, 0.0
    %v1380 = vmax.f32 %v868, 0.0
    %v1381 = vmax.f32 %v869, 0.0
    %v1382 = vmax.f32 %v870, 0.0
    %v1383 = vmax.f32 %v871, 0.0
    %v1384 = vmax.f32 %v872, 0.0
    %v1385 = vmax.f32 %v873, 0.0
    %v1386 = vmax.f32 %v874, 0.0
    %v1387 = vmax.f32 %v875, 0.0
    %v1388 = vmax.f32 %v876, 0.0
    %v1389 = vmax.f32 %v877, 0.0
    %v1390 = vmax.f32 %v878, 0.0
    %v1391 = vmax.f32 %v879, 0.0
    %v1392 = vmax.f32 %v880, 0.0
    %v1393 = vmax.f32 %v881, 0.0
    %v1394 = vmax.f32 %v882, 0.0
    %v1395 = vmax.f32 %v883, 0.0
    %v1396 = vmax.f32 %v884, 0.0
    %v1397 = vmax.f32 %v885, 0.0
    %v1398 = vmax.f32 %v886, 0.0
    %v1399 = vmax.f32 %v887, 0.0
    %v1400 = vmax.f32 %v888, 0.0
    %v1401 = vmax.f32 %v889, 0.0
    %v1402 = vmax.f32 %v890, 0.0
    %v1403 = vmax.f32 %v891, 0.0
    %v1404 = vmax.f32 %v892, 0.0
    %v1405 = vmax.f32 %v893, 0.0
    %v1406 = vmax.f32 %v894, 0.0
    %v1407 = vmax.f32 %v895, 0.0
    %v1408 = vmax.f32 %v896, 0.0
    %v1409 = vmax.f32 %v897, 0.0
    %v1410 = vmax.f32 %v898, 0.0
    %v1411 = vmax.f32 %v899, 0.0
    %v1412 = vmax.f32 %v900, 0.0
    %v1413 = vmax.f32 %v901, 0.0
    %v1414 = vmax.f32 %v902, 0.0
    %v1415 = vmax.f32 %v903, 0.0
    %v1416 = vmax.f32 %v904, 0.0
    %v1417 = vmax.f32 %v905, 0.0
    %v1418 = vmax.f32 %v906, 0.0
    %v1419 = vmax.f32 %v907, 0.0
    %v1420 = vmax.f32 %v908, 0.0
    %v1421 = vmax.f32 %v909, 0.0
    %v1422 = vmax.f32 %v910, 0.0
    %v1423 = vmax.f32 %v911, 0.0
    %v1424 = vmax.f32 %v912, 0.0
    %v1425 = vmax.f32 %v913, 0.0
    %v1426 = vmax.f32 %v914, 0.0
    %v1427 = vmax.f32 %v915, 0.0
    %v1428 = vmax.f32 %v916, 0.0
    %v1429 = vmax.f32 %v917, 0.0
    %v1430 = vmax.f32 %v918, 0.0
    %v1431 = vmax.f32 %v919, 0.0
    %v1432 = vmax.f32 %v920, 0.0
    %v1433 = vmax.f32 %v921, 0.0
    %v1434 = vmax.f32 %v922, 0.0
    %v1435 = vmax.f32 %v923, 0.0
    %v1436 = vmax.f32 %v924, 0.0
    %v1437 = vmax.f32 %v925, 0.0
    %v1438 = vmax.f32 %v926, 0.0
    %v1439 = vmax.f32 %v927, 0.0
    %v1440 = vmax.f32 %v928, 0.0
    %v1441 = vmax.f32 %v929, 0.0
    %v1442 = vmax.f32 %v930, 0.0
    %v1443 = vmax.f32 %v931, 0.0
    %v1444 = vmax.f32 %v932, 0.0
    %v1445 = vmax.f32 %v933, 0.0
    %v1446 = vmax.f32 %v934, 0.0
    %v1447 = vmax.f32 %v935, 0.0
    %v1448 = vmax.f32 %v936, 0.0
    %v1449 = vmax.f32 %v937, 0.0
    %v1450 = vmax.f32 %v938, 0.0
    %v1451 = vmax.f32 %v939, 0.0
    %v1452 = vmax.f32 %v940, 0.0
    %v1453 = vmax.f32 %v941, 0.0
    %v1454 = vmax.f32 %v942, 0.0
    %v1455 = vmax.f32 %v943, 0.0
    %v1456 = vmax.f32 %v944, 0.0
    %v1457 = vmax.f32 %v945, 0.0
    %v1458 = vmax.f32 %v946, 0.0
    %v1459 = vmax.f32 %v947, 0.0
    %v1460 = vmax.f32 %v948, 0.0
    %v1461 = vmax.f32 %v949, 0.0
    %v1462 = vmax.f32 %v950, 0.0
    %v1463 = vmax.f32 %v951, 0.0
    %v1464 = vmax.f32 %v952, 0.0
    %v1465 = vmax.f32 %v953, 0.0
    %v1466 = vmax.f32 %v954, 0.0
    %v1467 = vmax.f32 %v955, 0.0
    %v1468 = vmax.f32 %v956, 0.0
    %v1469 = vmax.f32 %v957, 0.0
    %v1470 = vmax.f32 %v958, 0.0
    %v1471 = vmax.f32 %v959, 0.0
    %v1472 = vmax.f32 %v960, 0.0
    %v1473 = vmax.f32 %v961, 0.0
    %v1474 = vmax.f32 %v962, 0.0
    %v1475 = vmax.f32 %v963, 0.0
    %v1476 = vmax.f32 %v964, 0.0
    %v1477 = vmax.f32 %v965, 0.0
    %v1478 = vmax.f32 %v966, 0.0
    %v1479 = vmax.f32 %v967, 0.0
    %v1480 = vmax.f32 %v968, 0.0
    %v1481 = vmax.f32 %v969, 0.0
    %v1482 = vmax.f32 %v970, 0.0
    %v1483 = vmax.f32 %v971, 0.0
    %v1484 = vmax.f32 %v972, 0.0
    %v1485 = vmax.f32 %v973, 0.0
    %v1486 = vmax.f32 %v974, 0.0
    %v1487 = vmax.f32 %v975, 0.0
    %v1488 = vmax.f32 %v976, 0.0
    %v1489 = vmax.f32 %v977, 0.0
    %v1490 = vmax.f32 %v978, 0.0
    %v1491 = vmax.f32 %v979, 0.0
    %v1492 = vmax.f32 %v980, 0.0
    %v1493 = vmax.f32 %v981, 0.0
    %v1494 = vmax.f32 %v982, 0.0
    %v1495 = vmax.f32 %v983, 0.0
    %v1496 = vmax.f32 %v984, 0.0
    %v1497 = vmax.f32 %v985, 0.0
    %v1498 = vmax.f32 %v986, 0.0
    %v1499 = vmax.f32 %v987, 0.0
    %v1500 = vmax.f32 %v988, 0.0
    %v1501 = vmax.f32 %v989, 0.0
    %v1502 = vmax.f32 %v990, 0.0
    %v1503 = vmax.f32 %v991, 0.0
    %v1504 = vmax.f32 %v992, 0.0
    %v1505 = vmax.f32 %v993, 0.0
    %v1506 = vmax.f32 %v994, 0.0
    %v1507 = vmax.f32 %v995, 0.0
    %v1508 = vmax.f32 %v996, 0.0
    %v1509 = vmax.f32 %v997, 0.0
    %v1510 = vmax.f32 %v998, 0.0
    %v1511 = vmax.f32 %v999, 0.0
    %v1512 = vmax.f32 %v1000, 0.0
    %v1513 = vmax.f32 %v1001, 0.0
    %v1514 = vmax.f32 %v1002, 0.0
    %v1515 = vmax.f32 %v1003, 0.0
    %v1516 = vmax.f32 %v1004, 0.0
    %v1517 = vmax.f32 %v1005, 0.0
    %v1518 = vmax.f32 %v1006, 0.0
    %v1519 = vmax.f32 %v1007, 0.0
    %v1520 = vmax.f32 %v1008, 0.0
    %v1521 = vmax.f32 %v1009, 0.0
    %v1522 = vmax.f32 %v1010, 0.0
    %v1523 = vmax.f32 %v1011, 0.0
    %v1524 = vmax.f32 %v1012, 0.0
    %v1525 = vmax.f32 %v1013, 0.0
    %v1526 = vmax.f32 %v1014, 0.0
    %v1527 = vmax.f32 %v1015, 0.0
    %v1528 = vmax.f32 %v1016, 0.0
    %v1529 = vmax.f32 %v1017, 0.0
    %v1530 = vmax.f32 %v1018, 0.0
    %v1531 = vmax.f32 %v1019, 0.0
    %v1532 = vmax.f32 %v1020, 0.0
    %v1533 = vmax.f32 %v1021, 0.0
    %v1534 = vmax.f32 %v1022, 0.0
    %v1535 = vmax.f32 %v1023, 0.0
    %v1536 = vmax.f32 %v1024, 0.0
    %v1537 = vmax.f32 %v1025, 0.0
    %v1538 = vmax.f32 %v1026, 0.0
    %v1539 = vmax.f32 %v1027, 0.0
    %v1540 = vmax.f32 %v1028, 0.0
    %v1541 = vmax.f32 %v1029, 0.0
    %v1542 = vmax.f32 %v1030, 0.0
    %v1543 = vmax.f32 %v1031, 0.0
    %v1544 = vmax.f32 %v1032, 0.0
    %v1545 = vmax.f32 %v1033, 0.0
    %v1546 = vmax.f32 %v1034, 0.0
    %v1547 = vmax.f32 %v1035, 0.0
    %v1548 = vmax.f32 %v1036, 0.0
    %v1549 = vmax.f32 %v1037, 0.0
    %v1550 = vmax.f32 %v1038, 0.0
    %v1551 = vmax.f32 %v1039, 0.0
    %v1552 = vmax.f32 %v1040, 0.0
    %v1553 = vmax.f32 %v1041, 0.0
    %v1554 = vmax.f32 %v1042, 0.0
    %v1555 = vmax.f32 %v1043, 0.0
    %v1556 = vmax.f32 %v1044, 0.0
    %v1557 = vmax.f32 %v1045, 0.0
    %v1558 = vmax.f32 %v1046, 0.0
    %v1559 = vmin.f32 %v1047, 6.0
    %v1560 = vmin.f32 %v1048, 6.0
    %v1561 = vmin.f32 %v1049, 6.0
    %v1562 = vmin.f32 %v1050, 6.0
    %v1563 = vmin.f32 %v1051, 6.0
    %v1564 = vmin.f32 %v1052, 6.0
    %v1565 = vmin.f32 %v1053, 6.0
    %v1566 = vmin.f32 %v1054, 6.0
    %v1567 = vmin.f32 %v1055, 6.0
    %v1568 = vmin.f32 %v1056, 6.0
    %v1569 = vmin.f32 %v1057, 6.0
    %v1570 = vmin.f32 %v1058, 6.0
    %v1571 = vmin.f32 %v1059, 6.0
    %v1572 = vmin.f32 %v1060, 6.0
    %v1573 = vmin.f32 %v1061, 6.0
    %v1574 = vmin.f32 %v1062, 6.0
    %v1575 = vmin.f32 %v1063, 6.0
    %v1576 = vmin.f32 %v1064, 6.0
    %v1577 = vmin.f32 %v1065, 6.0
    %v1578 = vmin.f32 %v1066, 6.0
    %v1579 = vmin.f32 %v1067, 6.0
    %v1580 = vmin.f32 %v1068, 6.0
    %v1581 = vmin.f32 %v1069, 6.0
    %v1582 = vmin.f32 %v1070, 6.0
    %v1583 = vmin.f32 %v1071, 6.0
    %v1584 = vmin.f32 %v1072, 6.0
    %v1585 = vmin.f32 %v1073, 6.0
    %v1586 = vmin.f32 %v1074, 6.0
    %v1587 = vmin.f32 %v1075, 6.0
    %v1588 = vmin.f32 %v1076, 6.0
    %v1589 = vmin.f32 %v1077, 6.0
    %v1590 = vmin.f32 %v1078, 6.0
    %v1591 = vmin.f32 %v1079, 6.0
    %v1592 = vmin.f32 %v1080, 6.0
    %v1593 = vmin.f32 %v1081, 6.0
    %v1594 = vmin.f32 %v1082, 6.0
    %v1595 = vmin.f32 %v1083, 6.0
    %v1596 = vmin.f32 %v1084, 6.0
    %v1597 = vmin.f32 %v1085, 6.0
    %v1598 = vmin.f32 %v1086, 6.0
    %v1599 = vmin.f32 %v1087, 6.0
    %v1600 = vmin.f32 %v1088, 6.0
    %v1601 = vmin.f32 %v1089, 6.0
    %v1602 = vmin.f32 %v1090, 6.0
    %v1603 = vmin.f32 %v1091, 6.0
    %v1604 = vmin.f32 %v1092, 6.0
    %v1605 = vmin.f32 %v1093, 6.0
    %v1606 = vmin.f32 %v1094, 6.0
    %v1607 = vmin.f32 %v1095, 6.0
    %v1608 = vmin.f32 %v1096, 6.0
    %v1609 = vmin.f32 %v1097, 6.0
    %v1610 = vmin.f32 %v1098, 6.0
    %v1611 = vmin.f32 %v1099, 6.0
    %v1612 = vmin.f32 %v1100, 6.0
    %v1613 = vmin.f32 %v1101, 6.0
    %v1614 = vmin.f32 %v1102, 6.0
    %v1615 = vmin.f32 %v1103, 6.0
    %v1616 = vmin.f32 %v1104, 6.0
    %v1617 = vmin.f32 %v1105, 6.0
    %v1618 = vmin.f32 %v1106, 6.0
    %v1619 = vmin.f32 %v1107, 6.0
    %v1620 = vmin.f32 %v1108, 6.0
    %v1621 = vmin.f32 %v1109, 6.0
    %v1622 = vmin.f32 %v1110, 6.0
    %v1623 = vmin.f32 %v1111, 6.0
    %v1624 = vmin.f32 %v1112, 6.0
    %v1625 = vmin.f32 %v1113, 6.0
    %v1626 = vmin.f32 %v1114, 6.0
    %v1627 = vmin.f32 %v1115, 6.0
    %v1628 = vmin.f32 %v1116, 6.0
    %v1629 = vmin.f32 %v1117, 6.0
    %v1630 = vmin.f32 %v1118, 6.0
    %v1631 = vmin.f32 %v1119, 6.0
    %v1632 = vmin.f32 %v1120, 6.0
    %v1633 = vmin.f32 %v1121, 6.0
    %v1634 = vmin.f32 %v1122, 6.0
    %v1635 = vmin.f32 %v1123, 6.0
    %v1636 = vmin.f32 %v1124, 6.0
    %v1637 = vmin.f32 %v1125, 6.0
    %v1638 = vmin.f32 %v1126, 6.0
    %v1639 = vmin.f32 %v1127, 6.0
    %v1640 = vmin.f32 %v1128, 6.0
    %v1641 = vmin.f32 %v1129, 6.0
    %v1642 = vmin.f32 %v1130, 6.0
    %v1643 = vmin.f32 %v1131, 6.0
    %v1644 = vmin.f32 %v1132, 6.0
    %v1645 = vmin.f32 %v1133, 6.0
    %v1646 = vmin.f32 %v1134, 6.0
    %v1647 = vmin.f32 %v1135, 6.0
    %v1648 = vmin.f32 %v1136, 6.0
    %v1649 = vmin.f32 %v1137, 6.0
    %v1650 = vmin.f32 %v1138, 6.0
    %v1651 = vmin.f32 %v1139, 6.0
    %v1652 = vmin.f32 %v1140, 6.0
    %v1653 = vmin.f32 %v1141, 6.0
    %v1654 = vmin.f32 %v1142, 6.0
    %v1655 = vmin.f32 %v1143, 6.0
    %v1656 = vmin.f32 %v1144, 6.0
    %v1657 = vmin.f32 %v1145, 6.0
    %v1658 = vmin.f32 %v1146, 6.0
    %v1659 = vmin.f32 %v1147, 6.0
    %v1660 = vmin.f32 %v1148, 6.0
    %v1661 = vmin.f32 %v1149, 6.0
    %v1662 = vmin.f32 %v1150, 6.0
    %v1663 = vmin.f32 %v1151, 6.0
    %v1664 = vmin.f32 %v1152, 6.0
    %v1665 = vmin.f32 %v1153, 6.0
    %v1666 = vmin.f32 %v1154, 6.0
    %v1667 = vmin.f32 %v1155, 6.0
    %v1668 = vmin.f32 %v1156, 6.0
    %v1669 = vmin.f32 %v1157, 6.0
    %v1670 = vmin.f32 %v1158, 6.0
    %v1671 = vmin.f32 %v1159, 6.0
    %v1672 = vmin.f32 %v1160, 6.0
    %v1673 = vmin.f32 %v1161, 6.0
    %v1674 = vmin.f32 %v1162, 6.0
    %v1675 = vmin.f32 %v1163, 6.0
    %v1676 = vmin.f32 %v1164, 6.0
    %v1677 = vmin.f32 %v1165, 6.0
    %v1678 = vmin.f32 %v1166, 6.0
    %v1679 = vmin.f32 %v1167, 6.0
    %v1680 = vmin.f32 %v1168, 6.0
    %v1681 = vmin.f32 %v1169, 6.0
    %v1682 = vmin.f32 %v1170, 6.0
    %v1683 = vmin.f32 %v1171, 6.0
    %v1684 = vmin.f32 %v1172, 6.0
    %v1685 = vmin.f32 %v1173, 6.0
    %v1686 = vmin.f32 %v1174, 6.0
    %v1687 = vmin.f32 %v1175, 6.0
    %v1688 = vmin.f32 %v1176, 6.0
    %v1689 = vmin.f32 %v1177, 6.0
    %v1690 = vmin.f32 %v1178, 6.0
    %v1691 = vmin.f32 %v1179, 6.0
    %v1692 = vmin.f32 %v1180, 6.0
    %v1693 = vmin.f32 %v1181, 6.0
    %v1694 = vmin.f32 %v1182, 6.0
    %v1695 = vmin.f32 %v1183, 6.0
    %v1696 = vmin.f32 %v1184, 6.0
    %v1697 = vmin.f32 %v1185, 6.0
    %v1698 = vmin.f32 %v1186, 6.0
    %v1699 = vmin.f32 %v1187, 6.0
    %v1700 = vmin.f32 %v1188, 6.0
    %v1701 = vmin.f32 %v1189, 6.0
    %v1702 = vmin.f32 %v1190, 6.0
    %v1703 = vmin.f32 %v1191, 6.0
    %v1704 = vmin.f32 %v1192, 6.0
    %v1705 = vmin.f32 %v1193, 6.0
    %v1706 = vmin.f32 %v1194, 6.0
    %v1707 = vmin.f32 %v1195, 6.0
    %v1708 = vmin.f32 %v1196, 6.0
    %v1709 = vmin.f32 %v1197, 6.0
    %v1710 = vmin.f32 %v1198, 6.0
    %v1711 = vmin.f32 %v1199, 6.0
    %v1712 = vmin.f32 %v1200, 6.0
    %v1713 = vmin.f32 %v1201, 6.0
    %v1714 = vmin.f32 %v1202, 6.0
    %v1715 = vmin.f32 %v1203, 6.0
    %v1716 = vmin.f32 %v1204, 6.0
    %v1717 = vmin.f32 %v1205, 6.0
    %v1718 = vmin.f32 %v1206, 6.0
    %v1719 = vmin.f32 %v1207, 6.0
    %v1720 = vmin.f32 %v1208, 6.0
    %v1721 = vmin.f32 %v1209, 6.0
    %v1722 = vmin.f32 %v1210, 6.0
    %v1723 = vmin.f32 %v1211, 6.0
    %v1724 = vmin.f32 %v1212, 6.0
    %v1725 = vmin.f32 %v1213, 6.0
    %v1726 = vmin.f32 %v1214, 6.0
    %v1727 = vmin.f32 %v1215, 6.0
    %v1728 = vmin.f32 %v1216, 6.0
    %v1729 = vmin.f32 %v1217, 6.0
    %v1730 = vmin.f32 %v1218, 6.0
    %v1731 = vmin.f32 %v1219, 6.0
    %v1732 = vmin.f32 %v1220, 6.0
    %v1733 = vmin.f32 %v1221, 6.0
    %v1734 = vmin.f32 %v1222, 6.0
    %v1735 = vmin.f32 %v1223, 6.0
    %v1736 = vmin.f32 %v1224, 6.0
    %v1737 = vmin.f32 %v1225, 6.0
    %v1738 = vmin.f32 %v1226, 6.0
    %v1739 = vmin.f32 %v1227, 6.0
    %v1740 = vmin.f32 %v1228, 6.0
    %v1741 = vmin.f32 %v1229, 6.0
    %v1742 = vmin.f32 %v1230, 6.0
    %v1743 = vmin.f32 %v1231, 6.0
    %v1744 = vmin.f32 %v1232, 6.0
    %v1745 = vmin.f32 %v1233, 6.0
    %v1746 = vmin.f32 %v1234, 6.0
    %v1747 = vmin.f32 %v1235, 6.0
    %v1748 = vmin.f32 %v1236, 6.0
    %v1749 = vmin.f32 %v1237, 6.0
    %v1750 = vmin.f32 %v1238, 6.0
    %v1751 = vmin.f32 %v1239, 6.0
    %v1752 = vmin.f32 %v1240, 6.0
    %v1753 = vmin.f32 %v1241, 6.0
    %v1754 = vmin.f32 %v1242, 6.0
    %v1755 = vmin.f32 %v1243, 6.0
    %v1756 = vmin.f32 %v1244, 6.0
    %v1757 = vmin.f32 %v1245, 6.0
    %v1758 = vmin.f32 %v1246, 6.0
    %v1759 = vmin.f32 %v1247, 6.0
    %v1760 = vmin.f32 %v1248, 6.0
    %v1761 = vmin.f32 %v1249, 6.0
    %v1762 = vmin.f32 %v1250, 6.0
    %v1763 = vmin.f32 %v1251, 6.0
    %v1764 = vmin.f32 %v1252, 6.0
    %v1765 = vmin.f32 %v1253, 6.0
    %v1766 = vmin.f32 %v1254, 6.0
    %v1767 = vmin.f32 %v1255, 6.0
    %v1768 = vmin.f32 %v1256, 6.0
    %v1769 = vmin.f32 %v1257, 6.0
    %v1770 = vmin.f32 %v1258, 6.0
    %v1771 = vmin.f32 %v1259, 6.0
    %v1772 = vmin.f32 %v1260, 6.0
    %v1773 = vmin.f32 %v1261, 6.0
    %v1774 = vmin.f32 %v1262, 6.0
    %v1775 = vmin.f32 %v1263, 6.0
    %v1776 = vmin.f32 %v1264, 6.0
    %v1777 = vmin.f32 %v1265, 6.0
    %v1778 = vmin.f32 %v1266, 6.0
    %v1779 = vmin.f32 %v1267, 6.0
    %v1780 = vmin.f32 %v1268, 6.0
    %v1781 = vmin.f32 %v1269, 6.0
    %v1782 = vmin.f32 %v1270, 6.0
    %v1783 = vmin.f32 %v1271, 6.0
    %v1784 = vmin.f32 %v1272, 6.0
    %v1785 = vmin.f32 %v1273, 6.0
    %v1786 = vmin.f32 %v1274, 6.0
    %v1787 = vmin.f32 %v1275, 6.0
    %v1788 = vmin.f32 %v1276, 6.0
    %v1789 = vmin.f32 %v1277, 6.0
    %v1790 = vmin.f32 %v1278, 6.0
    %v1791 = vmin.f32 %v1279, 6.0
    %v1792 = vmin.f32 %v1280, 6.0
    %v1793 = vmin.f32 %v1281, 6.0
    %v1794 = vmin.f32 %v1282, 6.0
    %v1795 = vmin.f32 %v1283, 6.0
    %v1796 = vmin.f32 %v1284, 6.0
    %v1797 = vmin.f32 %v1285, 6.0
    %v1798 = vmin.f32 %v1286, 6.0
    %v1799 = vmin.f32 %v1287, 6.0
    %v1800 = vmin.f32 %v1288, 6.0
    %v1801 = vmin.f32 %v1289, 6.0
    %v1802 = vmin.f32 %v1290, 6.0
    %v1803 = vmin.f32 %v1291, 6.0
    %v1804 = vmin.f32 %v1292, 6.0
    %v1805 = vmin.f32 %v1293, 6.0
    %v1806 = vmin.f32 %v1294, 6.0
    %v1807 = vmin.f32 %v1295, 6.0
    %v1808 = vmin.f32 %v1296, 6.0
    %v1809 = vmin.f32 %v1297, 6.0
    %v1810 = vmin.f32 %v1298, 6.0
    %v1811 = vmin.f32 %v1299, 6.0
    %v1812 = vmin.f32 %v1300, 6.0
    %v1813 = vmin.f32 %v1301, 6.0
    %v1814 = vmin.f32 %v1302, 6.0
    %v1815 = vmin.f32 %v1303, 6.0
    %v1816 = vmin.f32 %v1304, 6.0
    %v1817 = vmin.f32 %v1305, 6.0
    %v1818 = vmin.f32 %v1306, 6.0
    %v1819 = vmin.f32 %v1307, 6.0
    %v1820 = vmin.f32 %v1308, 6.0
    %v1821 = vmin.f32 %v1309, 6.0
    %v1822 = vmin.f32 %v1310, 6.0
    %v1823 = vmin.f32 %v1311, 6.0
    %v1824 = vmin.f32 %v1312, 6.0
    %v1825 = vmin.f32 %v1313, 6.0
    %v1826 = vmin.f32 %v1314, 6.0
    %v1827 = vmin.f32 %v1315, 6.0
    %v1828 = vmin.f32 %v1316, 6.0
    %v1829 = vmin.f32 %v1317, 6.0
    %v1830 = vmin.f32 %v1318, 6.0
    %v1831 = vmin.f32 %v1319, 6.0
    %v1832 = vmin.f32 %v1320, 6.0
    %v1833 = vmin.f32 %v1321, 6.0
    %v1834 = vmin.f32 %v1322, 6.0
    %v1835 = vmin.f32 %v1323, 6.0
    %v1836 = vmin.f32 %v1324, 6.0
    %v1837 = vmin.f32 %v1325, 6.0
    %v1838 = vmin.f32 %v1326, 6.0
    %v1839 = vmin.f32 %v1327, 6.0
    %v1840 = vmin.f32 %v1328, 6.0
    %v1841 = vmin.f32 %v1329, 6.0
    %v1842 = vmin.f32 %v1330, 6.0
    %v1843 = vmin.f32 %v1331, 6.0
    %v1844 = vmin.f32 %v1332, 6.0
    %v1845 = vmin.f32 %v1333, 6.0
    %v1846 = vmin.f32 %v1334, 6.0
    %v1847 = vmin.f32 %v1335, 6.0
    %v1848 = vmin.f32 %v1336, 6.0
    %v1849 = vmin.f32 %v1337, 6.0
    %v1850 = vmin.f32 %v1338, 6.0
    %v1851 = vmin.f32 %v1339, 6.0
    %v1852 = vmin.f32 %v1340, 6.0
    %v1853 = vmin.f32 %v1341, 6.0
    %v1854 = vmin.f32 %v1342, 6.0
    %v1855 = vmin.f32 %v1343, 6.0
    %v1856 = vmin.f32 %v1344, 6.0
    %v1857 = vmin.f32 %v1345, 6.0
    %v1858 = vmin.f32 %v1346, 6.0
    %v1859 = vmin.f32 %v1347, 6.0
    %v1860 = vmin.f32 %v1348, 6.0
    %v1861 = vmin.f32 %v1349, 6.0
    %v1862 = vmin.f32 %v1350, 6.0
    %v1863 = vmin.f32 %v1351, 6.0
    %v1864 = vmin.f32 %v1352, 6.0
    %v1865 = vmin.f32 %v1353, 6.0
    %v1866 = vmin.f32 %v1354, 6.0
    %v1867 = vmin.f32 %v1355, 6.0
    %v1868 = vmin.f32 %v1356, 6.0
    %v1869 = vmin.f32 %v1357, 6.0
    %v1870 = vmin.f32 %v1358, 6.0
    %v1871 = vmin.f32 %v1359, 6.0
    %v1872 = vmin.f32 %v1360, 6.0
    %v1873 = vmin.f32 %v1361, 6.0
    %v1874 = vmin.f32 %v1362, 6.0
    %v1875 = vmin.f32 %v1363, 6.0
    %v1876 = vmin.f32 %v1364, 6.0
    %v1877 = vmin.f32 %v1365, 6.0
    %v1878 = vmin.f32 %v1366, 6.0
    %v1879 = vmin.f32 %v1367, 6.0
    %v1880 = vmin.f32 %v1368, 6.0
    %v1881 = vmin.f32 %v1369, 6.0
    %v1882 = vmin.f32 %v1370, 6.0
    %v1883 = vmin.f32 %v1371, 6.0
    %v1884 = vmin.f32 %v1372, 6.0
    %v1885 = vmin.f32 %v1373, 6.0
    %v1886 = vmin.f32 %v1374, 6.0
    %v1887 = vmin.f32 %v1375, 6.0
    %v1888 = vmin.f32 %v1376, 6.0
    %v1889 = vmin.f32 %v1377, 6.0
    %v1890 = vmin.f32 %v1378, 6.0
    %v1891 = vmin.f32 %v1379, 6.0
    %v1892 = vmin.f32 %v1380, 6.0
    %v1893 = vmin.f32 %v1381, 6.0
    %v1894 = vmin.f32 %v1382, 6.0
    %v1895 = vmin.f32 %v1383, 6.0
    %v1896 = vmin.f32 %v1384, 6.0
    %v1897 = vmin.f32 %v1385, 6.0
    %v1898 = vmin.f32 %v1386, 6.0
    %v1899 = vmin.f32 %v1387, 6.0
    %v1900 = vmin.f32 %v1388, 6.0
    %v1901 = vmin.f32 %v1389, 6.0
    %v1902 = vmin.f32 %v1390, 6.0
    %v1903 = vmin.f32 %v1391, 6.0
    %v1904 = vmin.f32 %v1392, 6.0
    %v1905 = vmin.f32 %v1393, 6.0
    %v1906 = vmin.f32 %v1394, 6.0
    %v1907 = vmin.f32 %v1395, 6.0
    %v1908 = vmin.f32 %v1396, 6.0
    %v1909 = vmin.f32 %v1397, 6.0
    %v1910 = vmin.f32 %v1398, 6.0
    %v1911 = vmin.f32 %v1399, 6.0
    %v1912 = vmin.f32 %v1400, 6.0
    %v1913 = vmin.f32 %v1401, 6.0
    %v1914 = vmin.f32 %v1402, 6.0
    %v1915 = vmin.f32 %v1403, 6.0
    %v1916 = vmin.f32 %v1404, 6.0
    %v1917 = vmin.f32 %v1405, 6.0
    %v1918 = vmin.f32 %v1406, 6.0
    %v1919 = vmin.f32 %v1407, 6.0
    %v1920 = vmin.f32 %v1408, 6.0
    %v1921 = vmin.f32 %v1409, 6.0
    %v1922 = vmin.f32 %v1410, 6.0
    %v1923 = vmin.f32 %v1411, 6.0
    %v1924 = vmin.f32 %v1412, 6.0
    %v1925 = vmin.f32 %v1413, 6.0
    %v1926 = vmin.f32 %v1414, 6.0
    %v1927 = vmin.f32 %v1415, 6.0
    %v1928 = vmin.f32 %v1416, 6.0
    %v1929 = vmin.f32 %v1417, 6.0
    %v1930 = vmin.f32 %v1418, 6.0
    %v1931 = vmin.f32 %v1419, 6.0
    %v1932 = vmin.f32 %v1420, 6.0
    %v1933 = vmin.f32 %v1421, 6.0
    %v1934 = vmin.f32 %v1422, 6.0
    %v1935 = vmin.f32 %v1423, 6.0
    %v1936 = vmin.f32 %v1424, 6.0
    %v1937 = vmin.f32 %v1425, 6.0
    %v1938 = vmin.f32 %v1426, 6.0
    %v1939 = vmin.f32 %v1427, 6.0
    %v1940 = vmin.f32 %v1428, 6.0
    %v1941 = vmin.f32 %v1429, 6.0
    %v1942 = vmin.f32 %v1430, 6.0
    %v1943 = vmin.f32 %v1431, 6.0
    %v1944 = vmin.f32 %v1432, 6.0
    %v1945 = vmin.f32 %v1433, 6.0
    %v1946 = vmin.f32 %v1434, 6.0
    %v1947 = vmin.f32 %v1435, 6.0
    %v1948 = vmin.f32 %v1436, 6.0
    %v1949 = vmin.f32 %v1437, 6.0
    %v1950 = vmin.f32 %v1438, 6.0
    %v1951 = vmin.f32 %v1439, 6.0
    %v1952 = vmin.f32 %v1440, 6.0
    %v1953 = vmin.f32 %v1441, 6.0
    %v1954 = vmin.f32 %v1442, 6.0
    %v1955 = vmin.f32 %v1443, 6.0
    %v1956 = vmin.f32 %v1444, 6.0
    %v1957 = vmin.f32 %v1445, 6.0
    %v1958 = vmin.f32 %v1446, 6.0
    %v1959 = vmin.f32 %v1447, 6.0
    %v1960 = vmin.f32 %v1448, 6.0
    %v1961 = vmin.f32 %v1449, 6.0
    %v1962 = vmin.f32 %v1450, 6.0
    %v1963 = vmin.f32 %v1451, 6.0
    %v1964 = vmin.f32 %v1452, 6.0
    %v1965 = vmin.f32 %v1453, 6.0
    %v1966 = vmin.f32 %v1454, 6.0
    %v1967 = vmin.f32 %v1455, 6.0
    %v1968 = vmin.f32 %v1456, 6.0
    %v1969 = vmin.f32 %v1457, 6.0
    %v1970 = vmin.f32 %v1458, 6.0
    %v1971 = vmin.f32 %v1459, 6.0
    %v1972 = vmin.f32 %v1460, 6.0
    %v1973 = vmin.f32 %v1461, 6.0
    %v1974 = vmin.f32 %v1462, 6.0
    %v1975 = vmin.f32 %v1463, 6.0
    %v1976 = vmin.f32 %v1464, 6.0
    %v1977 = vmin.f32 %v1465, 6.0
    %v1978 = vmin.f32 %v1466, 6.0
    %v1979 = vmin.f32 %v1467, 6.0
    %v1980 = vmin.f32 %v1468, 6.0
    %v1981 = vmin.f32 %v1469, 6.0
    %v1982 = vmin.f32 %v1470, 6.0
    %v1983 = vmin.f32 %v1471, 6.0
    %v1984 = vmin.f32 %v1472, 6.0
    %v1985 = vmin.f32 %v1473, 6.0
    %v1986 = vmin.f32 %v1474, 6.0
    %v1987 = vmin.f32 %v1475, 6.0
    %v1988 = vmin.f32 %v1476, 6.0
    %v1989 = vmin.f32 %v1477, 6.0
    %v1990 = vmin.f32 %v1478, 6.0
    %v1991 = vmin.f32 %v1479, 6.0
    %v1992 = vmin.f32 %v1480, 6.0
    %v1993 = vmin.f32 %v1481, 6.0
    %v1994 = vmin.f32 %v1482, 6.0
    %v1995 = vmin.f32 %v1483, 6.0
    %v1996 = vmin.f32 %v1484, 6.0
    %v1997 = vmin.f32 %v1485, 6.0
    %v1998 = vmin.f32 %v1486, 6.0
    %v1999 = vmin.f32 %v1487, 6.0
    %v2000 = vmin.f32 %v1488, 6.0
    %v2001 = vmin.f32 %v1489, 6.0
    %v2002 = vmin.f32 %v1490, 6.0
    %v2003 = vmin.f32 %v1491, 6.0
    %v2004 = vmin.f32 %v1492, 6.0
    %v2005 = vmin.f32 %v1493, 6.0
    %v2006 = vmin.f32 %v1494, 6.0
    %v2007 = vmin.f32 %v1495, 6.0
    %v2008 = vmin.f32 %v1496, 6.0
    %v2009 = vmin.f32 %v1497, 6.0
    %v2010 = vmin.f32 %v1498, 6.0
    %v2011 = vmin.f32 %v1499, 6.0
    %v2012 = vmin.f32 %v1500, 6.0
    %v2013 = vmin.f32 %v1501, 6.0
    %v2014 = vmin.f32 %v1502, 6.0
    %v2015 = vmin.f32 %v1503, 6.0
    %v2016 = vmin.f32 %v1504, 6.0
    %v2017 = vmin.f32 %v1505, 6.0
    %v2018 = vmin.f32 %v1506, 6.0
    %v2019 = vmin.f32 %v1507, 6.0
    %v2020 = vmin.f32 %v1508, 6.0
    %v2021 = vmin.f32 %v1509, 6.0
    %v2022 = vmin.f32 %v1510, 6.0
    %v2023 = vmin.f32 %v1511, 6.0
    %v2024 = vmin.f32 %v1512, 6.0
    %v2025 = vmin.f32 %v1513, 6.0
    %v2026 = vmin.f32 %v1514, 6.0
    %v2027 = vmin.f32 %v1515, 6.0
    %v2028 = vmin.f32 %v1516, 6.0
    %v2029 = vmin.f32 %v1517, 6.0
    %v2030 = vmin.f32 %v1518, 6.0
    %v2031 = vmin.f32 %v1519, 6.0
    %v2032 = vmin.f32 %v1520, 6.0
    %v2033 = vmin.f32 %v1521, 6.0
    %v2034 = vmin.f32 %v1522, 6.0
    %v2035 = vmin.f32 %v1523, 6.0
    %v2036 = vmin.f32 %v1524, 6.0
    %v2037 = vmin.f32 %v1525, 6.0
    %v2038 = vmin.f32 %v1526, 6.0
    %v2039 = vmin.f32 %v1527, 6.0
    %v2040 = vmin.f32 %v1528, 6.0
    %v2041 = vmin.f32 %v1529, 6.0
    %v2042 = vmin.f32 %v1530, 6.0
    %v2043 = vmin.f32 %v1531, 6.0
    %v2044 = vmin.f32 %v1532, 6.0
    %v2045 = vmin.f32 %v1533, 6.0
    %v2046 = vmin.f32 %v1534, 6.0
    %v2047 = vmin.f32 %v1535, 6.0
    %v2048 = vmin.f32 %v1536, 6.0
    %v2049 = vmin.f32 %v1537, 6.0
    %v2050 = vmin.f32 %v1538, 6.0
    %v2051 = vmin.f32 %v1539, 6.0
    %v2052 = vmin.f32 %v1540, 6.0
    %v2053 = vmin.f32 %v1541, 6.0
    %v2054 = vmin.f32 %v1542, 6.0
    %v2055 = vmin.f32 %v1543, 6.0
    %v2056 = vmin.f32 %v1544, 6.0
    %v2057 = vmin.f32 %v1545, 6.0
    %v2058 = vmin.f32 %v1546, 6.0
    %v2059 = vmin.f32 %v1547, 6.0
    %v2060 = vmin.f32 %v1548, 6.0
    %v2061 = vmin.f32 %v1549, 6.0
    %v2062 = vmin.f32 %v1550, 6.0
    %v2063 = vmin.f32 %v1551, 6.0
    %v2064 = vmin.f32 %v1552, 6.0
    %v2065 = vmin.f32 %v1553, 6.0
    %v2066 = vmin.f32 %v1554, 6.0
    %v2067 = vmin.f32 %v1555, 6.0
    %v2068 = vmin.f32 %v1556, 6.0
    %v2069 = vmin.f32 %v1557, 6.0
    %v2070 = vmin.f32 %v1558, 6.0
    %v2071 = vmul.f32 %v1559, 0.16666667
    %v2072 = vmul.f32 %v1560, 0.16666667
    %v2073 = vmul.f32 %v1561, 0.16666667
    %v2074 = vmul.f32 %v1562, 0.16666667
    %v2075 = vmul.f32 %v1563, 0.16666667
    %v2076 = vmul.f32 %v1564, 0.16666667
    %v2077 = vmul.f32 %v1565, 0.16666667
    %v2078 = vmul.f32 %v1566, 0.16666667
    %v2079 = vmul.f32 %v1567, 0.16666667
    %v2080 = vmul.f32 %v1568, 0.16666667
    %v2081 = vmul.f32 %v1569, 0.16666667
    %v2082 = vmul.f32 %v1570, 0.16666667
    %v2083 = vmul.f32 %v1571, 0.16666667
    %v2084 = vmul.f32 %v1572, 0.16666667
    %v2085 = vmul.f32 %v1573, 0.16666667
    %v2086 = vmul.f32 %v1574, 0.16666667
    %v2087 = vmul.f32 %v1575, 0.16666667
    %v2088 = vmul.f32 %v1576, 0.16666667
    %v2089 = vmul.f32 %v1577, 0.16666667
    %v2090 = vmul.f32 %v1578, 0.16666667
    %v2091 = vmul.f32 %v1579, 0.16666667
    %v2092 = vmul.f32 %v1580, 0.16666667
    %v2093 = vmul.f32 %v1581, 0.16666667
    %v2094 = vmul.f32 %v1582, 0.16666667
    %v2095 = vmul.f32 %v1583, 0.16666667
    %v2096 = vmul.f32 %v1584, 0.16666667
    %v2097 = vmul.f32 %v1585, 0.16666667
    %v2098 = vmul.f32 %v1586, 0.16666667
    %v2099 = vmul.f32 %v1587, 0.16666667
    %v2100 = vmul.f32 %v1588, 0.16666667
    %v2101 = vmul.f32 %v1589, 0.16666667
    %v2102 = vmul.f32 %v1590, 0.16666667
    %v2103 = vmul.f32 %v1591, 0.16666667
    %v2104 = vmul.f32 %v1592, 0.16666667
    %v2105 = vmul.f32 %v1593, 0.16666667
    %v2106 = vmul.f32 %v1594, 0.16666667
    %v2107 = vmul.f32 %v1595, 0.16666667
    %v2108 = vmul.f32 %v1596, 0.16666667
    %v2109 = vmul.f32 %v1597, 0.16666667
    %v2110 = vmul.f32 %v1598, 0.16666667
    %v2111 = vmul.f32 %v1599, 0.16666667
    %v2112 = vmul.f32 %v1600, 0.16666667
    %v2113 = vmul.f32 %v1601, 0.16666667
    %v2114 = vmul.f32 %v1602, 0.16666667
    %v2115 = vmul.f32 %v1603, 0.16666667
    %v2116 = vmul.f32 %v1604, 0.16666667
    %v2117 = vmul.f32 %v1605, 0.16666667
    %v2118 = vmul.f32 %v1606, 0.16666667
    %v2119 = vmul.f32 %v1607, 0.16666667
    %v2120 = vmul.f32 %v1608, 0.16666667
    %v2121 = vmul.f32 %v1609, 0.16666667
    %v2122 = vmul.f32 %v1610, 0.16666667
    %v2123 = vmul.f32 %v1611, 0.16666667
    %v2124 = vmul.f32 %v1612, 0.16666667
    %v2125 = vmul.f32 %v1613, 0.16666667
    %v2126 = vmul.f32 %v1614, 0.16666667
    %v2127 = vmul.f32 %v1615, 0.16666667
    %v2128 = vmul.f32 %v1616, 0.16666667
    %v2129 = vmul.f32 %v1617, 0.16666667
    %v2130 = vmul.f32 %v1618, 0.16666667
    %v2131 = vmul.f32 %v1619, 0.16666667
    %v2132 = vmul.f32 %v1620, 0.16666667
    %v2133 = vmul.f32 %v1621, 0.16666667
    %v2134 = vmul.f32 %v1622, 0.16666667
    %v2135 = vmul.f32 %v1623, 0.16666667
    %v2136 = vmul.f32 %v1624, 0.16666667
    %v2137 = vmul.f32 %v1625, 0.16666667
    %v2138 = vmul.f32 %v1626, 0.16666667
    %v2139 = vmul.f32 %v1627, 0.16666667
    %v2140 = vmul.f32 %v1628, 0.16666667
    %v2141 = vmul.f32 %v1629, 0.16666667
    %v2142 = vmul.f32 %v1630, 0.16666667
    %v2143 = vmul.f32 %v1631, 0.16666667
    %v2144 = vmul.f32 %v1632, 0.16666667
    %v2145 = vmul.f32 %v1633, 0.16666667
    %v2146 = vmul.f32 %v1634, 0.16666667
    %v2147 = vmul.f32 %v1635, 0.16666667
    %v2148 = vmul.f32 %v1636, 0.16666667
    %v2149 = vmul.f32 %v1637, 0.16666667
    %v2150 = vmul.f32 %v1638, 0.16666667
    %v2151 = vmul.f32 %v1639, 0.16666667
    %v2152 = vmul.f32 %v1640, 0.16666667
    %v2153 = vmul.f32 %v1641, 0.16666667
    %v2154 = vmul.f32 %v1642, 0.16666667
    %v2155 = vmul.f32 %v1643, 0.16666667
    %v2156 = vmul.f32 %v1644, 0.16666667
    %v2157 = vmul.f32 %v1645, 0.16666667
    %v2158 = vmul.f32 %v1646, 0.16666667
    %v2159 = vmul.f32 %v1647, 0.16666667
    %v2160 = vmul.f32 %v1648, 0.16666667
    %v2161 = vmul.f32 %v1649, 0.16666667
    %v2162 = vmul.f32 %v1650, 0.16666667
    %v2163 = vmul.f32 %v1651, 0.16666667
    %v2164 = vmul.f32 %v1652, 0.16666667
    %v2165 = vmul.f32 %v1653, 0.16666667
    %v2166 = vmul.f32 %v1654, 0.16666667
    %v2167 = vmul.f32 %v1655, 0.16666667
    %v2168 = vmul.f32 %v1656, 0.16666667
    %v2169 = vmul.f32 %v1657, 0.16666667
    %v2170 = vmul.f32 %v1658, 0.16666667
    %v2171 = vmul.f32 %v1659, 0.16666667
    %v2172 = vmul.f32 %v1660, 0.16666667
    %v2173 = vmul.f32 %v1661, 0.16666667
    %v2174 = vmul.f32 %v1662, 0.16666667
    %v2175 = vmul.f32 %v1663, 0.16666667
    %v2176 = vmul.f32 %v1664, 0.16666667
    %v2177 = vmul.f32 %v1665, 0.16666667
    %v2178 = vmul.f32 %v1666, 0.16666667
    %v2179 = vmul.f32 %v1667, 0.16666667
    %v2180 = vmul.f32 %v1668, 0.16666667
    %v2181 = vmul.f32 %v1669, 0.16666667
    %v2182 = vmul.f32 %v1670, 0.16666667
    %v2183 = vmul.f32 %v1671, 0.16666667
    %v2184 = vmul.f32 %v1672, 0.16666667
    %v2185 = vmul.f32 %v1673, 0.16666667
    %v2186 = vmul.f32 %v1674, 0.16666667
    %v2187 = vmul.f32 %v1675, 0.16666667
    %v2188 = vmul.f32 %v1676, 0.16666667
    %v2189 = vmul.f32 %v1677, 0.16666667
    %v2190 = vmul.f32 %v1678, 0.16666667
    %v2191 = vmul.f32 %v1679, 0.16666667
    %v2192 = vmul.f32 %v1680, 0.16666667
    %v2193 = vmul.f32 %v1681, 0.16666667
    %v2194 = vmul.f32 %v1682, 0.16666667
    %v2195 = vmul.f32 %v1683, 0.16666667
    %v2196 = vmul.f32 %v1684, 0.16666667
    %v2197 = vmul.f32 %v1685, 0.16666667
    %v2198 = vmul.f32 %v1686, 0.16666667
    %v2199 = vmul.f32 %v1687, 0.16666667
    %v2200 = vmul.f32 %v1688, 0.16666667
    %v2201 = vmul.f32 %v1689, 0.16666667
    %v2202 = vmul.f32 %v1690, 0.16666667
    %v2203 = vmul.f32 %v1691, 0.16666667
    %v2204 = vmul.f32 %v1692, 0.16666667
    %v2205 = vmul.f32 %v1693, 0.16666667
    %v2206 = vmul.f32 %v1694, 0.16666667
    %v2207 = vmul.f32 %v1695, 0.16666667
    %v2208 = vmul.f32 %v1696, 0.16666667
    %v2209 = vmul.f32 %v1697, 0.16666667
    %v2210 = vmul.f32 %v1698, 0.16666667
    %v2211 = vmul.f32 %v1699, 0.16666667
    %v2212 = vmul.f32 %v1700, 0.16666667
    %v2213 = vmul.f32 %v1701, 0.16666667
    %v2214 = vmul.f32 %v1702, 0.16666667
    %v2215 = vmul.f32 %v1703, 0.16666667
    %v2216 = vmul.f32 %v1704, 0.16666667
    %v2217 = vmul.f32 %v1705, 0.16666667
    %v2218 = vmul.f32 %v1706, 0.16666667
    %v2219 = vmul.f32 %v1707, 0.16666667
    %v2220 = vmul.f32 %v1708, 0.16666667
    %v2221 = vmul.f32 %v1709, 0.16666667
    %v2222 = vmul.f32 %v1710, 0.16666667
    %v2223 = vmul.f32 %v1711, 0.16666667
    %v2224 = vmul.f32 %v1712, 0.16666667
    %v2225 = vmul.f32 %v1713, 0.16666667
    %v2226 = vmul.f32 %v1714, 0.16666667
    %v2227 = vmul.f32 %v1715, 0.16666667
    %v2228 = vmul.f32 %v1716, 0.16666667
    %v2229 = vmul.f32 %v1717, 0.16666667
    %v2230 = vmul.f32 %v1718, 0.16666667
    %v2231 = vmul.f32 %v1719, 0.16666667
    %v2232 = vmul.f32 %v1720, 0.16666667
    %v2233 = vmul.f32 %v1721, 0.16666667
    %v2234 = vmul.f32 %v1722, 0.16666667
    %v2235 = vmul.f32 %v1723, 0.16666667
    %v2236 = vmul.f32 %v1724, 0.16666667
    %v2237 = vmul.f32 %v1725, 0.16666667
    %v2238 = vmul.f32 %v1726, 0.16666667
    %v2239 = vmul.f32 %v1727, 0.16666667
    %v2240 = vmul.f32 %v1728, 0.16666667
    %v2241 = vmul.f32 %v1729, 0.16666667
    %v2242 = vmul.f32 %v1730, 0.16666667
    %v2243 = vmul.f32 %v1731, 0.16666667
    %v2244 = vmul.f32 %v1732, 0.16666667
    %v2245 = vmul.f32 %v1733, 0.16666667
    %v2246 = vmul.f32 %v1734, 0.16666667
    %v2247 = vmul.f32 %v1735, 0.16666667
    %v2248 = vmul.f32 %v1736, 0.16666667
    %v2249 = vmul.f32 %v1737, 0.16666667
    %v2250 = vmul.f32 %v1738, 0.16666667
    %v2251 = vmul.f32 %v1739, 0.16666667
    %v2252 = vmul.f32 %v1740, 0.16666667
    %v2253 = vmul.f32 %v1741, 0.16666667
    %v2254 = vmul.f32 %v1742, 0.16666667
    %v2255 = vmul.f32 %v1743, 0.16666667
    %v2256 = vmul.f32 %v1744, 0.16666667
    %v2257 = vmul.f32 %v1745, 0.16666667
    %v2258 = vmul.f32 %v1746, 0.16666667
    %v2259 = vmul.f32 %v1747, 0.16666667
    %v2260 = vmul.f32 %v1748, 0.16666667
    %v2261 = vmul.f32 %v1749, 0.16666667
    %v2262 = vmul.f32 %v1750, 0.16666667
    %v2263 = vmul.f32 %v1751, 0.16666667
    %v2264 = vmul.f32 %v1752, 0.16666667
    %v2265 = vmul.f32 %v1753, 0.16666667
    %v2266 = vmul.f32 %v1754, 0.16666667
    %v2267 = vmul.f32 %v1755, 0.16666667
    %v2268 = vmul.f32 %v1756, 0.16666667
    %v2269 = vmul.f32 %v1757, 0.16666667
    %v2270 = vmul.f32 %v1758, 0.16666667
    %v2271 = vmul.f32 %v1759, 0.16666667
    %v2272 = vmul.f32 %v1760, 0.16666667
    %v2273 = vmul.f32 %v1761, 0.16666667
    %v2274 = vmul.f32 %v1762, 0.16666667
    %v2275 = vmul.f32 %v1763, 0.16666667
    %v2276 = vmul.f32 %v1764, 0.16666667
    %v2277 = vmul.f32 %v1765, 0.16666667
    %v2278 = vmul.f32 %v1766, 0.16666667
    %v2279 = vmul.f32 %v1767, 0.16666667
    %v2280 = vmul.f32 %v1768, 0.16666667
    %v2281 = vmul.f32 %v1769, 0.16666667
    %v2282 = vmul.f32 %v1770, 0.16666667
    %v2283 = vmul.f32 %v1771, 0.16666667
    %v2284 = vmul.f32 %v1772, 0.16666667
    %v2285 = vmul.f32 %v1773, 0.16666667
    %v2286 = vmul.f32 %v1774, 0.16666667
    %v2287 = vmul.f32 %v1775, 0.16666667
    %v2288 = vmul.f32 %v1776, 0.16666667
    %v2289 = vmul.f32 %v1777, 0.16666667
    %v2290 = vmul.f32 %v1778, 0.16666667
    %v2291 = vmul.f32 %v1779, 0.16666667
    %v2292 = vmul.f32 %v1780, 0.16666667
    %v2293 = vmul.f32 %v1781, 0.16666667
    %v2294 = vmul.f32 %v1782, 0.16666667
    %v2295 = vmul.f32 %v1783, 0.16666667
    %v2296 = vmul.f32 %v1784, 0.16666667
    %v2297 = vmul.f32 %v1785, 0.16666667
    %v2298 = vmul.f32 %v1786, 0.16666667
    %v2299 = vmul.f32 %v1787, 0.16666667
    %v2300 = vmul.f32 %v1788, 0.16666667
    %v2301 = vmul.f32 %v1789, 0.16666667
    %v2302 = vmul.f32 %v1790, 0.16666667
    %v2303 = vmul.f32 %v1791, 0.16666667
    %v2304 = vmul.f32 %v1792, 0.16666667
    %v2305 = vmul.f32 %v1793, 0.16666667
    %v2306 = vmul.f32 %v1794, 0.16666667
    %v2307 = vmul.f32 %v1795, 0.16666667
    %v2308 = vmul.f32 %v1796, 0.16666667
    %v2309 = vmul.f32 %v1797, 0.16666667
    %v2310 = vmul.f32 %v1798, 0.16666667
    %v2311 = vmul.f32 %v1799, 0.16666667
    %v2312 = vmul.f32 %v1800, 0.16666667
    %v2313 = vmul.f32 %v1801, 0.16666667
    %v2314 = vmul.f32 %v1802, 0.16666667
    %v2315 = vmul.f32 %v1803, 0.16666667
    %v2316 = vmul.f32 %v1804, 0.16666667
    %v2317 = vmul.f32 %v1805, 0.16666667
    %v2318 = vmul.f32 %v1806, 0.16666667
    %v2319 = vmul.f32 %v1807, 0.16666667
    %v2320 = vmul.f32 %v1808, 0.16666667
    %v2321 = vmul.f32 %v1809, 0.16666667
    %v2322 = vmul.f32 %v1810, 0.16666667
    %v2323 = vmul.f32 %v1811, 0.16666667
    %v2324 = vmul.f32 %v1812, 0.16666667
    %v2325 = vmul.f32 %v1813, 0.16666667
    %v2326 = vmul.f32 %v1814, 0.16666667
    %v2327 = vmul.f32 %v1815, 0.16666667
    %v2328 = vmul.f32 %v1816, 0.16666667
    %v2329 = vmul.f32 %v1817, 0.16666667
    %v2330 = vmul.f32 %v1818, 0.16666667
    %v2331 = vmul.f32 %v1819, 0.16666667
    %v2332 = vmul.f32 %v1820, 0.16666667
    %v2333 = vmul.f32 %v1821, 0.16666667
    %v2334 = vmul.f32 %v1822, 0.16666667
    %v2335 = vmul.f32 %v1823, 0.16666667
    %v2336 = vmul.f32 %v1824, 0.16666667
    %v2337 = vmul.f32 %v1825, 0.16666667
    %v2338 = vmul.f32 %v1826, 0.16666667
    %v2339 = vmul.f32 %v1827, 0.16666667
    %v2340 = vmul.f32 %v1828, 0.16666667
    %v2341 = vmul.f32 %v1829, 0.16666667
    %v2342 = vmul.f32 %v1830, 0.16666667
    %v2343 = vmul.f32 %v1831, 0.16666667
    %v2344 = vmul.f32 %v1832, 0.16666667
    %v2345 = vmul.f32 %v1833, 0.16666667
    %v2346 = vmul.f32 %v1834, 0.16666667
    %v2347 = vmul.f32 %v1835, 0.16666667
    %v2348 = vmul.f32 %v1836, 0.16666667
    %v2349 = vmul.f32 %v1837, 0.16666667
    %v2350 = vmul.f32 %v1838, 0.16666667
    %v2351 = vmul.f32 %v1839, 0.16666667
    %v2352 = vmul.f32 %v1840, 0.16666667
    %v2353 = vmul.f32 %v1841, 0.16666667
    %v2354 = vmul.f32 %v1842, 0.16666667
    %v2355 = vmul.f32 %v1843, 0.16666667
    %v2356 = vmul.f32 %v1844, 0.16666667
    %v2357 = vmul.f32 %v1845, 0.16666667
    %v2358 = vmul.f32 %v1846, 0.16666667
    %v2359 = vmul.f32 %v1847, 0.16666667
    %v2360 = vmul.f32 %v1848, 0.16666667
    %v2361 = vmul.f32 %v1849, 0.16666667
    %v2362 = vmul.f32 %v1850, 0.16666667
    %v2363 = vmul.f32 %v1851, 0.16666667
    %v2364 = vmul.f32 %v1852, 0.16666667
    %v2365 = vmul.f32 %v1853, 0.16666667
    %v2366 = vmul.f32 %v1854, 0.16666667
    %v2367 = vmul.f32 %v1855, 0.16666667
    %v2368 = vmul.f32 %v1856, 0.16666667
    %v2369 = vmul.f32 %v1857, 0.16666667
    %v2370 = vmul.f32 %v1858, 0.16666667
    %v2371 = vmul.f32 %v1859, 0.16666667
    %v2372 = vmul.f32 %v1860, 0.16666667
    %v2373 = vmul.f32 %v1861, 0.16666667
    %v2374 = vmul.f32 %v1862, 0.16666667
    %v2375 = vmul.f32 %v1863, 0.16666667
    %v2376 = vmul.f32 %v1864, 0.16666667
    %v2377 = vmul.f32 %v1865, 0.16666667
    %v2378 = vmul.f32 %v1866, 0.16666667
    %v2379 = vmul.f32 %v1867, 0.16666667
    %v2380 = vmul.f32 %v1868, 0.16666667
    %v2381 = vmul.f32 %v1869, 0.16666667
    %v2382 = vmul.f32 %v1870, 0.16666667
    %v2383 = vmul.f32 %v1871, 0.16666667
    %v2384 = vmul.f32 %v1872, 0.16666667
    %v2385 = vmul.f32 %v1873, 0.16666667
    %v2386 = vmul.f32 %v1874, 0.16666667
    %v2387 = vmul.f32 %v1875, 0.16666667
    %v2388 = vmul.f32 %v1876, 0.16666667
    %v2389 = vmul.f32 %v1877, 0.16666667
    %v2390 = vmul.f32 %v1878, 0.16666667
    %v2391 = vmul.f32 %v1879, 0.16666667
    %v2392 = vmul.f32 %v1880, 0.16666667
    %v2393 = vmul.f32 %v1881, 0.16666667
    %v2394 = vmul.f32 %v1882, 0.16666667
    %v2395 = vmul.f32 %v1883, 0.16666667
    %v2396 = vmul.f32 %v1884, 0.16666667
    %v2397 = vmul.f32 %v1885, 0.16666667
    %v2398 = vmul.f32 %v1886, 0.16666667
    %v2399 = vmul.f32 %v1887, 0.16666667
    %v2400 = vmul.f32 %v1888, 0.16666667
    %v2401 = vmul.f32 %v1889, 0.16666667
    %v2402 = vmul.f32 %v1890, 0.16666667
    %v2403 = vmul.f32 %v1891, 0.16666667
    %v2404 = vmul.f32 %v1892, 0.16666667
    %v2405 = vmul.f32 %v1893, 0.16666667
    %v2406 = vmul.f32 %v1894, 0.16666667
    %v2407 = vmul.f32 %v1895, 0.16666667
    %v2408 = vmul.f32 %v1896, 0.16666667
    %v2409 = vmul.f32 %v1897, 0.16666667
    %v2410 = vmul.f32 %v1898, 0.16666667
    %v2411 = vmul.f32 %v1899, 0.16666667
    %v2412 = vmul.f32 %v1900, 0.16666667
    %v2413 = vmul.f32 %v1901, 0.16666667
    %v2414 = vmul.f32 %v1902, 0.16666667
    %v2415 = vmul.f32 %v1903, 0.16666667
    %v2416 = vmul.f32 %v1904, 0.16666667
    %v2417 = vmul.f32 %v1905, 0.16666667
    %v2418 = vmul.f32 %v1906, 0.16666667
    %v2419 = vmul.f32 %v1907, 0.16666667
    %v2420 = vmul.f32 %v1908, 0.16666667
    %v2421 = vmul.f32 %v1909, 0.16666667
    %v2422 = vmul.f32 %v1910, 0.16666667
    %v2423 = vmul.f32 %v1911, 0.16666667
    %v2424 = vmul.f32 %v1912, 0.16666667
    %v2425 = vmul.f32 %v1913, 0.16666667
    %v2426 = vmul.f32 %v1914, 0.16666667
    %v2427 = vmul.f32 %v1915, 0.16666667
    %v2428 = vmul.f32 %v1916, 0.16666667
    %v2429 = vmul.f32 %v1917, 0.16666667
    %v2430 = vmul.f32 %v1918, 0.16666667
    %v2431 = vmul.f32 %v1919, 0.16666667
    %v2432 = vmul.f32 %v1920, 0.16666667
    %v2433 = vmul.f32 %v1921, 0.16666667
    %v2434 = vmul.f32 %v1922, 0.16666667
    %v2435 = vmul.f32 %v1923, 0.16666667
    %v2436 = vmul.f32 %v1924, 0.16666667
    %v2437 = vmul.f32 %v1925, 0.16666667
    %v2438 = vmul.f32 %v1926, 0.16666667
    %v2439 = vmul.f32 %v1927, 0.16666667
    %v2440 = vmul.f32 %v1928, 0.16666667
    %v2441 = vmul.f32 %v1929, 0.16666667
    %v2442 = vmul.f32 %v1930, 0.16666667
    %v2443 = vmul.f32 %v1931, 0.16666667
    %v2444 = vmul.f32 %v1932, 0.16666667
    %v2445 = vmul.f32 %v1933, 0.16666667
    %v2446 = vmul.f32 %v1934, 0.16666667
    %v2447 = vmul.f32 %v1935, 0.16666667
    %v2448 = vmul.f32 %v1936, 0.16666667
    %v2449 = vmul.f32 %v1937, 0.16666667
    %v2450 = vmul.f32 %v1938, 0.16666667
    %v2451 = vmul.f32 %v1939, 0.16666667
    %v2452 = vmul.f32 %v1940, 0.16666667
    %v2453 = vmul.f32 %v1941, 0.16666667
    %v2454 = vmul.f32 %v1942, 0.16666667
    %v2455 = vmul.f32 %v1943, 0.16666667
    %v2456 = vmul.f32 %v1944, 0.16666667
    %v2457 = vmul.f32 %v1945, 0.16666667
    %v2458 = vmul.f32 %v1946, 0.16666667
    %v2459 = vmul.f32 %v1947, 0.16666667
    %v2460 = vmul.f32 %v1948, 0.16666667
    %v2461 = vmul.f32 %v1949, 0.16666667
    %v2462 = vmul.f32 %v1950, 0.16666667
    %v2463 = vmul.f32 %v1951, 0.16666667
    %v2464 = vmul.f32 %v1952, 0.16666667
    %v2465 = vmul.f32 %v1953, 0.16666667
    %v2466 = vmul.f32 %v1954, 0.16666667
    %v2467 = vmul.f32 %v1955, 0.16666667
    %v2468 = vmul.f32 %v1956, 0.16666667
    %v2469 = vmul.f32 %v1957, 0.16666667
    %v2470 = vmul.f32 %v1958, 0.16666667
    %v2471 = vmul.f32 %v1959, 0.16666667
    %v2472 = vmul.f32 %v1960, 0.16666667
    %v2473 = vmul.f32 %v1961, 0.16666667
    %v2474 = vmul.f32 %v1962, 0.16666667
    %v2475 = vmul.f32 %v1963, 0.16666667
    %v2476 = vmul.f32 %v1964, 0.16666667
    %v2477 = vmul.f32 %v1965, 0.16666667
    %v2478 = vmul.f32 %v1966, 0.16666667
    %v2479 = vmul.f32 %v1967, 0.16666667
    %v2480 = vmul.f32 %v1968, 0.16666667
    %v2481 = vmul.f32 %v1969, 0.16666667
    %v2482 = vmul.f32 %v1970, 0.16666667
    %v2483 = vmul.f32 %v1971, 0.16666667
    %v2484 = vmul.f32 %v1972, 0.16666667
    %v2485 = vmul.f32 %v1973, 0.16666667
    %v2486 = vmul.f32 %v1974, 0.16666667
    %v2487 = vmul.f32 %v1975, 0.16666667
    %v2488 = vmul.f32 %v1976, 0.16666667
    %v2489 = vmul.f32 %v1977, 0.16666667
    %v2490 = vmul.f32 %v1978, 0.16666667
    %v2491 = vmul.f32 %v1979, 0.16666667
    %v2492 = vmul.f32 %v1980, 0.16666667
    %v2493 = vmul.f32 %v1981, 0.16666667
    %v2494 = vmul.f32 %v1982, 0.16666667
    %v2495 = vmul.f32 %v1983, 0.16666667
    %v2496 = vmul.f32 %v1984, 0.16666667
    %v2497 = vmul.f32 %v1985, 0.16666667
    %v2498 = vmul.f32 %v1986, 0.16666667
    %v2499 = vmul.f32 %v1987, 0.16666667
    %v2500 = vmul.f32 %v1988, 0.16666667
    %v2501 = vmul.f32 %v1989, 0.16666667
    %v2502 = vmul.f32 %v1990, 0.16666667
    %v2503 = vmul.f32 %v1991, 0.16666667
    %v2504 = vmul.f32 %v1992, 0.16666667
    %v2505 = vmul.f32 %v1993, 0.16666667
    %v2506 = vmul.f32 %v1994, 0.16666667
    %v2507 = vmul.f32 %v1995, 0.16666667
    %v2508 = vmul.f32 %v1996, 0.16666667
    %v2509 = vmul.f32 %v1997, 0.16666667
    %v2510 = vmul.f32 %v1998, 0.16666667
    %v2511 = vmul.f32 %v1999, 0.16666667
    %v2512 = vmul.f32 %v2000, 0.16666667
    %v2513 = vmul.f32 %v2001, 0.16666667
    %v2514 = vmul.f32 %v2002, 0.16666667
    %v2515 = vmul.f32 %v2003, 0.16666667
    %v2516 = vmul.f32 %v2004, 0.16666667
    %v2517 = vmul.f32 %v2005, 0.16666667
    %v2518 = vmul.f32 %v2006, 0.16666667
    %v2519 = vmul.f32 %v2007, 0.16666667
    %v2520 = vmul.f32 %v2008, 0.16666667
    %v2521 = vmul.f32 %v2009, 0.16666667
    %v2522 = vmul.f32 %v2010, 0.16666667
    %v2523 = vmul.f32 %v2011, 0.16666667
    %v2524 = vmul.f32 %v2012, 0.16666667
    %v2525 = vmul.f32 %v2013, 0.16666667
    %v2526 = vmul.f32 %v2014, 0.16666667
    %v2527 = vmul.f32 %v2015, 0.16666667
    %v2528 = vmul.f32 %v2016, 0.16666667
    %v2529 = vmul.f32 %v2017, 0.16666667
    %v2530 = vmul.f32 %v2018, 0.16666667
    %v2531 = vmul.f32 %v2019, 0.16666667
    %v2532 = vmul.f32 %v2020, 0.16666667
    %v2533 = vmul.f32 %v2021, 0.16666667
    %v2534 = vmul.f32 %v2022, 0.16666667
    %v2535 = vmul.f32 %v2023, 0.16666667
    %v2536 = vmul.f32 %v2024, 0.16666667
    %v2537 = vmul.f32 %v2025, 0.16666667
    %v2538 = vmul.f32 %v2026, 0.16666667
    %v2539 = vmul.f32 %v2027, 0.16666667
    %v2540 = vmul.f32 %v2028, 0.16666667
    %v2541 = vmul.f32 %v2029, 0.16666667
    %v2542 = vmul.f32 %v2030, 0.16666667
    %v2543 = vmul.f32 %v2031, 0.16666667
    %v2544 = vmul.f32 %v2032, 0.16666667
    %v2545 = vmul.f32 %v2033, 0.16666667
    %v2546 = vmul.f32 %v2034, 0.16666667
    %v2547 = vmul.f32 %v2035, 0.16666667
    %v2548 = vmul.f32 %v2036, 0.16666667
    %v2549 = vmul.f32 %v2037, 0.16666667
    %v2550 = vmul.f32 %v2038, 0.16666667
    %v2551 = vmul.f32 %v2039, 0.16666667
    %v2552 = vmul.f32 %v2040, 0.16666667
    %v2553 = vmul.f32 %v2041, 0.16666667
    %v2554 = vmul.f32 %v2042, 0.16666667
    %v2555 = vmul.f32 %v2043, 0.16666667
    %v2556 = vmul.f32 %v2044, 0.16666667
    %v2557 = vmul.f32 %v2045, 0.16666667
    %v2558 = vmul.f32 %v2046, 0.16666667
    %v2559 = vmul.f32 %v2047, 0.16666667
    %v2560 = vmul.f32 %v2048, 0.16666667
    %v2561 = vmul.f32 %v2049, 0.16666667
    %v2562 = vmul.f32 %v2050, 0.16666667
    %v2563 = vmul.f32 %v2051, 0.16666667
    %v2564 = vmul.f32 %v2052, 0.16666667
    %v2565 = vmul.f32 %v2053, 0.16666667
    %v2566 = vmul.f32 %v2054, 0.16666667
    %v2567 = vmul.f32 %v2055, 0.16666667
    %v2568 = vmul.f32 %v2056, 0.16666667
    %v2569 = vmul.f32 %v2057, 0.16666667
    %v2570 = vmul.f32 %v2058, 0.16666667
    %v2571 = vmul.f32 %v2059, 0.16666667
    %v2572 = vmul.f32 %v2060, 0.16666667
    %v2573 = vmul.f32 %v2061, 0.16666667
    %v2574 = vmul.f32 %v2062, 0.16666667
    %v2575 = vmul.f32 %v2063, 0.16666667
    %v2576 = vmul.f32 %v2064, 0.16666667
    %v2577 = vmul.f32 %v2065, 0.16666667
    %v2578 = vmul.f32 %v2066, 0.16666667
    %v2579 = vmul.f32 %v2067, 0.16666667
    %v2580 = vmul.f32 %v2068, 0.16666667
    %v2581 = vmul.f32 %v2069, 0.16666667
    %v2582 = vmul.f32 %v2070, 0.16666667
    %v2583 = vmul.f32 %v23, %v2071
    %v2584 = vmul.f32 %v24, %v2072
    %v2585 = vmul.f32 %v25, %v2073
    %v2586 = vmul.f32 %v26, %v2074
    %v2587 = vmul.f32 %v27, %v2075
    %v2588 = vmul.f32 %v28, %v2076
    %v2589 = vmul.f32 %v29, %v2077
    %v2590 = vmul.f32 %v30, %v2078
    %v2591 = vmul.f32 %v31, %v2079
    %v2592 = vmul.f32 %v32, %v2080
    %v2593 = vmul.f32 %v33, %v2081
    %v2594 = vmul.f32 %v34, %v2082
    %v2595 = vmul.f32 %v35, %v2083
    %v2596 = vmul.f32 %v36, %v2084
    %v2597 = vmul.f32 %v37, %v2085
    %v2598 = vmul.f32 %v38, %v2086
    %v2599 = vmul.f32 %v39, %v2087
    %v2600 = vmul.f32 %v40, %v2088
    %v2601 = vmul.f32 %v41, %v2089
    %v2602 = vmul.f32 %v42, %v2090
    %v2603 = vmul.f32 %v43, %v2091
    %v2604 = vmul.f32 %v44, %v2092
    %v2605 = vmul.f32 %v45, %v2093
    %v2606 = vmul.f32 %v46, %v2094
    %v2607 = vmul.f32 %v47, %v2095
    %v2608 = vmul.f32 %v48, %v2096
    %v2609 = vmul.f32 %v49, %v2097
    %v2610 = vmul.f32 %v50, %v2098
    %v2611 = vmul.f32 %v51, %v2099
    %v2612 = vmul.f32 %v52, %v2100
    %v2613 = vmul.f32 %v53, %v2101
    %v2614 = vmul.f32 %v54, %v2102
    %v2615 = vmul.f32 %v55, %v2103
    %v2616 = vmul.f32 %v56, %v2104
    %v2617 = vmul.f32 %v57, %v2105
    %v2618 = vmul.f32 %v58, %v2106
    %v2619 = vmul.f32 %v59, %v2107
    %v2620 = vmul.f32 %v60, %v2108
    %v2621 = vmul.f32 %v61, %v2109
    %v2622 = vmul.f32 %v62, %v2110
    %v2623 = vmul.f32 %v63, %v2111
    %v2624 = vmul.f32 %v64, %v2112
    %v2625 = vmul.f32 %v65, %v2113
    %v2626 = vmul.f32 %v66, %v2114
    %v2627 = vmul.f32 %v67, %v2115
    %v2628 = vmul.f32 %v68, %v2116
    %v2629 = vmul.f32 %v69, %v2117
    %v2630 = vmul.f32 %v70, %v2118
    %v2631 = vmul.f32 %v71, %v2119
    %v2632 = vmul.f32 %v72, %v2120
    %v2633 = vmul.f32 %v73, %v2121
    %v2634 = vmul.f32 %v74, %v2122
    %v2635 = vmul.f32 %v75, %v2123
    %v2636 = vmul.f32 %v76, %v2124
    %v2637 = vmul.f32 %v77, %v2125
    %v2638 = vmul.f32 %v78, %v2126
    %v2639 = vmul.f32 %v79, %v2127
    %v2640 = vmul.f32 %v80, %v2128
    %v2641 = vmul.f32 %v81, %v2129
    %v2642 = vmul.f32 %v82, %v2130
    %v2643 = vmul.f32 %v83, %v2131
    %v2644 = vmul.f32 %v84, %v2132
    %v2645 = vmul.f32 %v85, %v2133
    %v2646 = vmul.f32 %v86, %v2134
    %v2647 = vmul.f32 %v87, %v2135
    %v2648 = vmul.f32 %v88, %v2136
    %v2649 = vmul.f32 %v89, %v2137
    %v2650 = vmul.f32 %v90, %v2138
    %v2651 = vmul.f32 %v91, %v2139
    %v2652 = vmul.f32 %v92, %v2140
    %v2653 = vmul.f32 %v93, %v2141
    %v2654 = vmul.f32 %v94, %v2142
    %v2655 = vmul.f32 %v95, %v2143
    %v2656 = vmul.f32 %v96, %v2144
    %v2657 = vmul.f32 %v97, %v2145
    %v2658 = vmul.f32 %v98, %v2146
    %v2659 = vmul.f32 %v99, %v2147
    %v2660 = vmul.f32 %v100, %v2148
    %v2661 = vmul.f32 %v101, %v2149
    %v2662 = vmul.f32 %v102, %v2150
    %v2663 = vmul.f32 %v103, %v2151
    %v2664 = vmul.f32 %v104, %v2152
    %v2665 = vmul.f32 %v105, %v2153
    %v2666 = vmul.f32 %v106, %v2154
    %v2667 = vmul.f32 %v107, %v2155
    %v2668 = vmul.f32 %v108, %v2156
    %v2669 = vmul.f32 %v109, %v2157
    %v2670 = vmul.f32 %v110, %v2158
    %v2671 = vmul.f32 %v111, %v2159
    %v2672 = vmul.f32 %v112, %v2160
    %v2673 = vmul.f32 %v113, %v2161
    %v2674 = vmul.f32 %v114, %v2162
    %v2675 = vmul.f32 %v115, %v2163
    %v2676 = vmul.f32 %v116, %v2164
    %v2677 = vmul.f32 %v117, %v2165
    %v2678 = vmul.f32 %v118, %v2166
    %v2679 = vmul.f32 %v119, %v2167
    %v2680 = vmul.f32 %v120, %v2168
    %v2681 = vmul.f32 %v121, %v2169
    %v2682 = vmul.f32 %v122, %v2170
    %v2683 = vmul.f32 %v123, %v2171
    %v2684 = vmul.f32 %v124, %v2172
    %v2685 = vmul.f32 %v125, %v2173
    %v2686 = vmul.f32 %v126, %v2174
    %v2687 = vmul.f32 %v127, %v2175
    %v2688 = vmul.f32 %v128, %v2176
    %v2689 = vmul.f32 %v129, %v2177
    %v2690 = vmul.f32 %v130, %v2178
    %v2691 = vmul.f32 %v131, %v2179
    %v2692 = vmul.f32 %v132, %v2180
    %v2693 = vmul.f32 %v133, %v2181
    %v2694 = vmul.f32 %v134, %v2182
    %v2695 = vmul.f32 %v135, %v2183
    %v2696 = vmul.f32 %v136, %v2184
    %v2697 = vmul.f32 %v137, %v2185
    %v2698 = vmul.f32 %v138, %v2186
    %v2699 = vmul.f32 %v139, %v2187
    %v2700 = vmul.f32 %v140, %v2188
    %v2701 = vmul.f32 %v141, %v2189
    %v2702 = vmul.f32 %v142, %v2190
    %v2703 = vmul.f32 %v143, %v2191
    %v2704 = vmul.f32 %v144, %v2192
    %v2705 = vmul.f32 %v145, %v2193
    %v2706 = vmul.f32 %v146, %v2194
    %v2707 = vmul.f32 %v147, %v2195
    %v2708 = vmul.f32 %v148, %v2196
    %v2709 = vmul.f32 %v149, %v2197
    %v2710 = vmul.f32 %v150, %v2198
    %v2711 = vmul.f32 %v151, %v2199
    %v2712 = vmul.f32 %v152, %v2200
    %v2713 = vmul.f32 %v153, %v2201
    %v2714 = vmul.f32 %v154, %v2202
    %v2715 = vmul.f32 %v155, %v2203
    %v2716 = vmul.f32 %v156, %v2204
    %v2717 = vmul.f32 %v157, %v2205
    %v2718 = vmul.f32 %v158, %v2206
    %v2719 = vmul.f32 %v159, %v2207
    %v2720 = vmul.f32 %v160, %v2208
    %v2721 = vmul.f32 %v161, %v2209
    %v2722 = vmul.f32 %v162, %v2210
    %v2723 = vmul.f32 %v163, %v2211
    %v2724 = vmul.f32 %v164, %v2212
    %v2725 = vmul.f32 %v165, %v2213
    %v2726 = vmul.f32 %v166, %v2214
    %v2727 = vmul.f32 %v167, %v2215
    %v2728 = vmul.f32 %v168, %v2216
    %v2729 = vmul.f32 %v169, %v2217
    %v2730 = vmul.f32 %v170, %v2218
    %v2731 = vmul.f32 %v171, %v2219
    %v2732 = vmul.f32 %v172, %v2220
    %v2733 = vmul.f32 %v173, %v2221
    %v2734 = vmul.f32 %v174, %v2222
    %v2735 = vmul.f32 %v175, %v2223
    %v2736 = vmul.f32 %v176, %v2224
    %v2737 = vmul.f32 %v177, %v2225
    %v2738 = vmul.f32 %v178, %v2226
    %v2739 = vmul.f32 %v179, %v2227
    %v2740 = vmul.f32 %v180, %v2228
    %v2741 = vmul.f32 %v181, %v2229
    %v2742 = vmul.f32 %v182, %v2230
    %v2743 = vmul.f32 %v183, %v2231
    %v2744 = vmul.f32 %v184, %v2232
    %v2745 = vmul.f32 %v185, %v2233
    %v2746 = vmul.f32 %v186, %v2234
    %v2747 = vmul.f32 %v187, %v2235
    %v2748 = vmul.f32 %v188, %v2236
    %v2749 = vmul.f32 %v189, %v2237
    %v2750 = vmul.f32 %v190, %v2238
    %v2751 = vmul.f32 %v191, %v2239
    %v2752 = vmul.f32 %v192, %v2240
    %v2753 = vmul.f32 %v193, %v2241
    %v2754 = vmul.f32 %v194, %v2242
    %v2755 = vmul.f32 %v195, %v2243
    %v2756 = vmul.f32 %v196, %v2244
    %v2757 = vmul.f32 %v197, %v2245
    %v2758 = vmul.f32 %v198, %v2246
    %v2759 = vmul.f32 %v199, %v2247
    %v2760 = vmul.f32 %v200, %v2248
    %v2761 = vmul.f32 %v201, %v2249
    %v2762 = vmul.f32 %v202, %v2250
    %v2763 = vmul.f32 %v203, %v2251
    %v2764 = vmul.f32 %v204, %v2252
    %v2765 = vmul.f32 %v205, %v2253
    %v2766 = vmul.f32 %v206, %v2254
    %v2767 = vmul.f32 %v207, %v2255
    %v2768 = vmul.f32 %v208, %v2256
    %v2769 = vmul.f32 %v209, %v2257
    %v2770 = vmul.f32 %v210, %v2258
    %v2771 = vmul.f32 %v211, %v2259
    %v2772 = vmul.f32 %v212, %v2260
    %v2773 = vmul.f32 %v213, %v2261
    %v2774 = vmul.f32 %v214, %v2262
    %v2775 = vmul.f32 %v215, %v2263
    %v2776 = vmul.f32 %v216, %v2264
    %v2777 = vmul.f32 %v217, %v2265
    %v2778 = vmul.f32 %v218, %v2266
    %v2779 = vmul.f32 %v219, %v2267
    %v2780 = vmul.f32 %v220, %v2268
    %v2781 = vmul.f32 %v221, %v2269
    %v2782 = vmul.f32 %v222, %v2270
    %v2783 = vmul.f32 %v223, %v2271
    %v2784 = vmul.f32 %v224, %v2272
    %v2785 = vmul.f32 %v225, %v2273
    %v2786 = vmul.f32 %v226, %v2274
    %v2787 = vmul.f32 %v227, %v2275
    %v2788 = vmul.f32 %v228, %v2276
    %v2789 = vmul.f32 %v229, %v2277
    %v2790 = vmul.f32 %v230, %v2278
    %v2791 = vmul.f32 %v231, %v2279
    %v2792 = vmul.f32 %v232, %v2280
    %v2793 = vmul.f32 %v233, %v2281
    %v2794 = vmul.f32 %v234, %v2282
    %v2795 = vmul.f32 %v235, %v2283
    %v2796 = vmul.f32 %v236, %v2284
    %v2797 = vmul.f32 %v237, %v2285
    %v2798 = vmul.f32 %v238, %v2286
    %v2799 = vmul.f32 %v239, %v2287
    %v2800 = vmul.f32 %v240, %v2288
    %v2801 = vmul.f32 %v241, %v2289
    %v2802 = vmul.f32 %v242, %v2290
    %v2803 = vmul.f32 %v243, %v2291
    %v2804 = vmul.f32 %v244, %v2292
    %v2805 = vmul.f32 %v245, %v2293
    %v2806 = vmul.f32 %v246, %v2294
    %v2807 = vmul.f32 %v247, %v2295
    %v2808 = vmul.f32 %v248, %v2296
    %v2809 = vmul.f32 %v249, %v2297
    %v2810 = vmul.f32 %v250, %v2298
    %v2811 = vmul.f32 %v251, %v2299
    %v2812 = vmul.f32 %v252, %v2300
    %v2813 = vmul.f32 %v253, %v2301
    %v2814 = vmul.f32 %v254, %v2302
    %v2815 = vmul.f32 %v255, %v2303
    %v2816 = vmul.f32 %v256, %v2304
    %v2817 = vmul.f32 %v257, %v2305
    %v2818 = vmul.f32 %v258, %v2306
    %v2819 = vmul.f32 %v259, %v2307
    %v2820 = vmul.f32 %v260, %v2308
    %v2821 = vmul.f32 %v261, %v2309
    %v2822 = vmul.f32 %v262, %v2310
    %v2823 = vmul.f32 %v263, %v2311
    %v2824 = vmul.f32 %v264, %v2312
    %v2825 = vmul.f32 %v265, %v2313
    %v2826 = vmul.f32 %v266, %v2314
    %v2827 = vmul.f32 %v267, %v2315
    %v2828 = vmul.f32 %v268, %v2316
    %v2829 = vmul.f32 %v269, %v2317
    %v2830 = vmul.f32 %v270, %v2318
    %v2831 = vmul.f32 %v271, %v2319
    %v2832 = vmul.f32 %v272, %v2320
    %v2833 = vmul.f32 %v273, %v2321
    %v2834 = vmul.f32 %v274, %v2322
    %v2835 = vmul.f32 %v275, %v2323
    %v2836 = vmul.f32 %v276, %v2324
    %v2837 = vmul.f32 %v277, %v2325
    %v2838 = vmul.f32 %v278, %v2326
    %v2839 = vmul.f32 %v279, %v2327
    %v2840 = vmul.f32 %v280, %v2328
    %v2841 = vmul.f32 %v281, %v2329
    %v2842 = vmul.f32 %v282, %v2330
    %v2843 = vmul.f32 %v283, %v2331
    %v2844 = vmul.f32 %v284, %v2332
    %v2845 = vmul.f32 %v285, %v2333
    %v2846 = vmul.f32 %v286, %v2334
    %v2847 = vmul.f32 %v287, %v2335
    %v2848 = vmul.f32 %v288, %v2336
    %v2849 = vmul.f32 %v289, %v2337
    %v2850 = vmul.f32 %v290, %v2338
    %v2851 = vmul.f32 %v291, %v2339
    %v2852 = vmul.f32 %v292, %v2340
    %v2853 = vmul.f32 %v293, %v2341
    %v2854 = vmul.f32 %v294, %v2342
    %v2855 = vmul.f32 %v295, %v2343
    %v2856 = vmul.f32 %v296, %v2344
    %v2857 = vmul.f32 %v297, %v2345
    %v2858 = vmul.f32 %v298, %v2346
    %v2859 = vmul.f32 %v299, %v2347
    %v2860 = vmul.f32 %v300, %v2348
    %v2861 = vmul.f32 %v301, %v2349
    %v2862 = vmul.f32 %v302, %v2350
    %v2863 = vmul.f32 %v303, %v2351
    %v2864 = vmul.f32 %v304, %v2352
    %v2865 = vmul.f32 %v305, %v2353
    %v2866 = vmul.f32 %v306, %v2354
    %v2867 = vmul.f32 %v307, %v2355
    %v2868 = vmul.f32 %v308, %v2356
    %v2869 = vmul.f32 %v309, %v2357
    %v2870 = vmul.f32 %v310, %v2358
    %v2871 = vmul.f32 %v311, %v2359
    %v2872 = vmul.f32 %v312, %v2360
    %v2873 = vmul.f32 %v313, %v2361
    %v2874 = vmul.f32 %v314, %v2362
    %v2875 = vmul.f32 %v315, %v2363
    %v2876 = vmul.f32 %v316, %v2364
    %v2877 = vmul.f32 %v317, %v2365
    %v2878 = vmul.f32 %v318, %v2366
    %v2879 = vmul.f32 %v319, %v2367
    %v2880 = vmul.f32 %v320, %v2368
    %v2881 = vmul.f32 %v321, %v2369
    %v2882 = vmul.f32 %v322, %v2370
    %v2883 = vmul.f32 %v323, %v2371
    %v2884 = vmul.f32 %v324, %v2372
    %v2885 = vmul.f32 %v325, %v2373
    %v2886 = vmul.f32 %v326, %v2374
    %v2887 = vmul.f32 %v327, %v2375
    %v2888 = vmul.f32 %v328, %v2376
    %v2889 = vmul.f32 %v329, %v2377
    %v2890 = vmul.f32 %v330, %v2378
    %v2891 = vmul.f32 %v331, %v2379
    %v2892 = vmul.f32 %v332, %v2380
    %v2893 = vmul.f32 %v333, %v2381
    %v2894 = vmul.f32 %v334, %v2382
    %v2895 = vmul.f32 %v335, %v2383
    %v2896 = vmul.f32 %v336, %v2384
    %v2897 = vmul.f32 %v337, %v2385
    %v2898 = vmul.f32 %v338, %v2386
    %v2899 = vmul.f32 %v339, %v2387
    %v2900 = vmul.f32 %v340, %v2388
    %v2901 = vmul.f32 %v341, %v2389
    %v2902 = vmul.f32 %v342, %v2390
    %v2903 = vmul.f32 %v343, %v2391
    %v2904 = vmul.f32 %v344, %v2392
    %v2905 = vmul.f32 %v345, %v2393
    %v2906 = vmul.f32 %v346, %v2394
    %v2907 = vmul.f32 %v347, %v2395
    %v2908 = vmul.f32 %v348, %v2396
    %v2909 = vmul.f32 %v349, %v2397
    %v2910 = vmul.f32 %v350, %v2398
    %v2911 = vmul.f32 %v351, %v2399
    %v2912 = vmul.f32 %v352, %v2400
    %v2913 = vmul.f32 %v353, %v2401
    %v2914 = vmul.f32 %v354, %v2402
    %v2915 = vmul.f32 %v355, %v2403
    %v2916 = vmul.f32 %v356, %v2404
    %v2917 = vmul.f32 %v357, %v2405
    %v2918 = vmul.f32 %v358, %v2406
    %v2919 = vmul.f32 %v359, %v2407
    %v2920 = vmul.f32 %v360, %v2408
    %v2921 = vmul.f32 %v361, %v2409
    %v2922 = vmul.f32 %v362, %v2410
    %v2923 = vmul.f32 %v363, %v2411
    %v2924 = vmul.f32 %v364, %v2412
    %v2925 = vmul.f32 %v365, %v2413
    %v2926 = vmul.f32 %v366, %v2414
    %v2927 = vmul.f32 %v367, %v2415
    %v2928 = vmul.f32 %v368, %v2416
    %v2929 = vmul.f32 %v369, %v2417
    %v2930 = vmul.f32 %v370, %v2418
    %v2931 = vmul.f32 %v371, %v2419
    %v2932 = vmul.f32 %v372, %v2420
    %v2933 = vmul.f32 %v373, %v2421
    %v2934 = vmul.f32 %v374, %v2422
    %v2935 = vmul.f32 %v375, %v2423
    %v2936 = vmul.f32 %v376, %v2424
    %v2937 = vmul.f32 %v377, %v2425
    %v2938 = vmul.f32 %v378, %v2426
    %v2939 = vmul.f32 %v379, %v2427
    %v2940 = vmul.f32 %v380, %v2428
    %v2941 = vmul.f32 %v381, %v2429
    %v2942 = vmul.f32 %v382, %v2430
    %v2943 = vmul.f32 %v383, %v2431
    %v2944 = vmul.f32 %v384, %v2432
    %v2945 = vmul.f32 %v385, %v2433
    %v2946 = vmul.f32 %v386, %v2434
    %v2947 = vmul.f32 %v387, %v2435
    %v2948 = vmul.f32 %v388, %v2436
    %v2949 = vmul.f32 %v389, %v2437
    %v2950 = vmul.f32 %v390, %v2438
    %v2951 = vmul.f32 %v391, %v2439
    %v2952 = vmul.f32 %v392, %v2440
    %v2953 = vmul.f32 %v393, %v2441
    %v2954 = vmul.f32 %v394, %v2442
    %v2955 = vmul.f32 %v395, %v2443
    %v2956 = vmul.f32 %v396, %v2444
    %v2957 = vmul.f32 %v397, %v2445
    %v2958 = vmul.f32 %v398, %v2446
    %v2959 = vmul.f32 %v399, %v2447
    %v2960 = vmul.f32 %v400, %v2448
    %v2961 = vmul.f32 %v401, %v2449
    %v2962 = vmul.f32 %v402, %v2450
    %v2963 = vmul.f32 %v403, %v2451
    %v2964 = vmul.f32 %v404, %v2452
    %v2965 = vmul.f32 %v405, %v2453
    %v2966 = vmul.f32 %v406, %v2454
    %v2967 = vmul.f32 %v407, %v2455
    %v2968 = vmul.f32 %v408, %v2456
    %v2969 = vmul.f32 %v409, %v2457
    %v2970 = vmul.f32 %v410, %v2458
    %v2971 = vmul.f32 %v411, %v2459
    %v2972 = vmul.f32 %v412, %v2460
    %v2973 = vmul.f32 %v413, %v2461
    %v2974 = vmul.f32 %v414, %v2462
    %v2975 = vmul.f32 %v415, %v2463
    %v2976 = vmul.f32 %v416, %v2464
    %v2977 = vmul.f32 %v417, %v2465
    %v2978 = vmul.f32 %v418, %v2466
    %v2979 = vmul.f32 %v419, %v2467
    %v2980 = vmul.f32 %v420, %v2468
    %v2981 = vmul.f32 %v421, %v2469
    %v2982 = vmul.f32 %v422, %v2470
    %v2983 = vmul.f32 %v423, %v2471
    %v2984 = vmul.f32 %v424, %v2472
    %v2985 = vmul.f32 %v425, %v2473
    %v2986 = vmul.f32 %v426, %v2474
    %v2987 = vmul.f32 %v427, %v2475
    %v2988 = vmul.f32 %v428, %v2476
    %v2989 = vmul.f32 %v429, %v2477
    %v2990 = vmul.f32 %v430, %v2478
    %v2991 = vmul.f32 %v431, %v2479
    %v2992 = vmul.f32 %v432, %v2480
    %v2993 = vmul.f32 %v433, %v2481
    %v2994 = vmul.f32 %v434, %v2482
    %v2995 = vmul.f32 %v435, %v2483
    %v2996 = vmul.f32 %v436, %v2484
    %v2997 = vmul.f32 %v437, %v2485
    %v2998 = vmul.f32 %v438, %v2486
    %v2999 = vmul.f32 %v439, %v2487
    %v3000 = vmul.f32 %v440, %v2488
    %v3001 = vmul.f32 %v441, %v2489
    %v3002 = vmul.f32 %v442, %v2490
    %v3003 = vmul.f32 %v443, %v2491
    %v3004 = vmul.f32 %v444, %v2492
    %v3005 = vmul.f32 %v445, %v2493
    %v3006 = vmul.f32 %v446, %v2494
    %v3007 = vmul.f32 %v447, %v2495
    %v3008 = vmul.f32 %v448, %v2496
    %v3009 = vmul.f32 %v449, %v2497
    %v3010 = vmul.f32 %v450, %v2498
    %v3011 = vmul.f32 %v451, %v2499
    %v3012 = vmul.f32 %v452, %v2500
    %v3013 = vmul.f32 %v453, %v2501
    %v3014 = vmul.f32 %v454, %v2502
    %v3015 = vmul.f32 %v455, %v2503
    %v3016 = vmul.f32 %v456, %v2504
    %v3017 = vmul.f32 %v457, %v2505
    %v3018 = vmul.f32 %v458, %v2506
    %v3019 = vmul.f32 %v459, %v2507
    %v3020 = vmul.f32 %v460, %v2508
    %v3021 = vmul.f32 %v461, %v2509
    %v3022 = vmul.f32 %v462, %v2510
    %v3023 = vmul.f32 %v463, %v2511
    %v3024 = vmul.f32 %v464, %v2512
    %v3025 = vmul.f32 %v465, %v2513
    %v3026 = vmul.f32 %v466, %v2514
    %v3027 = vmul.f32 %v467, %v2515
    %v3028 = vmul.f32 %v468, %v2516
    %v3029 = vmul.f32 %v469, %v2517
    %v3030 = vmul.f32 %v470, %v2518
    %v3031 = vmul.f32 %v471, %v2519
    %v3032 = vmul.f32 %v472, %v2520
    %v3033 = vmul.f32 %v473, %v2521
    %v3034 = vmul.f32 %v474, %v2522
    %v3035 = vmul.f32 %v475, %v2523
    %v3036 = vmul.f32 %v476, %v2524
    %v3037 = vmul.f32 %v477, %v2525
    %v3038 = vmul.f32 %v478, %v2526
    %v3039 = vmul.f32 %v479, %v2527
    %v3040 = vmul.f32 %v480, %v2528
    %v3041 = vmul.f32 %v481, %v2529
    %v3042 = vmul.f32 %v482, %v2530
    %v3043 = vmul.f32 %v483, %v2531
    %v3044 = vmul.f32 %v484, %v2532
    %v3045 = vmul.f32 %v485, %v2533
    %v3046 = vmul.f32 %v486, %v2534
    %v3047 = vmul.f32 %v487, %v2535
    %v3048 = vmul.f32 %v488, %v2536
    %v3049 = vmul.f32 %v489, %v2537
    %v3050 = vmul.f32 %v490, %v2538
    %v3051 = vmul.f32 %v491, %v2539
    %v3052 = vmul.f32 %v492, %v2540
    %v3053 = vmul.f32 %v493, %v2541
    %v3054 = vmul.f32 %v494, %v2542
    %v3055 = vmul.f32 %v495, %v2543
    %v3056 = vmul.f32 %v496, %v2544
    %v3057 = vmul.f32 %v497, %v2545
    %v3058 = vmul.f32 %v498, %v2546
    %v3059 = vmul.f32 %v499, %v2547
    %v3060 = vmul.f32 %v500, %v2548
    %v3061 = vmul.f32 %v501, %v2549
    %v3062 = vmul.f32 %v502, %v2550
    %v3063 = vmul.f32 %v503, %v2551
    %v3064 = vmul.f32 %v504, %v2552
    %v3065 = vmul.f32 %v505, %v2553
    %v3066 = vmul.f32 %v506, %v2554
    %v3067 = vmul.f32 %v507, %v2555
    %v3068 = vmul.f32 %v508, %v2556
    %v3069 = vmul.f32 %v509, %v2557
    %v3070 = vmul.f32 %v510, %v2558
    %v3071 = vmul.f32 %v511, %v2559
    %v3072 = vmul.f32 %v512, %v2560
    %v3073 = vmul.f32 %v513, %v2561
    %v3074 = vmul.f32 %v514, %v2562
    %v3075 = vmul.f32 %v515, %v2563
    %v3076 = vmul.f32 %v516, %v2564
    %v3077 = vmul.f32 %v517, %v2565
    %v3078 = vmul.f32 %v518, %v2566
    %v3079 = vmul.f32 %v519, %v2567
    %v3080 = vmul.f32 %v520, %v2568
    %v3081 = vmul.f32 %v521, %v2569
    %v3082 = vmul.f32 %v522, %v2570
    %v3083 = vmul.f32 %v523, %v2571
    %v3084 = vmul.f32 %v524, %v2572
    %v3085 = vmul.f32 %v525, %v2573
    %v3086 = vmul.f32 %v526, %v2574
    %v3087 = vmul.f32 %v527, %v2575
    %v3088 = vmul.f32 %v528, %v2576
    %v3089 = vmul.f32 %v529, %v2577
    %v3090 = vmul.f32 %v530, %v2578
    %v3091 = vmul.f32 %v531, %v2579
    %v3092 = vmul.f32 %v532, %v2580
    %v3093 = vmul.f32 %v533, %v2581
    %v3094 = vmul.f32 %v534, %v2582
    %3095 = vst [vmem:[#allocation5] sm:$0xff] %v2583
    %3096 = vst [vmem:[#allocation5 + $0x8] sm:$0xff] %v2584
    %3097 = vst [vmem:[#allocation5 + $0x10] sm:$0xff] %v2585
    %3098 = vst [vmem:[#allocation5 + $0x18] sm:$0xff] %v2586
    %3099 = vst [vmem:[#allocation5 + $0x20] sm:$0xff] %v2587
    %3100 = vst [vmem:[#allocation5 + $0x28] sm:$0xff] %v2588
    %3101 = vst [vmem:[#allocation5 + $0x30] sm:$0xff] %v2589
    %3102 = vst [vmem:[#allocation5 + $0x38] sm:$0xff] %v2590
    %3103 = vst [vmem:[#allocation5 + $0x40] sm:$0xff] %v2591
    %3104 = vst [vmem:[#allocation5 + $0x48] sm:$0xff] %v2592
    %3105 = vst [vmem:[#allocation5 + $0x50] sm:$0xff] %v2593
    %3106 = vst [vmem:[#allocation5 + $0x58] sm:$0xff] %v2594
    %3107 = vst [vmem:[#allocation5 + $0x60] sm:$0xff] %v2595
    %3108 = vst [vmem:[#allocation5 + $0x68] sm:$0xff] %v2596
    %3109 = vst [vmem:[#allocation5 + $0x70] sm:$0xff] %v2597
    %3110 = vst [vmem:[#allocation5 + $0x78] sm:$0xff] %v2598
    %3111 = vst [vmem:[#allocation5 + $0x80] sm:$0xff] %v2599
    %3112 = vst [vmem:[#allocation5 + $0x88] sm:$0xff] %v2600
    %3113 = vst [vmem:[#allocation5 + $0x90] sm:$0xff] %v2601
    %3114 = vst [vmem:[#allocation5 + $0x98] sm:$0xff] %v2602
    %3115 = vst [vmem:[#allocation5 + $0xa0] sm:$0xff] %v2603
    %3116 = vst [vmem:[#allocation5 + $0xa8] sm:$0xff] %v2604
    %3117 = vst [vmem:[#allocation5 + $0xb0] sm:$0xff] %v2605
    %3118 = vst [vmem:[#allocation5 + $0xb8] sm:$0xff] %v2606
    %3119 = vst [vmem:[#allocation5 + $0xc0] sm:$0xff] %v2607
    %3120 = vst [vmem:[#allocation5 + $0xc8] sm:$0xff] %v2608
    %3121 = vst [vmem:[#allocation5 + $0xd0] sm:$0xff] %v2609
    %3122 = vst [vmem:[#allocation5 + $0xd8] sm:$0xff] %v2610
    %3123 = vst [vmem:[#allocation5 + $0xe0] sm:$0xff] %v2611
    %3124 = vst [vmem:[#allocation5 + $0xe8] sm:$0xff] %v2612
    %3125 = vst [vmem:[#allocation5 + $0xf0] sm:$0xff] %v2613
    %3126 = vst [vmem:[#allocation5 + $0xf8] sm:$0xff] %v2614
    %3127 = vst [vmem:[#allocation5 + $0x100] sm:$0xff] %v2615
    %3128 = vst [vmem:[#allocation5 + $0x108] sm:$0xff] %v2616
    %3129 = vst [vmem:[#allocation5 + $0x110] sm:$0xff] %v2617
    %3130 = vst [vmem:[#allocation5 + $0x118] sm:$0xff] %v2618
    %3131 = vst [vmem:[#allocation5 + $0x120] sm:$0xff] %v2619
    %3132 = vst [vmem:[#allocation5 + $0x128] sm:$0xff] %v2620
    %3133 = vst [vmem:[#allocation5 + $0x130] sm:$0xff] %v2621
    %3134 = vst [vmem:[#allocation5 + $0x138] sm:$0xff] %v2622
    %3135 = vst [vmem:[#allocation5 + $0x140] sm:$0xff] %v2623
    %3136 = vst [vmem:[#allocation5 + $0x148] sm:$0xff] %v2624
    %3137 = vst [vmem:[#allocation5 + $0x150] sm:$0xff] %v2625
    %3138 = vst [vmem:[#allocation5 + $0x158] sm:$0xff] %v2626
    %3139 = vst [vmem:[#allocation5 + $0x160] sm:$0xff] %v2627
    %3140 = vst [vmem:[#allocation5 + $0x168] sm:$0xff] %v2628
    %3141 = vst [vmem:[#allocation5 + $0x170] sm:$0xff] %v2629
    %3142 = vst [vmem:[#allocation5 + $0x178] sm:$0xff] %v2630
    %3143 = vst [vmem:[#allocation5 + $0x180] sm:$0xff] %v2631
    %3144 = vst [vmem:[#allocation5 + $0x188] sm:$0xff] %v2632
    %3145 = vst [vmem:[#allocation5 + $0x190] sm:$0xff] %v2633
    %3146 = vst [vmem:[#allocation5 + $0x198] sm:$0xff] %v2634
    %3147 = vst [vmem:[#allocation5 + $0x1a0] sm:$0xff] %v2635
    %3148 = vst [vmem:[#allocation5 + $0x1a8] sm:$0xff] %v2636
    %3149 = vst [vmem:[#allocation5 + $0x1b0] sm:$0xff] %v2637
    %3150 = vst [vmem:[#allocation5 + $0x1b8] sm:$0xff] %v2638
    %3151 = vst [vmem:[#allocation5 + $0x1c0] sm:$0xff] %v2639
    %3152 = vst [vmem:[#allocation5 + $0x1c8] sm:$0xff] %v2640
    %3153 = vst [vmem:[#allocation5 + $0x1d0] sm:$0xff] %v2641
    %3154 = vst [vmem:[#allocation5 + $0x1d8] sm:$0xff] %v2642
    %3155 = vst [vmem:[#allocation5 + $0x1e0] sm:$0xff] %v2643
    %3156 = vst [vmem:[#allocation5 + $0x1e8] sm:$0xff] %v2644
    %3157 = vst [vmem:[#allocation5 + $0x1f0] sm:$0xff] %v2645
    %3158 = vst [vmem:[#allocation5 + $0x1f8] sm:$0xff] %v2646
    %3159 = vst [vmem:[#allocation5 + $0x200] sm:$0xff] %v2647
    %3160 = vst [vmem:[#allocation5 + $0x208] sm:$0xff] %v2648
    %3161 = vst [vmem:[#allocation5 + $0x210] sm:$0xff] %v2649
    %3162 = vst [vmem:[#allocation5 + $0x218] sm:$0xff] %v2650
    %3163 = vst [vmem:[#allocation5 + $0x220] sm:$0xff] %v2651
    %3164 = vst [vmem:[#allocation5 + $0x228] sm:$0xff] %v2652
    %3165 = vst [vmem:[#allocation5 + $0x230] sm:$0xff] %v2653
    %3166 = vst [vmem:[#allocation5 + $0x238] sm:$0xff] %v2654
    %3167 = vst [vmem:[#allocation5 + $0x240] sm:$0xff] %v2655
    %3168 = vst [vmem:[#allocation5 + $0x248] sm:$0xff] %v2656
    %3169 = vst [vmem:[#allocation5 + $0x250] sm:$0xff] %v2657
    %3170 = vst [vmem:[#allocation5 + $0x258] sm:$0xff] %v2658
    %3171 = vst [vmem:[#allocation5 + $0x260] sm:$0xff] %v2659
    %3172 = vst [vmem:[#allocation5 + $0x268] sm:$0xff] %v2660
    %3173 = vst [vmem:[#allocation5 + $0x270] sm:$0xff] %v2661
    %3174 = vst [vmem:[#allocation5 + $0x278] sm:$0xff] %v2662
    %3175 = vst [vmem:[#allocation5 + $0x280] sm:$0xff] %v2663
    %3176 = vst [vmem:[#allocation5 + $0x288] sm:$0xff] %v2664
    %3177 = vst [vmem:[#allocation5 + $0x290] sm:$0xff] %v2665
    %3178 = vst [vmem:[#allocation5 + $0x298] sm:$0xff] %v2666
    %3179 = vst [vmem:[#allocation5 + $0x2a0] sm:$0xff] %v2667
    %3180 = vst [vmem:[#allocation5 + $0x2a8] sm:$0xff] %v2668
    %3181 = vst [vmem:[#allocation5 + $0x2b0] sm:$0xff] %v2669
    %3182 = vst [vmem:[#allocation5 + $0x2b8] sm:$0xff] %v2670
    %3183 = vst [vmem:[#allocation5 + $0x2c0] sm:$0xff] %v2671
    %3184 = vst [vmem:[#allocation5 + $0x2c8] sm:$0xff] %v2672
    %3185 = vst [vmem:[#allocation5 + $0x2d0] sm:$0xff] %v2673
    %3186 = vst [vmem:[#allocation5 + $0x2d8] sm:$0xff] %v2674
    %3187 = vst [vmem:[#allocation5 + $0x2e0] sm:$0xff] %v2675
    %3188 = vst [vmem:[#allocation5 + $0x2e8] sm:$0xff] %v2676
    %3189 = vst [vmem:[#allocation5 + $0x2f0] sm:$0xff] %v2677
    %3190 = vst [vmem:[#allocation5 + $0x2f8] sm:$0xff] %v2678
    %3191 = vst [vmem:[#allocation5 + $0x300] sm:$0xff] %v2679
    %3192 = vst [vmem:[#allocation5 + $0x308] sm:$0xff] %v2680
    %3193 = vst [vmem:[#allocation5 + $0x310] sm:$0xff] %v2681
    %3194 = vst [vmem:[#allocation5 + $0x318] sm:$0xff] %v2682
    %3195 = vst [vmem:[#allocation5 + $0x320] sm:$0xff] %v2683
    %3196 = vst [vmem:[#allocation5 + $0x328] sm:$0xff] %v2684
    %3197 = vst [vmem:[#allocation5 + $0x330] sm:$0xff] %v2685
    %3198 = vst [vmem:[#allocation5 + $0x338] sm:$0xff] %v2686
    %3199 = vst [vmem:[#allocation5 + $0x340] sm:$0xff] %v2687
    %3200 = vst [vmem:[#allocation5 + $0x348] sm:$0xff] %v2688
    %3201 = vst [vmem:[#allocation5 + $0x350] sm:$0xff] %v2689
    %3202 = vst [vmem:[#allocation5 + $0x358] sm:$0xff] %v2690
    %3203 = vst [vmem:[#allocation5 + $0x360] sm:$0xff] %v2691
    %3204 = vst [vmem:[#allocation5 + $0x368] sm:$0xff] %v2692
    %3205 = vst [vmem:[#allocation5 + $0x370] sm:$0xff] %v2693
    %3206 = vst [vmem:[#allocation5 + $0x378] sm:$0xff] %v2694
    %3207 = vst [vmem:[#allocation5 + $0x380] sm:$0xff] %v2695
    %3208 = vst [vmem:[#allocation5 + $0x388] sm:$0xff] %v2696
    %3209 = vst [vmem:[#allocation5 + $0x390] sm:$0xff] %v2697
    %3210 = vst [vmem:[#allocation5 + $0x398] sm:$0xff] %v2698
    %3211 = vst [vmem:[#allocation5 + $0x3a0] sm:$0xff] %v2699
    %3212 = vst [vmem:[#allocation5 + $0x3a8] sm:$0xff] %v2700
    %3213 = vst [vmem:[#allocation5 + $0x3b0] sm:$0xff] %v2701
    %3214 = vst [vmem:[#allocation5 + $0x3b8] sm:$0xff] %v2702
    %3215 = vst [vmem:[#allocation5 + $0x3c0] sm:$0xff] %v2703
    %3216 = vst [vmem:[#allocation5 + $0x3c8] sm:$0xff] %v2704
    %3217 = vst [vmem:[#allocation5 + $0x3d0] sm:$0xff] %v2705
    %3218 = vst [vmem:[#allocation5 + $0x3d8] sm:$0xff] %v2706
    %3219 = vst [vmem:[#allocation5 + $0x3e0] sm:$0xff] %v2707
    %3220 = vst [vmem:[#allocation5 + $0x3e8] sm:$0xff] %v2708
    %3221 = vst [vmem:[#allocation5 + $0x3f0] sm:$0xff] %v2709
    %3222 = vst [vmem:[#allocation5 + $0x3f8] sm:$0xff] %v2710
    %3223 = vst [vmem:[#allocation5 + $0x400] sm:$0xff] %v2711
    %3224 = vst [vmem:[#allocation5 + $0x408] sm:$0xff] %v2712
    %3225 = vst [vmem:[#allocation5 + $0x410] sm:$0xff] %v2713
    %3226 = vst [vmem:[#allocation5 + $0x418] sm:$0xff] %v2714
    %3227 = vst [vmem:[#allocation5 + $0x420] sm:$0xff] %v2715
    %3228 = vst [vmem:[#allocation5 + $0x428] sm:$0xff] %v2716
    %3229 = vst [vmem:[#allocation5 + $0x430] sm:$0xff] %v2717
    %3230 = vst [vmem:[#allocation5 + $0x438] sm:$0xff] %v2718
    %3231 = vst [vmem:[#allocation5 + $0x440] sm:$0xff] %v2719
    %3232 = vst [vmem:[#allocation5 + $0x448] sm:$0xff] %v2720
    %3233 = vst [vmem:[#allocation5 + $0x450] sm:$0xff] %v2721
    %3234 = vst [vmem:[#allocation5 + $0x458] sm:$0xff] %v2722
    %3235 = vst [vmem:[#allocation5 + $0x460] sm:$0xff] %v2723
    %3236 = vst [vmem:[#allocation5 + $0x468] sm:$0xff] %v2724
    %3237 = vst [vmem:[#allocation5 + $0x470] sm:$0xff] %v2725
    %3238 = vst [vmem:[#allocation5 + $0x478] sm:$0xff] %v2726
    %3239 = vst [vmem:[#allocation5 + $0x480] sm:$0xff] %v2727
    %3240 = vst [vmem:[#allocation5 + $0x488] sm:$0xff] %v2728
    %3241 = vst [vmem:[#allocation5 + $0x490] sm:$0xff] %v2729
    %3242 = vst [vmem:[#allocation5 + $0x498] sm:$0xff] %v2730
    %3243 = vst [vmem:[#allocation5 + $0x4a0] sm:$0xff] %v2731
    %3244 = vst [vmem:[#allocation5 + $0x4a8] sm:$0xff] %v2732
    %3245 = vst [vmem:[#allocation5 + $0x4b0] sm:$0xff] %v2733
    %3246 = vst [vmem:[#allocation5 + $0x4b8] sm:$0xff] %v2734
    %3247 = vst [vmem:[#allocation5 + $0x4c0] sm:$0xff] %v2735
    %3248 = vst [vmem:[#allocation5 + $0x4c8] sm:$0xff] %v2736
    %3249 = vst [vmem:[#allocation5 + $0x4d0] sm:$0xff] %v2737
    %3250 = vst [vmem:[#allocation5 + $0x4d8] sm:$0xff] %v2738
    %3251 = vst [vmem:[#allocation5 + $0x4e0] sm:$0xff] %v2739
    %3252 = vst [vmem:[#allocation5 + $0x4e8] sm:$0xff] %v2740
    %3253 = vst [vmem:[#allocation5 + $0x4f0] sm:$0xff] %v2741
    %3254 = vst [vmem:[#allocation5 + $0x4f8] sm:$0xff] %v2742
    %3255 = vst [vmem:[#allocation5 + $0x500] sm:$0xff] %v2743
    %3256 = vst [vmem:[#allocation5 + $0x508] sm:$0xff] %v2744
    %3257 = vst [vmem:[#allocation5 + $0x510] sm:$0xff] %v2745
    %3258 = vst [vmem:[#allocation5 + $0x518] sm:$0xff] %v2746
    %3259 = vst [vmem:[#allocation5 + $0x520] sm:$0xff] %v2747
    %3260 = vst [vmem:[#allocation5 + $0x528] sm:$0xff] %v2748
    %3261 = vst [vmem:[#allocation5 + $0x530] sm:$0xff] %v2749
    %3262 = vst [vmem:[#allocation5 + $0x538] sm:$0xff] %v2750
    %3263 = vst [vmem:[#allocation5 + $0x540] sm:$0xff] %v2751
    %3264 = vst [vmem:[#allocation5 + $0x548] sm:$0xff] %v2752
    %3265 = vst [vmem:[#allocation5 + $0x550] sm:$0xff] %v2753
    %3266 = vst [vmem:[#allocation5 + $0x558] sm:$0xff] %v2754
    %3267 = vst [vmem:[#allocation5 + $0x560] sm:$0xff] %v2755
    %3268 = vst [vmem:[#allocation5 + $0x568] sm:$0xff] %v2756
    %3269 = vst [vmem:[#allocation5 + $0x570] sm:$0xff] %v2757
    %3270 = vst [vmem:[#allocation5 + $0x578] sm:$0xff] %v2758
    %3271 = vst [vmem:[#allocation5 + $0x580] sm:$0xff] %v2759
    %3272 = vst [vmem:[#allocation5 + $0x588] sm:$0xff] %v2760
    %3273 = vst [vmem:[#allocation5 + $0x590] sm:$0xff] %v2761
    %3274 = vst [vmem:[#allocation5 + $0x598] sm:$0xff] %v2762
    %3275 = vst [vmem:[#allocation5 + $0x5a0] sm:$0xff] %v2763
    %3276 = vst [vmem:[#allocation5 + $0x5a8] sm:$0xff] %v2764
    %3277 = vst [vmem:[#allocation5 + $0x5b0] sm:$0xff] %v2765
    %3278 = vst [vmem:[#allocation5 + $0x5b8] sm:$0xff] %v2766
    %3279 = vst [vmem:[#allocation5 + $0x5c0] sm:$0xff] %v2767
    %3280 = vst [vmem:[#allocation5 + $0x5c8] sm:$0xff] %v2768
    %3281 = vst [vmem:[#allocation5 + $0x5d0] sm:$0xff] %v2769
    %3282 = vst [vmem:[#allocation5 + $0x5d8] sm:$0xff] %v2770
    %3283 = vst [vmem:[#allocation5 + $0x5e0] sm:$0xff] %v2771
    %3284 = vst [vmem:[#allocation5 + $0x5e8] sm:$0xff] %v2772
    %3285 = vst [vmem:[#allocation5 + $0x5f0] sm:$0xff] %v2773
    %3286 = vst [vmem:[#allocation5 + $0x5f8] sm:$0xff] %v2774
    %3287 = vst [vmem:[#allocation5 + $0x600] sm:$0xff] %v2775
    %3288 = vst [vmem:[#allocation5 + $0x608] sm:$0xff] %v2776
    %3289 = vst [vmem:[#allocation5 + $0x610] sm:$0xff] %v2777
    %3290 = vst [vmem:[#allocation5 + $0x618] sm:$0xff] %v2778
    %3291 = vst [vmem:[#allocation5 + $0x620] sm:$0xff] %v2779
    %3292 = vst [vmem:[#allocation5 + $0x628] sm:$0xff] %v2780
    %3293 = vst [vmem:[#allocation5 + $0x630] sm:$0xff] %v2781
    %3294 = vst [vmem:[#allocation5 + $0x638] sm:$0xff] %v2782
    %3295 = vst [vmem:[#allocation5 + $0x640] sm:$0xff] %v2783
    %3296 = vst [vmem:[#allocation5 + $0x648] sm:$0xff] %v2784
    %3297 = vst [vmem:[#allocation5 + $0x650] sm:$0xff] %v2785
    %3298 = vst [vmem:[#allocation5 + $0x658] sm:$0xff] %v2786
    %3299 = vst [vmem:[#allocation5 + $0x660] sm:$0xff] %v2787
    %3300 = vst [vmem:[#allocation5 + $0x668] sm:$0xff] %v2788
    %3301 = vst [vmem:[#allocation5 + $0x670] sm:$0xff] %v2789
    %3302 = vst [vmem:[#allocation5 + $0x678] sm:$0xff] %v2790
    %3303 = vst [vmem:[#allocation5 + $0x680] sm:$0xff] %v2791
    %3304 = vst [vmem:[#allocation5 + $0x688] sm:$0xff] %v2792
    %3305 = vst [vmem:[#allocation5 + $0x690] sm:$0xff] %v2793
    %3306 = vst [vmem:[#allocation5 + $0x698] sm:$0xff] %v2794
    %3307 = vst [vmem:[#allocation5 + $0x6a0] sm:$0xff] %v2795
    %3308 = vst [vmem:[#allocation5 + $0x6a8] sm:$0xff] %v2796
    %3309 = vst [vmem:[#allocation5 + $0x6b0] sm:$0xff] %v2797
    %3310 = vst [vmem:[#allocation5 + $0x6b8] sm:$0xff] %v2798
    %3311 = vst [vmem:[#allocation5 + $0x6c0] sm:$0xff] %v2799
    %3312 = vst [vmem:[#allocation5 + $0x6c8] sm:$0xff] %v2800
    %3313 = vst [vmem:[#allocation5 + $0x6d0] sm:$0xff] %v2801
    %3314 = vst [vmem:[#allocation5 + $0x6d8] sm:$0xff] %v2802
    %3315 = vst [vmem:[#allocation5 + $0x6e0] sm:$0xff] %v2803
    %3316 = vst [vmem:[#allocation5 + $0x6e8] sm:$0xff] %v2804
    %3317 = vst [vmem:[#allocation5 + $0x6f0] sm:$0xff] %v2805
    %3318 = vst [vmem:[#allocation5 + $0x6f8] sm:$0xff] %v2806
    %3319 = vst [vmem:[#allocation5 + $0x700] sm:$0xff] %v2807
    %3320 = vst [vmem:[#allocation5 + $0x708] sm:$0xff] %v2808
    %3321 = vst [vmem:[#allocation5 + $0x710] sm:$0xff] %v2809
    %3322 = vst [vmem:[#allocation5 + $0x718] sm:$0xff] %v2810
    %3323 = vst [vmem:[#allocation5 + $0x720] sm:$0xff] %v2811
    %3324 = vst [vmem:[#allocation5 + $0x728] sm:$0xff] %v2812
    %3325 = vst [vmem:[#allocation5 + $0x730] sm:$0xff] %v2813
    %3326 = vst [vmem:[#allocation5 + $0x738] sm:$0xff] %v2814
    %3327 = vst [vmem:[#allocation5 + $0x740] sm:$0xff] %v2815
    %3328 = vst [vmem:[#allocation5 + $0x748] sm:$0xff] %v2816
    %3329 = vst [vmem:[#allocation5 + $0x750] sm:$0xff] %v2817
    %3330 = vst [vmem:[#allocation5 + $0x758] sm:$0xff] %v2818
    %3331 = vst [vmem:[#allocation5 + $0x760] sm:$0xff] %v2819
    %3332 = vst [vmem:[#allocation5 + $0x768] sm:$0xff] %v2820
    %3333 = vst [vmem:[#allocation5 + $0x770] sm:$0xff] %v2821
    %3334 = vst [vmem:[#allocation5 + $0x778] sm:$0xff] %v2822
    %3335 = vst [vmem:[#allocation5 + $0x780] sm:$0xff] %v2823
    %3336 = vst [vmem:[#allocation5 + $0x788] sm:$0xff] %v2824
    %3337 = vst [vmem:[#allocation5 + $0x790] sm:$0xff] %v2825
    %3338 = vst [vmem:[#allocation5 + $0x798] sm:$0xff] %v2826
    %3339 = vst [vmem:[#allocation5 + $0x7a0] sm:$0xff] %v2827
    %3340 = vst [vmem:[#allocation5 + $0x7a8] sm:$0xff] %v2828
    %3341 = vst [vmem:[#allocation5 + $0x7b0] sm:$0xff] %v2829
    %3342 = vst [vmem:[#allocation5 + $0x7b8] sm:$0xff] %v2830
    %3343 = vst [vmem:[#allocation5 + $0x7c0] sm:$0xff] %v2831
    %3344 = vst [vmem:[#allocation5 + $0x7c8] sm:$0xff] %v2832
    %3345 = vst [vmem:[#allocation5 + $0x7d0] sm:$0xff] %v2833
    %3346 = vst [vmem:[#allocation5 + $0x7d8] sm:$0xff] %v2834
    %3347 = vst [vmem:[#allocation5 + $0x7e0] sm:$0xff] %v2835
    %3348 = vst [vmem:[#allocation5 + $0x7e8] sm:$0xff] %v2836
    %3349 = vst [vmem:[#allocation5 + $0x7f0] sm:$0xff] %v2837
    %3350 = vst [vmem:[#allocation5 + $0x7f8] sm:$0xff] %v2838
    %3351 = vst [vmem:[#allocation5 + $0x800] sm:$0xff] %v2839
    %3352 = vst [vmem:[#allocation5 + $0x808] sm:$0xff] %v2840
    %3353 = vst [vmem:[#allocation5 + $0x810] sm:$0xff] %v2841
    %3354 = vst [vmem:[#allocation5 + $0x818] sm:$0xff] %v2842
    %3355 = vst [vmem:[#allocation5 + $0x820] sm:$0xff] %v2843
    %3356 = vst [vmem:[#allocation5 + $0x828] sm:$0xff] %v2844
    %3357 = vst [vmem:[#allocation5 + $0x830] sm:$0xff] %v2845
    %3358 = vst [vmem:[#allocation5 + $0x838] sm:$0xff] %v2846
    %3359 = vst [vmem:[#allocation5 + $0x840] sm:$0xff] %v2847
    %3360 = vst [vmem:[#allocation5 + $0x848] sm:$0xff] %v2848
    %3361 = vst [vmem:[#allocation5 + $0x850] sm:$0xff] %v2849
    %3362 = vst [vmem:[#allocation5 + $0x858] sm:$0xff] %v2850
    %3363 = vst [vmem:[#allocation5 + $0x860] sm:$0xff] %v2851
    %3364 = vst [vmem:[#allocation5 + $0x868] sm:$0xff] %v2852
    %3365 = vst [vmem:[#allocation5 + $0x870] sm:$0xff] %v2853
    %3366 = vst [vmem:[#allocation5 + $0x878] sm:$0xff] %v2854
    %3367 = vst [vmem:[#allocation5 + $0x880] sm:$0xff] %v2855
    %3368 = vst [vmem:[#allocation5 + $0x888] sm:$0xff] %v2856
    %3369 = vst [vmem:[#allocation5 + $0x890] sm:$0xff] %v2857
    %3370 = vst [vmem:[#allocation5 + $0x898] sm:$0xff] %v2858
    %3371 = vst [vmem:[#allocation5 + $0x8a0] sm:$0xff] %v2859
    %3372 = vst [vmem:[#allocation5 + $0x8a8] sm:$0xff] %v2860
    %3373 = vst [vmem:[#allocation5 + $0x8b0] sm:$0xff] %v2861
    %3374 = vst [vmem:[#allocation5 + $0x8b8] sm:$0xff] %v2862
    %3375 = vst [vmem:[#allocation5 + $0x8c0] sm:$0xff] %v2863
    %3376 = vst [vmem:[#allocation5 + $0x8c8] sm:$0xff] %v2864
    %3377 = vst [vmem:[#allocation5 + $0x8d0] sm:$0xff] %v2865
    %3378 = vst [vmem:[#allocation5 + $0x8d8] sm:$0xff] %v2866
    %3379 = vst [vmem:[#allocation5 + $0x8e0] sm:$0xff] %v2867
    %3380 = vst [vmem:[#allocation5 + $0x8e8] sm:$0xff] %v2868
    %3381 = vst [vmem:[#allocation5 + $0x8f0] sm:$0xff] %v2869
    %3382 = vst [vmem:[#allocation5 + $0x8f8] sm:$0xff] %v2870
    %3383 = vst [vmem:[#allocation5 + $0x900] sm:$0xff] %v2871
    %3384 = vst [vmem:[#allocation5 + $0x908] sm:$0xff] %v2872
    %3385 = vst [vmem:[#allocation5 + $0x910] sm:$0xff] %v2873
    %3386 = vst [vmem:[#allocation5 + $0x918] sm:$0xff] %v2874
    %3387 = vst [vmem:[#allocation5 + $0x920] sm:$0xff] %v2875
    %3388 = vst [vmem:[#allocation5 + $0x928] sm:$0xff] %v2876
    %3389 = vst [vmem:[#allocation5 + $0x930] sm:$0xff] %v2877
    %3390 = vst [vmem:[#allocation5 + $0x938] sm:$0xff] %v2878
    %3391 = vst [vmem:[#allocation5 + $0x940] sm:$0xff] %v2879
    %3392 = vst [vmem:[#allocation5 + $0x948] sm:$0xff] %v2880
    %3393 = vst [vmem:[#allocation5 + $0x950] sm:$0xff] %v2881
    %3394 = vst [vmem:[#allocation5 + $0x958] sm:$0xff] %v2882
    %3395 = vst [vmem:[#allocation5 + $0x960] sm:$0xff] %v2883
    %3396 = vst [vmem:[#allocation5 + $0x968] sm:$0xff] %v2884
    %3397 = vst [vmem:[#allocation5 + $0x970] sm:$0xff] %v2885
    %3398 = vst [vmem:[#allocation5 + $0x978] sm:$0xff] %v2886
    %3399 = vst [vmem:[#allocation5 + $0x980] sm:$0xff] %v2887
    %3400 = vst [vmem:[#allocation5 + $0x988] sm:$0xff] %v2888
    %3401 = vst [vmem:[#allocation5 + $0x990] sm:$0xff] %v2889
    %3402 = vst [vmem:[#allocation5 + $0x998] sm:$0xff] %v2890
    %3403 = vst [vmem:[#allocation5 + $0x9a0] sm:$0xff] %v2891
    %3404 = vst [vmem:[#allocation5 + $0x9a8] sm:$0xff] %v2892
    %3405 = vst [vmem:[#allocation5 + $0x9b0] sm:$0xff] %v2893
    %3406 = vst [vmem:[#allocation5 + $0x9b8] sm:$0xff] %v2894
    %3407 = vst [vmem:[#allocation5 + $0x9c0] sm:$0xff] %v2895
    %3408 = vst [vmem:[#allocation5 + $0x9c8] sm:$0xff] %v2896
    %3409 = vst [vmem:[#allocation5 + $0x9d0] sm:$0xff] %v2897
    %3410 = vst [vmem:[#allocation5 + $0x9d8] sm:$0xff] %v2898
    %3411 = vst [vmem:[#allocation5 + $0x9e0] sm:$0xff] %v2899
    %3412 = vst [vmem:[#allocation5 + $0x9e8] sm:$0xff] %v2900
    %3413 = vst [vmem:[#allocation5 + $0x9f0] sm:$0xff] %v2901
    %3414 = vst [vmem:[#allocation5 + $0x9f8] sm:$0xff] %v2902
    %3415 = vst [vmem:[#allocation5 + $0xa00] sm:$0xff] %v2903
    %3416 = vst [vmem:[#allocation5 + $0xa08] sm:$0xff] %v2904
    %3417 = vst [vmem:[#allocation5 + $0xa10] sm:$0xff] %v2905
    %3418 = vst [vmem:[#allocation5 + $0xa18] sm:$0xff] %v2906
    %3419 = vst [vmem:[#allocation5 + $0xa20] sm:$0xff] %v2907
    %3420 = vst [vmem:[#allocation5 + $0xa28] sm:$0xff] %v2908
    %3421 = vst [vmem:[#allocation5 + $0xa30] sm:$0xff] %v2909
    %3422 = vst [vmem:[#allocation5 + $0xa38] sm:$0xff] %v2910
    %3423 = vst [vmem:[#allocation5 + $0xa40] sm:$0xff] %v2911
    %3424 = vst [vmem:[#allocation5 + $0xa48] sm:$0xff] %v2912
    %3425 = vst [vmem:[#allocation5 + $0xa50] sm:$0xff] %v2913
    %3426 = vst [vmem:[#allocation5 + $0xa58] sm:$0xff] %v2914
    %3427 = vst [vmem:[#allocation5 + $0xa60] sm:$0xff] %v2915
    %3428 = vst [vmem:[#allocation5 + $0xa68] sm:$0xff] %v2916
    %3429 = vst [vmem:[#allocation5 + $0xa70] sm:$0xff] %v2917
    %3430 = vst [vmem:[#allocation5 + $0xa78] sm:$0xff] %v2918
    %3431 = vst [vmem:[#allocation5 + $0xa80] sm:$0xff] %v2919
    %3432 = vst [vmem:[#allocation5 + $0xa88] sm:$0xff] %v2920
    %3433 = vst [vmem:[#allocation5 + $0xa90] sm:$0xff] %v2921
    %3434 = vst [vmem:[#allocation5 + $0xa98] sm:$0xff] %v2922
    %3435 = vst [vmem:[#allocation5 + $0xaa0] sm:$0xff] %v2923
    %3436 = vst [vmem:[#allocation5 + $0xaa8] sm:$0xff] %v2924
    %3437 = vst [vmem:[#allocation5 + $0xab0] sm:$0xff] %v2925
    %3438 = vst [vmem:[#allocation5 + $0xab8] sm:$0xff] %v2926
    %3439 = vst [vmem:[#allocation5 + $0xac0] sm:$0xff] %v2927
    %3440 = vst [vmem:[#allocation5 + $0xac8] sm:$0xff] %v2928
    %3441 = vst [vmem:[#allocation5 + $0xad0] sm:$0xff] %v2929
    %3442 = vst [vmem:[#allocation5 + $0xad8] sm:$0xff] %v2930
    %3443 = vst [vmem:[#allocation5 + $0xae0] sm:$0xff] %v2931
    %3444 = vst [vmem:[#allocation5 + $0xae8] sm:$0xff] %v2932
    %3445 = vst [vmem:[#allocation5 + $0xaf0] sm:$0xff] %v2933
    %3446 = vst [vmem:[#allocation5 + $0xaf8] sm:$0xff] %v2934
    %3447 = vst [vmem:[#allocation5 + $0xb00] sm:$0xff] %v2935
    %3448 = vst [vmem:[#allocation5 + $0xb08] sm:$0xff] %v2936
    %3449 = vst [vmem:[#allocation5 + $0xb10] sm:$0xff] %v2937
    %3450 = vst [vmem:[#allocation5 + $0xb18] sm:$0xff] %v2938
    %3451 = vst [vmem:[#allocation5 + $0xb20] sm:$0xff] %v2939
    %3452 = vst [vmem:[#allocation5 + $0xb28] sm:$0xff] %v2940
    %3453 = vst [vmem:[#allocation5 + $0xb30] sm:$0xff] %v2941
    %3454 = vst [vmem:[#allocation5 + $0xb38] sm:$0xff] %v2942
    %3455 = vst [vmem:[#allocation5 + $0xb40] sm:$0xff] %v2943
    %3456 = vst [vmem:[#allocation5 + $0xb48] sm:$0xff] %v2944
    %3457 = vst [vmem:[#allocation5 + $0xb50] sm:$0xff] %v2945
    %3458 = vst [vmem:[#allocation5 + $0xb58] sm:$0xff] %v2946
    %3459 = vst [vmem:[#allocation5 + $0xb60] sm:$0xff] %v2947
    %3460 = vst [vmem:[#allocation5 + $0xb68] sm:$0xff] %v2948
    %3461 = vst [vmem:[#allocation5 + $0xb70] sm:$0xff] %v2949
    %3462 = vst [vmem:[#allocation5 + $0xb78] sm:$0xff] %v2950
    %3463 = vst [vmem:[#allocation5 + $0xb80] sm:$0xff] %v2951
    %3464 = vst [vmem:[#allocation5 + $0xb88] sm:$0xff] %v2952
    %3465 = vst [vmem:[#allocation5 + $0xb90] sm:$0xff] %v2953
    %3466 = vst [vmem:[#allocation5 + $0xb98] sm:$0xff] %v2954
    %3467 = vst [vmem:[#allocation5 + $0xba0] sm:$0xff] %v2955
    %3468 = vst [vmem:[#allocation5 + $0xba8] sm:$0xff] %v2956
    %3469 = vst [vmem:[#allocation5 + $0xbb0] sm:$0xff] %v2957
    %3470 = vst [vmem:[#allocation5 + $0xbb8] sm:$0xff] %v2958
    %3471 = vst [vmem:[#allocation5 + $0xbc0] sm:$0xff] %v2959
    %3472 = vst [vmem:[#allocation5 + $0xbc8] sm:$0xff] %v2960
    %3473 = vst [vmem:[#allocation5 + $0xbd0] sm:$0xff] %v2961
    %3474 = vst [vmem:[#allocation5 + $0xbd8] sm:$0xff] %v2962
    %3475 = vst [vmem:[#allocation5 + $0xbe0] sm:$0xff] %v2963
    %3476 = vst [vmem:[#allocation5 + $0xbe8] sm:$0xff] %v2964
    %3477 = vst [vmem:[#allocation5 + $0xbf0] sm:$0xff] %v2965
    %3478 = vst [vmem:[#allocation5 + $0xbf8] sm:$0xff] %v2966
    %3479 = vst [vmem:[#allocation5 + $0xc00] sm:$0xff] %v2967
    %3480 = vst [vmem:[#allocation5 + $0xc08] sm:$0xff] %v2968
    %3481 = vst [vmem:[#allocation5 + $0xc10] sm:$0xff] %v2969
    %3482 = vst [vmem:[#allocation5 + $0xc18] sm:$0xff] %v2970
    %3483 = vst [vmem:[#allocation5 + $0xc20] sm:$0xff] %v2971
    %3484 = vst [vmem:[#allocation5 + $0xc28] sm:$0xff] %v2972
    %3485 = vst [vmem:[#allocation5 + $0xc30] sm:$0xff] %v2973
    %3486 = vst [vmem:[#allocation5 + $0xc38] sm:$0xff] %v2974
    %3487 = vst [vmem:[#allocation5 + $0xc40] sm:$0xff] %v2975
    %3488 = vst [vmem:[#allocation5 + $0xc48] sm:$0xff] %v2976
    %3489 = vst [vmem:[#allocation5 + $0xc50] sm:$0xff] %v2977
    %3490 = vst [vmem:[#allocation5 + $0xc58] sm:$0xff] %v2978
    %3491 = vst [vmem:[#allocation5 + $0xc60] sm:$0xff] %v2979
    %3492 = vst [vmem:[#allocation5 + $0xc68] sm:$0xff] %v2980
    %3493 = vst [vmem:[#allocation5 + $0xc70] sm:$0xff] %v2981
    %3494 = vst [vmem:[#allocation5 + $0xc78] sm:$0xff] %v2982
    %3495 = vst [vmem:[#allocation5 + $0xc80] sm:$0xff] %v2983
    %3496 = vst [vmem:[#allocation5 + $0xc88] sm:$0xff] %v2984
    %3497 = vst [vmem:[#allocation5 + $0xc90] sm:$0xff] %v2985
    %3498 = vst [vmem:[#allocation5 + $0xc98] sm:$0xff] %v2986
    %3499 = vst [vmem:[#allocation5 + $0xca0] sm:$0xff] %v2987
    %3500 = vst [vmem:[#allocation5 + $0xca8] sm:$0xff] %v2988
    %3501 = vst [vmem:[#allocation5 + $0xcb0] sm:$0xff] %v2989
    %3502 = vst [vmem:[#allocation5 + $0xcb8] sm:$0xff] %v2990
    %3503 = vst [vmem:[#allocation5 + $0xcc0] sm:$0xff] %v2991
    %3504 = vst [vmem:[#allocation5 + $0xcc8] sm:$0xff] %v2992
    %3505 = vst [vmem:[#allocation5 + $0xcd0] sm:$0xff] %v2993
    %3506 = vst [vmem:[#allocation5 + $0xcd8] sm:$0xff] %v2994
    %3507 = vst [vmem:[#allocation5 + $0xce0] sm:$0xff] %v2995
    %3508 = vst [vmem:[#allocation5 + $0xce8] sm:$0xff] %v2996
    %3509 = vst [vmem:[#allocation5 + $0xcf0] sm:$0xff] %v2997
    %3510 = vst [vmem:[#allocation5 + $0xcf8] sm:$0xff] %v2998
    %3511 = vst [vmem:[#allocation5 + $0xd00] sm:$0xff] %v2999
    %3512 = vst [vmem:[#allocation5 + $0xd08] sm:$0xff] %v3000
    %3513 = vst [vmem:[#allocation5 + $0xd10] sm:$0xff] %v3001
    %3514 = vst [vmem:[#allocation5 + $0xd18] sm:$0xff] %v3002
    %3515 = vst [vmem:[#allocation5 + $0xd20] sm:$0xff] %v3003
    %3516 = vst [vmem:[#allocation5 + $0xd28] sm:$0xff] %v3004
    %3517 = vst [vmem:[#allocation5 + $0xd30] sm:$0xff] %v3005
    %3518 = vst [vmem:[#allocation5 + $0xd38] sm:$0xff] %v3006
    %3519 = vst [vmem:[#allocation5 + $0xd40] sm:$0xff] %v3007
    %3520 = vst [vmem:[#allocation5 + $0xd48] sm:$0xff] %v3008
    %3521 = vst [vmem:[#allocation5 + $0xd50] sm:$0xff] %v3009
    %3522 = vst [vmem:[#allocation5 + $0xd58] sm:$0xff] %v3010
    %3523 = vst [vmem:[#allocation5 + $0xd60] sm:$0xff] %v3011
    %3524 = vst [vmem:[#allocation5 + $0xd68] sm:$0xff] %v3012
    %3525 = vst [vmem:[#allocation5 + $0xd70] sm:$0xff] %v3013
    %3526 = vst [vmem:[#allocation5 + $0xd78] sm:$0xff] %v3014
    %3527 = vst [vmem:[#allocation5 + $0xd80] sm:$0xff] %v3015
    %3528 = vst [vmem:[#allocation5 + $0xd88] sm:$0xff] %v3016
    %3529 = vst [vmem:[#allocation5 + $0xd90] sm:$0xff] %v3017
    %3530 = vst [vmem:[#allocation5 + $0xd98] sm:$0xff] %v3018
    %3531 = vst [vmem:[#allocation5 + $0xda0] sm:$0xff] %v3019
    %3532 = vst [vmem:[#allocation5 + $0xda8] sm:$0xff] %v3020
    %3533 = vst [vmem:[#allocation5 + $0xdb0] sm:$0xff] %v3021
    %3534 = vst [vmem:[#allocation5 + $0xdb8] sm:$0xff] %v3022
    %3535 = vst [vmem:[#allocation5 + $0xdc0] sm:$0xff] %v3023
    %3536 = vst [vmem:[#allocation5 + $0xdc8] sm:$0xff] %v3024
    %3537 = vst [vmem:[#allocation5 + $0xdd0] sm:$0xff] %v3025
    %3538 = vst [vmem:[#allocation5 + $0xdd8] sm:$0xff] %v3026
    %3539 = vst [vmem:[#allocation5 + $0xde0] sm:$0xff] %v3027
    %3540 = vst [vmem:[#allocation5 + $0xde8] sm:$0xff] %v3028
    %3541 = vst [vmem:[#allocation5 + $0xdf0] sm:$0xff] %v3029
    %3542 = vst [vmem:[#allocation5 + $0xdf8] sm:$0xff] %v3030
    %3543 = vst [vmem:[#allocation5 + $0xe00] sm:$0xff] %v3031
    %3544 = vst [vmem:[#allocation5 + $0xe08] sm:$0xff] %v3032
    %3545 = vst [vmem:[#allocation5 + $0xe10] sm:$0xff] %v3033
    %3546 = vst [vmem:[#allocation5 + $0xe18] sm:$0xff] %v3034
    %3547 = vst [vmem:[#allocation5 + $0xe20] sm:$0xff] %v3035
    %3548 = vst [vmem:[#allocation5 + $0xe28] sm:$0xff] %v3036
    %3549 = vst [vmem:[#allocation5 + $0xe30] sm:$0xff] %v3037
    %3550 = vst [vmem:[#allocation5 + $0xe38] sm:$0xff] %v3038
    %3551 = vst [vmem:[#allocation5 + $0xe40] sm:$0xff] %v3039
    %3552 = vst [vmem:[#allocation5 + $0xe48] sm:$0xff] %v3040
    %3553 = vst [vmem:[#allocation5 + $0xe50] sm:$0xff] %v3041
    %3554 = vst [vmem:[#allocation5 + $0xe58] sm:$0xff] %v3042
    %3555 = vst [vmem:[#allocation5 + $0xe60] sm:$0xff] %v3043
    %3556 = vst [vmem:[#allocation5 + $0xe68] sm:$0xff] %v3044
    %3557 = vst [vmem:[#allocation5 + $0xe70] sm:$0xff] %v3045
    %3558 = vst [vmem:[#allocation5 + $0xe78] sm:$0xff] %v3046
    %3559 = vst [vmem:[#allocation5 + $0xe80] sm:$0xff] %v3047
    %3560 = vst [vmem:[#allocation5 + $0xe88] sm:$0xff] %v3048
    %3561 = vst [vmem:[#allocation5 + $0xe90] sm:$0xff] %v3049
    %3562 = vst [vmem:[#allocation5 + $0xe98] sm:$0xff] %v3050
    %3563 = vst [vmem:[#allocation5 + $0xea0] sm:$0xff] %v3051
    %3564 = vst [vmem:[#allocation5 + $0xea8] sm:$0xff] %v3052
    %3565 = vst [vmem:[#allocation5 + $0xeb0] sm:$0xff] %v3053
    %3566 = vst [vmem:[#allocation5 + $0xeb8] sm:$0xff] %v3054
    %3567 = vst [vmem:[#allocation5 + $0xec0] sm:$0xff] %v3055
    %3568 = vst [vmem:[#allocation5 + $0xec8] sm:$0xff] %v3056
    %3569 = vst [vmem:[#allocation5 + $0xed0] sm:$0xff] %v3057
    %3570 = vst [vmem:[#allocation5 + $0xed8] sm:$0xff] %v3058
    %3571 = vst [vmem:[#allocation5 + $0xee0] sm:$0xff] %v3059
    %3572 = vst [vmem:[#allocation5 + $0xee8] sm:$0xff] %v3060
    %3573 = vst [vmem:[#allocation5 + $0xef0] sm:$0xff] %v3061
    %3574 = vst [vmem:[#allocation5 + $0xef8] sm:$0xff] %v3062
    %3575 = vst [vmem:[#allocation5 + $0xf00] sm:$0xff] %v3063
    %3576 = vst [vmem:[#allocation5 + $0xf08] sm:$0xff] %v3064
    %3577 = vst [vmem:[#allocation5 + $0xf10] sm:$0xff] %v3065
    %3578 = vst [vmem:[#allocation5 + $0xf18] sm:$0xff] %v3066
    %3579 = vst [vmem:[#allocation5 + $0xf20] sm:$0xff] %v3067
    %3580 = vst [vmem:[#allocation5 + $0xf28] sm:$0xff] %v3068
    %3581 = vst [vmem:[#allocation5 + $0xf30] sm:$0xff] %v3069
    %3582 = vst [vmem:[#allocation5 + $0xf38] sm:$0xff] %v3070
    %3583 = vst [vmem:[#allocation5 + $0xf40] sm:$0xff] %v3071
    %3584 = vst [vmem:[#allocation5 + $0xf48] sm:$0xff] %v3072
    %3585 = vst [vmem:[#allocation5 + $0xf50] sm:$0xff] %v3073
    %3586 = vst [vmem:[#allocation5 + $0xf58] sm:$0xff] %v3074
    %3587 = vst [vmem:[#allocation5 + $0xf60] sm:$0xff] %v3075
    %3588 = vst [vmem:[#allocation5 + $0xf68] sm:$0xff] %v3076
    %3589 = vst [vmem:[#allocation5 + $0xf70] sm:$0xff] %v3077
    %3590 = vst [vmem:[#allocation5 + $0xf78] sm:$0xff] %v3078
    %3591 = vst [vmem:[#allocation5 + $0xf80] sm:$0xff] %v3079
    %3592 = vst [vmem:[#allocation5 + $0xf88] sm:$0xff] %v3080
    %3593 = vst [vmem:[#allocation5 + $0xf90] sm:$0xff] %v3081
    %3594 = vst [vmem:[#allocation5 + $0xf98] sm:$0xff] %v3082
    %3595 = vst [vmem:[#allocation5 + $0xfa0] sm:$0xff] %v3083
    %3596 = vst [vmem:[#allocation5 + $0xfa8] sm:$0xff] %v3084
    %3597 = vst [vmem:[#allocation5 + $0xfb0] sm:$0xff] %v3085
    %3598 = vst [vmem:[#allocation5 + $0xfb8] sm:$0xff] %v3086
    %3599 = vst [vmem:[#allocation5 + $0xfc0] sm:$0xff] %v3087
    %3600 = vst [vmem:[#allocation5 + $0xfc8] sm:$0xff] %v3088
    %3601 = vst [vmem:[#allocation5 + $0xfd0] sm:$0xff] %v3089
    %3602 = vst [vmem:[#allocation5 + $0xfd8] sm:$0xff] %v3090
    %3603 = vst [vmem:[#allocation5 + $0xfe0] sm:$0xff] %v3091
    %3604 = vst [vmem:[#allocation5 + $0xfe8] sm:$0xff] %v3092
    %3605 = vst [vmem:[#allocation5 + $0xff0] sm:$0xff] %v3093
    %3606 = vst [vmem:[#allocation5 + $0xff8] sm:$0xff] %v3094
    // Predicated region
    $region10: #{tpu_custom_call.1} parent=1 // pred_check
      _
    $region11: #{tpu_custom_call.1} parent=1 // pred_check_branch
      %3608 = sbr.rel (0) target = $region13
    $region12: #{tpu_custom_call.1} parent=1 // pred_region
      %s3610 = ssub.s32 65536, 65536
      %3611 = vsyncadd [#allocation4], %s3610
      %s3612 = sshll.u32 [#allocation5], 4
      %s3613 = int_to_ptr.vmem [resolvable:$true] %s3612
      %3618 = dma.vmem_to_hbm [thread:$0]  %s3613, 65536, %s1, [#allocation4], 128, 128, 8
    $region13: #{tpu_custom_call.1} parent=1 // pred_fallthru
      _
    // Predicated region
    $region14: #{tpu_custom_call.1} parent=1 // pred_check
      _
    $region15: #{tpu_custom_call.1} parent=1 // pred_check_branch
      %3620 = sbr.rel (0) target = $region17
    $region16: #{tpu_custom_call.1} parent=1 // pred_region
      %3621 = dma.done [#allocation4], 65536
    $region17: #{tpu_custom_call.1} parent=1 // pred_fallthru
      _
    %3622 = vsyncpa [#allocation3], 1
    %3623 = vsyncpa [#allocation4], 1

</llo_original>
